<compile_context>
chip_gen: v7x
topology: tpu7x:2x2x1
jax: 0.10.0
libtpu: 0.0.40
codegen_flags: <defaults>
</compile_context>

<pallas_src>
import functools

import jax
import jax.numpy as jnp
from jax.experimental import pallas as pl
from jax.experimental.pallas import tpu as pltpu


def _round_up(v, m):
    return (v + m - 1) // m * m


def _scl_kernel_diffuse_first(x_ref, adj_ref, w_ref, b_ref, o_ref, z_ref, *, ks):
    # x_ref:   (bb, c_in_p,  n_pad)        bb (b,t)-slices, channel-second, nodes on lanes
    # adj_ref: (ks, n_pad,   n_pad)        adj_ref[k] = A_k (no identity block)
    # w_ref:   (c_out_p, (ks+1)*c_in_p)    [W_0^T | ... | W_{ks-1}^T | residual_proj]
    # b_ref:   (1, c_out_p, n_pad)         f32 bias (gconv bias + conv bias), lane-broadcast
    # o_ref:   (bb, c_out_p, n_pad)
    # z_ref:   (bb, (ks+1)*c_in_p, n_pad)  f32 VMEM staging / accumulator scratch
    bb, c_in_p, n_pad = x_ref.shape
    x3 = x_ref[...]
    x_flat = x3.reshape(bb * c_in_p, n_pad)          # layout-preserving (c_in_p % 8 == 0)

    # Graph diffusion: ks big MXU matmuls (dominant FLOPs), staged into VMEM scratch.
    for k in range(ks):
        zk = jnp.dot(x_flat, adj_ref[k], preferred_element_type=jnp.float32)
        z_ref[:, k * c_in_p:(k + 1) * c_in_p, :] = zk.reshape(bb, c_in_p, n_pad)
    # Residual slot: x itself (no diffusion); its projection is fused into w_ref.
    z_ref[:, ks * c_in_p:, :] = x3.astype(jnp.float32)

    # Single combined channel mix: batch=bb, contraction depth K = (ks+1)*c_in_p.
    w = w_ref[...]
    wb = jnp.broadcast_to(w[None], (bb,) + w.shape)
    acc = jnp.einsum('bok,bkn->bon', wb, z_ref[...].astype(w.dtype),
                     preferred_element_type=jnp.float32)

    out = acc + b_ref[...].astype(jnp.float32)
    o_ref[...] = jnp.maximum(out, 0.0).astype(o_ref.dtype)


def _scl_kernel_mix_first(x_ref, adj_ref, w_ref, b_ref, o_ref, y_ref, *, ks):
    # Used when c_out_p < c_in_p: mix channels first, diffuse the smaller result.
    # w_ref: ((ks+1)*c_out_p, c_in_p);  y_ref: (bb, (ks+1)*c_out_p, n_pad) f32 scratch.
    bb, c_in_p, n_pad = x_ref.shape
    c_out_p = o_ref.shape[1]
    x3 = x_ref[...]

    # One batched channel mix producing all ks mixed blocks + the residual block.
    w = w_ref[...]
    wb = jnp.broadcast_to(w[None], (bb,) + w.shape)
    y_ref[...] = jnp.einsum('boc,bcn->bon', wb, x3,
                            preferred_element_type=jnp.float32)

    # Diffuse each mixed block and accumulate into the residual slot of the scratch.
    for k in range(ks):
        yk = y_ref[:, k * c_out_p:(k + 1) * c_out_p, :].reshape(bb * c_out_p, n_pad)
        zk = jnp.dot(yk.astype(adj_ref.dtype), adj_ref[k],
                     preferred_element_type=jnp.float32)
        y_ref[:, ks * c_out_p:, :] += zk.reshape(bb, c_out_p, n_pad)

    out = y_ref[:, ks * c_out_p:, :] + b_ref[...].astype(jnp.float32)
    o_ref[...] = jnp.maximum(out, 0.0).astype(o_ref.dtype)


def scl_forward(x, adj, params, *, ks, c_in, c_out, block_bt=None, operand_dtype=None):
    B, C, T, n = x.shape
    assert C == c_in and adj.shape == (n, ks * n)
    ws, bs = params["ws"], params["bs"]
    conv_w, conv_b = params["conv_w"], params["conv_b"]
    out_dtype = x.dtype
    od = jnp.dtype(operand_dtype) if operand_dtype is not None else jnp.dtype(out_dtype)

    kt = ks + 1
    c_in_p = _round_up(c_in, 8)
    c_out_p = _round_up(c_out, 8)
    n_pad = _round_up(n, 128)
    mix_first = c_out_p < c_in_p                 # diffuse the smaller channel count
    c_dom = c_out_p if mix_first else c_in_p

    bt = B * T
    if block_bt is None:
        block_bt = max(8, 256 // c_dom)          # fill a 256-row MXU pass
    block_bt = max(1, min(block_bt, _round_up(bt, 8)))
    bt_pad = _round_up(bt, block_bt)
    grid = bt_pad // block_bt

    # ---- glue: layout / parameter packing only (cold path; transpose+pad fuse) ----
    xr = jnp.transpose(x, (0, 2, 1, 3)).reshape(bt, c_in, n)
    xr = jnp.pad(xr, ((0, bt_pad - bt), (0, c_in_p - c_in), (0, n_pad - n))).astype(od)

    # adjacency: [n, Ks*n] -> [Ks, n_pad, n_pad]   (NO identity block any more)
    a = jnp.transpose(adj.reshape(n, ks, n), (1, 0, 2))            # a[k] = A_k
    adjp = jnp.pad(a, ((0, 0), (0, n_pad - n), (0, n_pad - n))).astype(od)

    # gconv weights: ws rows indexed c*Ks + k  ->  wt[k, o, c] = W_k^T
    wt = jnp.transpose(ws.reshape(c_in, ks, c_out), (1, 2, 0))     # [Ks, c_out, c_in]
    if c_in > c_out:                                               # 1x1-conv residual
        r = conv_w.reshape(c_out, c_in)
        bias = bs + conv_b
    elif c_in < c_out:                                             # zero-padded identity
        r = jnp.eye(c_out, c_in, dtype=wt.dtype)
        bias = bs
    else:                                                          # identity residual
        r = jnp.eye(c_out, dtype=wt.dtype)
        bias = bs
    wstack = jnp.concatenate([wt, r[None]], axis=0)                # [kt, c_out, c_in]
    wstack = jnp.pad(wstack, ((0, 0), (0, c_out_p - c_out), (0, c_in_p - c_in)))
    if mix_first:
        wpack = wstack.reshape(kt * c_out_p, c_in_p)               # rows: k*c_out_p + o
        c_stage = c_out_p
        kernel = functools.partial(_scl_kernel_mix_first, ks=ks)
    else:
        wpack = jnp.transpose(wstack, (1, 0, 2)).reshape(c_out_p, kt * c_in_p)
        c_stage = c_in_p
        kernel = functools.partial(_scl_kernel_diffuse_first, ks=ks)
    wpack = wpack.astype(od)

    bias = jnp.pad(bias, (0, c_out_p - c_out))
    bias2 = jnp.broadcast_to(bias[None, :, None],
                             (1, c_out_p, n_pad)).astype(jnp.float32)

    # ---- cost estimate + explicit VMEM budget ----
    flops = 2 * bt_pad * (ks * c_dom * n_pad * n_pad               # diffusion
                          + kt * c_in_p * c_out_p * n_pad)         # channel mix
    out_itemsize = jnp.dtype(out_dtype).itemsize
    bytes_accessed = int(xr.size * xr.dtype.itemsize
                         + adjp.size * adjp.dtype.itemsize
                         + wpack.size * wpack.dtype.itemsize
                         + bias2.size * 4
                         + bt_pad * c_out_p * n_pad * out_itemsize)
    resident = int((adjp.size + wpack.size) * adjp.dtype.itemsize + bias2.size * 4)
    stream = 2 * block_bt * n_pad * (c_in_p * od.itemsize + c_out_p * out_itemsize)
    scratch_bytes = block_bt * kt * c_stage * n_pad * 4
    vmem_limit = int(min(112 * 2**20,
                         max(32 * 2**20,
                             2 * resident + stream + scratch_bytes + (8 << 20))))

    def build_call(single_buffer):
        kw = {}
        buffered = getattr(pl, "Buffered", None)
        if single_buffer and buffered is not None:
            kw = dict(pipeline_mode=buffered(1))       # resident blocks: no double buffer
        grid_spec = pltpu.PrefetchScalarGridSpec(
            num_scalar_prefetch=0,
            grid=(grid,),
            in_specs=[
                pl.BlockSpec((block_bt, c_in_p, n_pad), lambda i: (i, 0, 0)),   # x block
                pl.BlockSpec((ks, n_pad, n_pad), lambda i: (0, 0, 0), **kw),    # adj
                pl.BlockSpec(wpack.shape, lambda i: (0, 0), **kw),              # packed W
                pl.BlockSpec((1, c_out_p, n_pad), lambda i: (0, 0, 0), **kw),   # bias
            ],
            out_specs=pl.BlockSpec((block_bt, c_out_p, n_pad), lambda i: (i, 0, 0)),
            scratch_shapes=[pltpu.VMEM((block_bt, kt * c_stage, n_pad), jnp.float32)],
        )
        return pl.pallas_call(
            kernel,
            out_shape=jax.ShapeDtypeStruct((bt_pad, c_out_p, n_pad), out_dtype),
            grid_spec=grid_spec,
            compiler_params=pltpu.CompilerParams(
                dimension_semantics=("parallel",),
                vmem_limit_bytes=vmem_limit),
            cost_estimate=pl.CostEstimate(flops=int(flops), transcendentals=0,
                                          bytes_accessed=bytes_accessed),
        )

    try:
        out = jax.block_until_ready(build_call(True)(xr, adjp, wpack, bias2))
    except Exception:
        # Fallback if this JAX build rejects single-buffered resident BlockSpecs.
        out = jax.block_until_ready(build_call(False)(xr, adjp, wpack, bias2))

    out = out[:bt, :c_out, :n].reshape(B, T, c_out, n)
    return jnp.transpose(out, (0, 2, 1, 3))                        # [B, c_out, T, n]


def scl_reference(x, adj, params, *, ks, c_in, c_out):
    """Pure-JAX transcription of the PyTorch forward (for verification)."""
    B, _, T, n = x.shape
    ws, bs = params["ws"], params["bs"]
    conv_w, conv_b = params["conv_w"], params["conv_b"]

    xr = jnp.transpose(x, (0, 2, 3, 1)).reshape(-1, n, c_in)            # [B*T, n, c_in]
    x_tmp = jnp.transpose(xr, (0, 2, 1)).reshape(-1, n)                 # [B*T*c_in, n]
    x_mul = (x_tmp @ adj).reshape(-1, c_in, ks, n)                      # [B*T, c_in, ks, n]
    x_ker = jnp.transpose(x_mul, (0, 3, 1, 2)).reshape(-1, c_in * ks)   # [B*T*n, c_in*ks]
    g = (x_ker @ ws).reshape(-1, n, c_out) + bs                         # [B*T, n, c_out]
    g = jnp.transpose(g.reshape(B, T, n, c_out), (0, 3, 1, 2))          # [B, c_out, T, n]

    if c_in > c_out:
        x_input = jnp.einsum('bctn,oc->botn', x, conv_w.reshape(c_out, c_in)) \
                  + conv_b[None, :, None, None]
    elif c_in < c_out:
        x_input = jnp.concatenate(
            [x, jnp.zeros((B, c_out - c_in, T, n), x.dtype)], axis=1)
    else:
        x_input = x
    return jnp.maximum(g + x_input, 0.0)


if __name__ == "__main__":
    B, T, n, Ks = 2, 8, 16, 3
    key = jax.random.PRNGKey(0)

    def make_inputs(k, c_in, c_out):
        kx, kadj, kws, kcw, kcb = jax.random.split(k, 5)
        x = jax.random.normal(kx, (B, c_in, T, n), dtype=jnp.float32)
        adj = jax.random.normal(kadj, (n, Ks * n), dtype=jnp.float32)
        params = {
            "ws": jax.random.normal(kws, (Ks * c_in, c_out), dtype=jnp.float32),
            "bs": jnp.zeros((c_out,), dtype=jnp.float32),
            "conv_w": jax.random.normal(kcw, (c_out, c_in, 1, 1), dtype=jnp.float32) * 0.1,
            "conv_b": jax.random.normal(kcb, (c_out,), dtype=jnp.float32) * 0.1,
        }
        return x, adj, params

    # Covers: conv residual, zero-pad residual, identity residual, and both
    # diffuse-first (c_out_p >= c_in_p) and mix-first (c_out_p < c_in_p) kernel paths.
    for c_in, c_out in [(8, 4), (4, 8), (8, 8), (16, 8)]:
        key, sub = jax.random.split(key)
        x, adj, params = make_inputs(sub, c_in, c_out)
        out = jax.block_until_ready(
            scl_forward(x, adj, params, ks=Ks, c_in=c_in, c_out=c_out))
        ref = scl_reference(x, adj, params, ks=Ks, c_in=c_in, c_out=c_out)
        assert out.shape == (B, c_out, T, n), out.shape
        assert jnp.allclose(out, ref, atol=2e-3, rtol=2e-3), \
            (c_in, c_out, float(jnp.max(jnp.abs(out - ref))))

    # bf16 MXU-operand path (v6e/v7x-friendly); accumulation stays f32.
    key, sub = jax.random.split(key)
    x, adj, params = make_inputs(sub, 8, 4)
    out = jax.block_until_ready(
        scl_forward(x, adj, params, ks=Ks, c_in=8, c_out=4,
                    operand_dtype=jnp.bfloat16))
    ref = scl_reference(x, adj, params, ks=Ks, c_in=8, c_out=4)
    assert jnp.allclose(out, ref, atol=1.0, rtol=0.1), \
        float(jnp.max(jnp.abs(out - ref)))

    print("KERNEL_OK")
</pallas_src>

<mosaic_0001>
module attributes {stable_mosaic.version = 11 : i64} {
  func.func @_scl_kernel_diffuse_first(%arg0: i32, %arg1: memref<16x8x128xf32, #tpu.memory_space<vmem>>, %arg2: memref<3x128x128xf32, #tpu.memory_space<vmem>>, %arg3: memref<8x32xf32, #tpu.memory_space<vmem>>, %arg4: memref<1x8x128xf32, #tpu.memory_space<vmem>>, %arg5: memref<16x8x128xf32, #tpu.memory_space<vmem>>, %arg6: memref<16x32x128xf32, #tpu.memory_space<vmem>>) attributes {dimension_semantics = [#tpu.dimension_semantics<parallel>], iteration_bounds = array<i64: 1>, scalar_prefetch = 0 : i64, scratch_operands = 1 : i64, tpu.core_type = #tpu.core_type<tc>, window_params = [{transform_indices = @transform_0, window_bounds = array<i64: 16, 8, 128>}, {pipeline_mode = #tpu.pipeline_mode<synchronous>, transform_indices = @transform_1, window_bounds = array<i64: 3, 128, 128>}, {pipeline_mode = #tpu.pipeline_mode<synchronous>, transform_indices = @transform_2, window_bounds = array<i64: 8, 32>}, {pipeline_mode = #tpu.pipeline_mode<synchronous>, transform_indices = @transform_3, window_bounds = array<i64: 1, 8, 128>}, {transform_indices = @transform_4, window_bounds = array<i64: 16, 8, 128>}]} {
    %c0 = arith.constant 0 : index
    %c0_0 = arith.constant 0 : index
    %c0_1 = arith.constant 0 : index
    %0 = vector.load %arg1[%c0, %c0_0, %c0_1] : memref<16x8x128xf32, #tpu.memory_space<vmem>>, vector<16x8x128xf32>
    %1 = vector.shape_cast %0 : vector<16x8x128xf32> to vector<128x128xf32>
    %c0_2 = arith.constant 0 : index
    %c0_3 = arith.constant 0 : index
    %c0_4 = arith.constant 0 : index
    %2 = vector.load %arg2[%c0_2, %c0_3, %c0_4] : memref<3x128x128xf32, #tpu.memory_space<vmem>>, vector<1x128x128xf32>
    %3 = vector.shape_cast %2 : vector<1x128x128xf32> to vector<128x128xf32>
    %cst = arith.constant dense<0.000000e+00> : vector<128x128xf32>
    %4 = tpu.matmul %1, %3, %cst {dimension_numbers = #tpu.dot_dimension_numbers<[1], [0], [0], [1], [0, 0, 1, 1], [], []>} : vector<128x128xf32>, vector<128x128xf32>, vector<128x128xf32> -> vector<128x128xf32>
    %5 = vector.shape_cast %4 : vector<128x128xf32> to vector<16x8x128xf32>
    %c0_5 = arith.constant 0 : index
    %c0_6 = arith.constant 0 : index
    %c0_7 = arith.constant 0 : index
    %6 = vector.load %arg6[%c0_5, %c0_6, %c0_7] : memref<16x32x128xf32, #tpu.memory_space<vmem>>, vector<16x8x128xf32>
    tpu.vector_store %arg6[%c0_5, %c0_6, %c0_7], %5 {strides = array<i32>} : memref<16x32x128xf32, #tpu.memory_space<vmem>>, vector<16x8x128xf32>,
    %c1 = arith.constant 1 : index
    %c0_8 = arith.constant 0 : index
    %c0_9 = arith.constant 0 : index
    %7 = vector.load %arg2[%c1, %c0_8, %c0_9] : memref<3x128x128xf32, #tpu.memory_space<vmem>>, vector<1x128x128xf32>
    %8 = vector.shape_cast %7 : vector<1x128x128xf32> to vector<128x128xf32>
    %cst_10 = arith.constant dense<0.000000e+00> : vector<128x128xf32>
    %9 = tpu.matmul %1, %8, %cst_10 {dimension_numbers = #tpu.dot_dimension_numbers<[1], [0], [0], [1], [0, 0, 1, 1], [], []>} : vector<128x128xf32>, vector<128x128xf32>, vector<128x128xf32> -> vector<128x128xf32>
    %10 = vector.shape_cast %9 : vector<128x128xf32> to vector<16x8x128xf32>
    %c0_11 = arith.constant 0 : index
    %c8 = arith.constant 8 : index
    %c0_12 = arith.constant 0 : index
    %11 = vector.load %arg6[%c0_11, %c8, %c0_12] : memref<16x32x128xf32, #tpu.memory_space<vmem>>, vector<16x8x128xf32>
    tpu.vector_store %arg6[%c0_11, %c8, %c0_12], %10 {strides = array<i32>} : memref<16x32x128xf32, #tpu.memory_space<vmem>>, vector<16x8x128xf32>,
    %c2 = arith.constant 2 : index
    %c0_13 = arith.constant 0 : index
    %c0_14 = arith.constant 0 : index
    %12 = vector.load %arg2[%c2, %c0_13, %c0_14] : memref<3x128x128xf32, #tpu.memory_space<vmem>>, vector<1x128x128xf32>
    %13 = vector.shape_cast %12 : vector<1x128x128xf32> to vector<128x128xf32>
    %cst_15 = arith.constant dense<0.000000e+00> : vector<128x128xf32>
    %14 = tpu.matmul %1, %13, %cst_15 {dimension_numbers = #tpu.dot_dimension_numbers<[1], [0], [0], [1], [0, 0, 1, 1], [], []>} : vector<128x128xf32>, vector<128x128xf32>, vector<128x128xf32> -> vector<128x128xf32>
    %15 = vector.shape_cast %14 : vector<128x128xf32> to vector<16x8x128xf32>
    %c0_16 = arith.constant 0 : index
    %c16 = arith.constant 16 : index
    %c0_17 = arith.constant 0 : index
    %16 = vector.load %arg6[%c0_16, %c16, %c0_17] : memref<16x32x128xf32, #tpu.memory_space<vmem>>, vector<16x8x128xf32>
    tpu.vector_store %arg6[%c0_16, %c16, %c0_17], %15 {strides = array<i32>} : memref<16x32x128xf32, #tpu.memory_space<vmem>>, vector<16x8x128xf32>,
    %c0_18 = arith.constant 0 : index
    %c24 = arith.constant 24 : index
    %c0_19 = arith.constant 0 : index
    %17 = vector.load %arg6[%c0_18, %c24, %c0_19] : memref<16x32x128xf32, #tpu.memory_space<vmem>>, vector<16x8x128xf32>
    tpu.vector_store %arg6[%c0_18, %c24, %c0_19], %0 {strides = array<i32>} : memref<16x32x128xf32, #tpu.memory_space<vmem>>, vector<16x8x128xf32>,
    %c0_20 = arith.constant 0 : index
    %c0_21 = arith.constant 0 : index
    %18 = vector.load %arg3[%c0_20, %c0_21] : memref<8x32xf32, #tpu.memory_space<vmem>>, vector<8x32xf32>
    %19 = vector.shape_cast %18 : vector<8x32xf32> to vector<1x8x32xf32>
    %20 = vector.shape_cast %19 : vector<1x8x32xf32> to vector<1x8x32xf32>
    %21 = vector.broadcast %20 : vector<1x8x32xf32> to vector<16x8x32xf32>
    %c0_22 = arith.constant 0 : index
    %c0_23 = arith.constant 0 : index
    %c0_24 = arith.constant 0 : index
    %22 = vector.load %arg6[%c0_22, %c0_23, %c0_24] : memref<16x32x128xf32, #tpu.memory_space<vmem>>, vector<16x32x128xf32>
    "tpu.trace_start"() <{level = 10 : i32, message = "bok,bkn->bon"}> : () -> ()
    %cst_25 = arith.constant dense<0.000000e+00> : vector<16x8x128xf32>
    %23 = tpu.matmul %21, %22, %cst_25 {dimension_numbers = #tpu.dot_dimension_numbers<[2], [1], [1], [2], [0, 0, 0, 1, 1, 2], [0], [0]>} : vector<16x8x32xf32>, vector<16x32x128xf32>, vector<16x8x128xf32> -> vector<16x8x128xf32>
    "tpu.trace_stop"() : () -> ()
    %c0_26 = arith.constant 0 : index
    %c0_27 = arith.constant 0 : index
    %c0_28 = arith.constant 0 : index
    %24 = vector.load %arg4[%c0_26, %c0_27, %c0_28] : memref<1x8x128xf32, #tpu.memory_space<vmem>>, vector<1x8x128xf32>
    %25 = vector.broadcast %24 : vector<1x8x128xf32> to vector<16x8x128xf32>
    %26 = arith.addf %23, %25 : vector<16x8x128xf32>
    %cst_29 = arith.constant 0.000000e+00 : f32
    %27 = vector.broadcast %cst_29 : f32 to vector<16x8x128xf32>
    %28 = arith.maximumf %26, %27 : vector<16x8x128xf32>
    %c0_30 = arith.constant 0 : index
    %c0_31 = arith.constant 0 : index
    %c0_32 = arith.constant 0 : index
    %29 = vector.load %arg5[%c0_30, %c0_31, %c0_32] : memref<16x8x128xf32, #tpu.memory_space<vmem>>, vector<16x8x128xf32>
    tpu.vector_store %arg5[%c0_30, %c0_31, %c0_32], %28 {strides = array<i32>} : memref<16x8x128xf32, #tpu.memory_space<vmem>>, vector<16x8x128xf32>,
    return
  }
  func.func @transform_0(%arg0: i32) -> (i32, i32, i32) {
    %c0_i32 = arith.constant 0 : i32
    %c0_i32_0 = arith.constant 0 : i32
    %c0_i32_1 = arith.constant 0 : i32
    return %arg0, %c0_i32, %c0_i32_0 : i32, i32, i32
  }
  func.func @transform_1(%arg0: i32) -> (i32, i32, i32) {
    %c0_i32 = arith.constant 0 : i32
    %c0_i32_0 = arith.constant 0 : i32
    %c0_i32_1 = arith.constant 0 : i32
    %c0_i32_2 = arith.constant 0 : i32
    return %c0_i32, %c0_i32_0, %c0_i32_1 : i32, i32, i32
  }
  func.func @transform_2(%arg0: i32) -> (i32, i32) {
    %c0_i32 = arith.constant 0 : i32
    %c0_i32_0 = arith.constant 0 : i32
    %c0_i32_1 = arith.constant 0 : i32
    return %c0_i32, %c0_i32_0 : i32, i32
  }
  func.func @transform_3(%arg0: i32) -> (i32, i32, i32) {
    %c0_i32 = arith.constant 0 : i32
    %c0_i32_0 = arith.constant 0 : i32
    %c0_i32_1 = arith.constant 0 : i32
    %c0_i32_2 = arith.constant 0 : i32
    return %c0_i32, %c0_i32_0, %c0_i32_1 : i32, i32, i32
  }
  func.func @transform_4(%arg0: i32) -> (i32, i32, i32) {
    %c0_i32 = arith.constant 0 : i32
    %c0_i32_0 = arith.constant 0 : i32
    %c0_i32_1 = arith.constant 0 : i32
    return %arg0, %c0_i32, %c0_i32_0 : i32, i32, i32
  }
}

module attributes {stable_mosaic.version = 11 : i64} {
  func.func @_scl_kernel_diffuse_first(%arg0: i32, %arg1: memref<16x8x128xf32, #tpu.memory_space<vmem>>, %arg2: memref<3x128x128xf32, #tpu.memory_space<vmem>>, %arg3: memref<8x32xf32, #tpu.memory_space<vmem>>, %arg4: memref<1x8x128xf32, #tpu.memory_space<vmem>>, %arg5: memref<16x8x128xf32, #tpu.memory_space<vmem>>, %arg6: memref<16x32x128xf32, #tpu.memory_space<vmem>>) attributes {dimension_semantics = [#tpu.dimension_semantics<parallel>], iteration_bounds = array<i64: 1>, scalar_prefetch = 0 : i64, scratch_operands = 1 : i64, tpu.core_type = #tpu.core_type<tc>, window_params = [{transform_indices = @transform_0, window_bounds = array<i64: 16, 8, 128>}, {pipeline_mode = #tpu.pipeline_mode<synchronous>, transform_indices = @transform_1, window_bounds = array<i64: 3, 128, 128>}, {pipeline_mode = #tpu.pipeline_mode<synchronous>, transform_indices = @transform_2, window_bounds = array<i64: 8, 32>}, {pipeline_mode = #tpu.pipeline_mode<synchronous>, transform_indices = @transform_3, window_bounds = array<i64: 1, 8, 128>}, {transform_indices = @transform_4, window_bounds = array<i64: 16, 8, 128>}]} {
    %c0 = arith.constant 0 : index
    %c0_0 = arith.constant 0 : index
    %c0_1 = arith.constant 0 : index
    %0 = vector.load %arg1[%c0, %c0_0, %c0_1] : memref<16x8x128xf32, #tpu.memory_space<vmem>>, vector<16x8x128xf32>
    %1 = vector.shape_cast %0 : vector<16x8x128xf32> to vector<128x128xf32>
    %c0_2 = arith.constant 0 : index
    %c0_3 = arith.constant 0 : index
    %c0_4 = arith.constant 0 : index
    %2 = vector.load %arg2[%c0_2, %c0_3, %c0_4] : memref<3x128x128xf32, #tpu.memory_space<vmem>>, vector<1x128x128xf32>
    %3 = vector.shape_cast %2 : vector<1x128x128xf32> to vector<128x128xf32>
    %cst = arith.constant dense<0.000000e+00> : vector<128x128xf32>
    %4 = tpu.matmul %1, %3, %cst {dimension_numbers = #tpu.dot_dimension_numbers<[1], [0], [0], [1], [0, 0, 1, 1], [], []>} : vector<128x128xf32>, vector<128x128xf32>, vector<128x128xf32> -> vector<128x128xf32>
    %5 = vector.shape_cast %4 : vector<128x128xf32> to vector<16x8x128xf32>
    %c0_5 = arith.constant 0 : index
    %c0_6 = arith.constant 0 : index
    %c0_7 = arith.constant 0 : index
    %6 = vector.load %arg6[%c0_5, %c0_6, %c0_7] : memref<16x32x128xf32, #tpu.memory_space<vmem>>, vector<16x8x128xf32>
    tpu.vector_store %arg6[%c0_5, %c0_6, %c0_7], %5 {strides = array<i32>} : memref<16x32x128xf32, #tpu.memory_space<vmem>>, vector<16x8x128xf32>,
    %c1 = arith.constant 1 : index
    %c0_8 = arith.constant 0 : index
    %c0_9 = arith.constant 0 : index
    %7 = vector.load %arg2[%c1, %c0_8, %c0_9] : memref<3x128x128xf32, #tpu.memory_space<vmem>>, vector<1x128x128xf32>
    %8 = vector.shape_cast %7 : vector<1x128x128xf32> to vector<128x128xf32>
    %cst_10 = arith.constant dense<0.000000e+00> : vector<128x128xf32>
    %9 = tpu.matmul %1, %8, %cst_10 {dimension_numbers = #tpu.dot_dimension_numbers<[1], [0], [0], [1], [0, 0, 1, 1], [], []>} : vector<128x128xf32>, vector<128x128xf32>, vector<128x128xf32> -> vector<128x128xf32>
    %10 = vector.shape_cast %9 : vector<128x128xf32> to vector<16x8x128xf32>
    %c0_11 = arith.constant 0 : index
    %c8 = arith.constant 8 : index
    %c0_12 = arith.constant 0 : index
    %11 = vector.load %arg6[%c0_11, %c8, %c0_12] : memref<16x32x128xf32, #tpu.memory_space<vmem>>, vector<16x8x128xf32>
    tpu.vector_store %arg6[%c0_11, %c8, %c0_12], %10 {strides = array<i32>} : memref<16x32x128xf32, #tpu.memory_space<vmem>>, vector<16x8x128xf32>,
    %c2 = arith.constant 2 : index
    %c0_13 = arith.constant 0 : index
    %c0_14 = arith.constant 0 : index
    %12 = vector.load %arg2[%c2, %c0_13, %c0_14] : memref<3x128x128xf32, #tpu.memory_space<vmem>>, vector<1x128x128xf32>
    %13 = vector.shape_cast %12 : vector<1x128x128xf32> to vector<128x128xf32>
    %cst_15 = arith.constant dense<0.000000e+00> : vector<128x128xf32>
    %14 = tpu.matmul %1, %13, %cst_15 {dimension_numbers = #tpu.dot_dimension_numbers<[1], [0], [0], [1], [0, 0, 1, 1], [], []>} : vector<128x128xf32>, vector<128x128xf32>, vector<128x128xf32> -> vector<128x128xf32>
    %15 = vector.shape_cast %14 : vector<128x128xf32> to vector<16x8x128xf32>
    %c0_16 = arith.constant 0 : index
    %c16 = arith.constant 16 : index
    %c0_17 = arith.constant 0 : index
    %16 = vector.load %arg6[%c0_16, %c16, %c0_17] : memref<16x32x128xf32, #tpu.memory_space<vmem>>, vector<16x8x128xf32>
    tpu.vector_store %arg6[%c0_16, %c16, %c0_17], %15 {strides = array<i32>} : memref<16x32x128xf32, #tpu.memory_space<vmem>>, vector<16x8x128xf32>,
    %c0_18 = arith.constant 0 : index
    %c24 = arith.constant 24 : index
    %c0_19 = arith.constant 0 : index
    %17 = vector.load %arg6[%c0_18, %c24, %c0_19] : memref<16x32x128xf32, #tpu.memory_space<vmem>>, vector<16x8x128xf32>
    tpu.vector_store %arg6[%c0_18, %c24, %c0_19], %0 {strides = array<i32>} : memref<16x32x128xf32, #tpu.memory_space<vmem>>, vector<16x8x128xf32>,
    %c0_20 = arith.constant 0 : index
    %c0_21 = arith.constant 0 : index
    %18 = vector.load %arg3[%c0_20, %c0_21] : memref<8x32xf32, #tpu.memory_space<vmem>>, vector<8x32xf32>
    %19 = vector.shape_cast %18 : vector<8x32xf32> to vector<1x8x32xf32>
    %20 = vector.shape_cast %19 : vector<1x8x32xf32> to vector<1x8x32xf32>
    %21 = vector.broadcast %20 : vector<1x8x32xf32> to vector<16x8x32xf32>
    %c0_22 = arith.constant 0 : index
    %c0_23 = arith.constant 0 : index
    %c0_24 = arith.constant 0 : index
    %22 = vector.load %arg6[%c0_22, %c0_23, %c0_24] : memref<16x32x128xf32, #tpu.memory_space<vmem>>, vector<16x32x128xf32>
    "tpu.trace_start"() <{level = 10 : i32, message = "bok,bkn->bon"}> : () -> ()
    %cst_25 = arith.constant dense<0.000000e+00> : vector<16x8x128xf32>
    %23 = tpu.matmul %21, %22, %cst_25 {dimension_numbers = #tpu.dot_dimension_numbers<[2], [1], [1], [2], [0, 0, 0, 1, 1, 2], [0], [0]>} : vector<16x8x32xf32>, vector<16x32x128xf32>, vector<16x8x128xf32> -> vector<16x8x128xf32>
    "tpu.trace_stop"() : () -> ()
    %c0_26 = arith.constant 0 : index
    %c0_27 = arith.constant 0 : index
    %c0_28 = arith.constant 0 : index
    %24 = vector.load %arg4[%c0_26, %c0_27, %c0_28] : memref<1x8x128xf32, #tpu.memory_space<vmem>>, vector<1x8x128xf32>
    %25 = vector.broadcast %24 : vector<1x8x128xf32> to vector<16x8x128xf32>
    %26 = arith.addf %23, %25 : vector<16x8x128xf32>
    %cst_29 = arith.constant 0.000000e+00 : f32
    %27 = vector.broadcast %cst_29 : f32 to vector<16x8x128xf32>
    %28 = arith.maximumf %26, %27 : vector<16x8x128xf32>
    %c0_30 = arith.constant 0 : index
    %c0_31 = arith.constant 0 : index
    %c0_32 = arith.constant 0 : index
    %29 = vector.load %arg5[%c0_30, %c0_31, %c0_32] : memref<16x8x128xf32, #tpu.memory_space<vmem>>, vector<16x8x128xf32>
    tpu.vector_store %arg5[%c0_30, %c0_31, %c0_32], %28 {strides = array<i32>} : memref<16x8x128xf32, #tpu.memory_space<vmem>>, vector<16x8x128xf32>,
    return
  }
  func.func @transform_0(%arg0: i32) -> (i32, i32, i32) {
    %c0_i32 = arith.constant 0 : i32
    %c0_i32_0 = arith.constant 0 : i32
    %c0_i32_1 = arith.constant 0 : i32
    return %arg0, %c0_i32, %c0_i32_0 : i32, i32, i32
  }
  func.func @transform_1(%arg0: i32) -> (i32, i32, i32) {
    %c0_i32 = arith.constant 0 : i32
    %c0_i32_0 = arith.constant 0 : i32
    %c0_i32_1 = arith.constant 0 : i32
    %c0_i32_2 = arith.constant 0 : i32
    return %c0_i32, %c0_i32_0, %c0_i32_1 : i32, i32, i32
  }
  func.func @transform_2(%arg0: i32) -> (i32, i32) {
    %c0_i32 = arith.constant 0 : i32
    %c0_i32_0 = arith.constant 0 : i32
    %c0_i32_1 = arith.constant 0 : i32
    return %c0_i32, %c0_i32_0 : i32, i32
  }
  func.func @transform_3(%arg0: i32) -> (i32, i32, i32) {
    %c0_i32 = arith.constant 0 : i32
    %c0_i32_0 = arith.constant 0 : i32
    %c0_i32_1 = arith.constant 0 : i32
    %c0_i32_2 = arith.constant 0 : i32
    return %c0_i32, %c0_i32_0, %c0_i32_1 : i32, i32, i32
  }
  func.func @transform_4(%arg0: i32) -> (i32, i32, i32) {
    %c0_i32 = arith.constant 0 : i32
    %c0_i32_0 = arith.constant 0 : i32
    %c0_i32_1 = arith.constant 0 : i32
    return %arg0, %c0_i32, %c0_i32_0 : i32, i32, i32
  }
}

</mosaic_0001>

<llo_original>
// kernel: tpu_custom_call.1
$region0: #{tpu_custom_call.1}
  #allocation0 [shape = 'u32[]', space=smem, size = 0x4, offset = 0x4, fixed_abs, tag = 'smem constant byte address 0x4 - core index']
  #allocation1 [shape = 'u32[144,128]{1,0:T(1,128)}', space=vmem, size = 0x12000, scoped, tag = 'internal scratch']
  #allocation2 [shape = 'f32[16,32,128]{2,1,0:T(8,128)}', space=vmem, size = 0x40000, scoped, tag = 'scratch operand']
  %s0 = inlined_call_operand.hbm [shape: f32[16,8,128], index: 0, kind: input, shape index: {}]
  %s1 = inlined_call_operand.hbm [shape: f32[3,128,128], index: 1, kind: input, shape index: {}]
  %s2 = inlined_call_operand.hbm [shape: f32[8,32], index: 2, kind: input, shape index: {}]
  %s3 = inlined_call_operand.vmem [shape: f32[1,8,128], index: 3, kind: input, shape index: {}]
  %s4 = inlined_call_operand.hbm [shape: f32[16,8,128], index: 4, kind: output, shape index: {}]
  %s5 = sld [smem:[#allocation0]]
  $region38: #{tpu_custom_call.1} parent=0
    _
  %s7 = ssub.s32 1, %s5
  %s8 = scalar_select 0, %s7, %s5
  $region1: #{tpu_custom_call.1} parent=0
    #allocation3 [shape = 'u8[65536]{0}', space=vmem, size = 0x10000, scoped, tag = 'input window, operand 0, single buffered']
    #allocation4 [shape = 's32[1]{0}', space=sflag, size = 0x4, scoped, tag = 'scoped memory for tpu_custom_call.1']
    #allocation5 [shape = 's32[1]{0}', space=sflag, size = 0x4, scoped, tag = 'scoped memory for tpu_custom_call.1']
    #allocation6 [shape = 'u8[196608]{0}', space=vmem, size = 0x30000, scoped, tag = 'input window, operand 1, single buffered']
    #allocation7 [shape = 's32[1]{0}', space=sflag, size = 0x4, scoped, tag = 'scoped memory for tpu_custom_call.1']
    #allocation8 [shape = 'u8[4096]{0}', space=vmem, size = 0x1000, scoped, tag = 'input window, operand 2, single buffered']
    #allocation9 [shape = 'u8[65536]{0}', space=vmem, size = 0x10000, scoped, tag = 'output window, operand 0, single buffered']
    %9 = vsyncpa [#allocation4], 0
    %10 = vsyncpa [#allocation7], 0
    %11 = vsyncpa [#allocation5], 0
    // Predicated region
    $region2: #{tpu_custom_call.1} parent=1 // pred_check
      _
    $region3: #{tpu_custom_call.1} parent=1 // pred_check_branch
      %13 = sbr.rel (0) target = $region5
    $region4: #{tpu_custom_call.1} parent=1 // pred_region
      %s15 = ssub.s32 2048, 2048
      %16 = vsyncadd [#allocation4], %s15
      %s17 = sshll.u32 [#allocation3], 4
      %s18 = int_to_ptr.vmem [resolvable:$true] %s17
      %23 = dma.hbm_to_vmem [thread:$0]  %s0, 2048, %s18, [#allocation4], 128, 128, 8
    $region5: #{tpu_custom_call.1} parent=1 // pred_fallthru
      _
    // Predicated region
    $region6: #{tpu_custom_call.1} parent=1 // pred_check
      _
    $region7: #{tpu_custom_call.1} parent=1 // pred_check_branch
      %25 = sbr.rel (0) target = $region9
    $region8: #{tpu_custom_call.1} parent=1 // pred_region
      %s27 = ssub.s32 6144, 6144
      %28 = vsyncadd [#allocation7], %s27
      %s29 = sshll.u32 [#allocation6], 4
      %s30 = int_to_ptr.vmem [resolvable:$true] %s29
      %35 = dma.hbm_to_vmem [thread:$0]  %s1, 6144, %s30, [#allocation7], 128, 128, 8
    $region9: #{tpu_custom_call.1} parent=1 // pred_fallthru
      _
    // Predicated region
    $region10: #{tpu_custom_call.1} parent=1 // pred_check
      _
    $region11: #{tpu_custom_call.1} parent=1 // pred_check_branch
      %37 = sbr.rel (0) target = $region13
    $region12: #{tpu_custom_call.1} parent=1 // pred_region
      %s39 = ssub.s32 128, 128
      %40 = vsyncadd [#allocation7], %s39
      %s42 = sshll.u32 [#allocation8], 4
      %s43 = int_to_ptr.vmem [resolvable:$true] %s42
      %45 = dma.hbm_to_vmem [thread:$0]  %s2, 128, %s43, [#allocation7]
    $region13: #{tpu_custom_call.1} parent=1 // pred_fallthru
      _
    // Predicated region
    $region14: #{tpu_custom_call.1} parent=1 // pred_check
      _
    $region15: #{tpu_custom_call.1} parent=1 // pred_check_branch
      %47 = sbr.rel (0) target = $region17
    $region16: #{tpu_custom_call.1} parent=1 // pred_region
      _
    $region17: #{tpu_custom_call.1} parent=1 // pred_fallthru
      _
    // Predicated region
    $region18: #{tpu_custom_call.1} parent=1 // pred_check
      _
    $region19: #{tpu_custom_call.1} parent=1 // pred_check_branch
      %49 = sbr.rel (0) target = $region21
    $region20: #{tpu_custom_call.1} parent=1 // pred_region
      %50 = dma.done [#allocation4], 2048
    $region21: #{tpu_custom_call.1} parent=1 // pred_fallthru
      _
    // Predicated region
    $region22: #{tpu_custom_call.1} parent=1 // pred_check
      _
    $region23: #{tpu_custom_call.1} parent=1 // pred_check_branch
      %52 = sbr.rel (0) target = $region25
    $region24: #{tpu_custom_call.1} parent=1 // pred_region
      %53 = dma.done [#allocation7], 6144
    $region25: #{tpu_custom_call.1} parent=1 // pred_fallthru
      _
    // Predicated region
    $region26: #{tpu_custom_call.1} parent=1 // pred_check
      _
    $region27: #{tpu_custom_call.1} parent=1 // pred_check_branch
      %55 = sbr.rel (0) target = $region29
    $region28: #{tpu_custom_call.1} parent=1 // pred_region
      %56 = dma.done [#allocation7], 128
    $region29: #{tpu_custom_call.1} parent=1 // pred_fallthru
      _
    %v57 = vld [vmem:[#allocation3] sm:$0xff]
    %v58 = vld [vmem:[#allocation3 + $0x8] sm:$0xff]
    %v59 = vld [vmem:[#allocation3 + $0x10] sm:$0xff]
    %v60 = vld [vmem:[#allocation3 + $0x18] sm:$0xff]
    %v61 = vld [vmem:[#allocation3 + $0x20] sm:$0xff]
    %v62 = vld [vmem:[#allocation3 + $0x28] sm:$0xff]
    %v63 = vld [vmem:[#allocation3 + $0x30] sm:$0xff]
    %v64 = vld [vmem:[#allocation3 + $0x38] sm:$0xff]
    %v65 = vld [vmem:[#allocation3 + $0x40] sm:$0xff]
    %v66 = vld [vmem:[#allocation3 + $0x48] sm:$0xff]
    %v67 = vld [vmem:[#allocation3 + $0x50] sm:$0xff]
    %v68 = vld [vmem:[#allocation3 + $0x58] sm:$0xff]
    %v69 = vld [vmem:[#allocation3 + $0x60] sm:$0xff]
    %v70 = vld [vmem:[#allocation3 + $0x68] sm:$0xff]
    %v71 = vld [vmem:[#allocation3 + $0x70] sm:$0xff]
    %v72 = vld [vmem:[#allocation3 + $0x78] sm:$0xff]
    %v73 = vld [vmem:[#allocation6] sm:$0xff]
    %v74 = vld [vmem:[#allocation6 + $0x8] sm:$0xff]
    %v75 = vld [vmem:[#allocation6 + $0x10] sm:$0xff]
    %v76 = vld [vmem:[#allocation6 + $0x18] sm:$0xff]
    %v77 = vld [vmem:[#allocation6 + $0x20] sm:$0xff]
    %v78 = vld [vmem:[#allocation6 + $0x28] sm:$0xff]
    %v79 = vld [vmem:[#allocation6 + $0x30] sm:$0xff]
    %v80 = vld [vmem:[#allocation6 + $0x38] sm:$0xff]
    %v81 = vld [vmem:[#allocation6 + $0x40] sm:$0xff]
    %v82 = vld [vmem:[#allocation6 + $0x48] sm:$0xff]
    %v83 = vld [vmem:[#allocation6 + $0x50] sm:$0xff]
    %v84 = vld [vmem:[#allocation6 + $0x58] sm:$0xff]
    %v85 = vld [vmem:[#allocation6 + $0x60] sm:$0xff]
    %v86 = vld [vmem:[#allocation6 + $0x68] sm:$0xff]
    %v87 = vld [vmem:[#allocation6 + $0x70] sm:$0xff]
    %v88 = vld [vmem:[#allocation6 + $0x78] sm:$0xff]
    %89 = vmatprep.subr.mxu0 0.0
    %90 = vmatpush1.msra.mxu0 %v73
    %91 = vmatprep.subr.mxu0 0.0
    %92 = vmatpush1.msra.mxu0 %v74
    %93 = vmatprep.subr.mxu0 0.0
    %94 = vmatpush1.msra.mxu0 %v75
    %95 = vmatprep.subr.mxu0 0.0
    %96 = vmatpush1.msra.mxu0 %v76
    %97 = vmatprep.subr.mxu0 0.0
    %98 = vmatpush1.msra.mxu0 %v77
    %99 = vmatprep.subr.mxu0 0.0
    %100 = vmatpush1.msra.mxu0 %v78
    %101 = vmatprep.subr.mxu0 0.0
    %102 = vmatpush1.msra.mxu0 %v79
    %103 = vmatprep.subr.mxu0 0.0
    %104 = vmatpush1.msra.mxu0 %v80
    %105 = vmatprep.subr.mxu0 0.0
    %106 = vmatpush1.msra.mxu0 %v81
    %107 = vmatprep.subr.mxu0 0.0
    %108 = vmatpush1.msra.mxu0 %v82
    %109 = vmatprep.subr.mxu0 0.0
    %110 = vmatpush1.msra.mxu0 %v83
    %111 = vmatprep.subr.mxu0 0.0
    %112 = vmatpush1.msra.mxu0 %v84
    %113 = vmatprep.subr.mxu0 0.0
    %114 = vmatpush1.msra.mxu0 %v85
    %115 = vmatprep.subr.mxu0 0.0
    %116 = vmatpush1.msra.mxu0 %v86
    %117 = vmatprep.subr.mxu0 0.0
    %118 = vmatpush1.msra.mxu0 %v87
    %119 = vmatprep.subr.mxu0 0.0
    %120 = vmatpush1.msra.mxu0 %v88
    %121 = vmatprep.subr.mxu0 0.0
    %122 = vmatpush1.msra.mxu0 0.0
    %123 = vmatprep.subr.mxu0 0.0
    %124 = vmatpush1.msra.mxu0 0.0
    %125 = vmatprep.subr.mxu0 0.0
    %126 = vmatpush1.msra.mxu0 0.0
    %127 = vmatprep.subr.mxu0 0.0
    %128 = vmatpush1.msra.mxu0 0.0
    %129 = vmatprep.subr.mxu0 0.0
    %130 = vmatpush1.msra.mxu0 0.0
    %131 = vmatprep.subr.mxu0 0.0
    %132 = vmatpush1.msra.mxu0 0.0
    %133 = vmatprep.subr.mxu0 0.0
    %134 = vmatpush1.msra.mxu0 0.0
    %135 = vmatprep.subr.mxu0 0.0
    %136 = vmatpush1.msra.mxu0 0.0
    %137 = vmatprep.subr.mxu0 0.0
    %138 = vmatpush1.msra.mxu0 0.0
    %139 = vmatprep.subr.mxu0 0.0
    %140 = vmatpush1.msra.mxu0 0.0
    %141 = vmatprep.subr.mxu0 0.0
    %142 = vmatpush1.msra.mxu0 0.0
    %143 = vmatprep.subr.mxu0 0.0
    %144 = vmatpush1.msra.mxu0 0.0
    %145 = vmatprep.subr.mxu0 0.0
    %146 = vmatpush1.msra.mxu0 0.0
    %147 = vmatprep.subr.mxu0 0.0
    %148 = vmatpush1.msra.mxu0 0.0
    %149 = vmatprep.subr.mxu0 0.0
    %150 = vmatpush1.msra.mxu0 0.0
    %151 = vmatprep.subr.mxu0 0.0
    %152 = vmatpush1.msra.mxu0 0.0
    %153 = vmatprep.mubr.f32.mxu0 0.0
    %154 = vmatmul.mubr.f32.gmra.mrb[0].mxu0 %v57
    %v155 = vpop.f32.mrb[0].mxu0
    %v156 = vadd.f32 0.0, %v155
    %v157 = vpop.f32.mrb[0].mxu0
    %158 = vmatprep.mubr.f32.mxu0 0.0
    %159 = vmatmul.mubr.f32.gmra.mrb[0].mxu0 %v58
    %v160 = vpop.f32.mrb[0].mxu0
    %v161 = vadd.f32 0.0, %v160
    %v162 = vpop.f32.mrb[0].mxu0
    %163 = vmatprep.mubr.f32.mxu0 0.0
    %164 = vmatmul.mubr.f32.gmra.mrb[0].mxu0 %v59
    %v165 = vpop.f32.mrb[0].mxu0
    %v166 = vadd.f32 0.0, %v165
    %v167 = vpop.f32.mrb[0].mxu0
    %168 = vmatprep.mubr.f32.mxu0 0.0
    %169 = vmatmul.mubr.f32.gmra.mrb[0].mxu0 %v60
    %v170 = vpop.f32.mrb[0].mxu0
    %v171 = vadd.f32 0.0, %v170
    %v172 = vpop.f32.mrb[0].mxu0
    %173 = vmatprep.mubr.f32.mxu0 0.0
    %174 = vmatmul.mubr.f32.gmra.mrb[0].mxu0 %v61
    %v175 = vpop.f32.mrb[0].mxu0
    %v176 = vadd.f32 0.0, %v175
    %v177 = vpop.f32.mrb[0].mxu0
    %178 = vmatprep.mubr.f32.mxu0 0.0
    %179 = vmatmul.mubr.f32.gmra.mrb[0].mxu0 %v62
    %v180 = vpop.f32.mrb[0].mxu0
    %v181 = vadd.f32 0.0, %v180
    %v182 = vpop.f32.mrb[0].mxu0
    %183 = vmatprep.mubr.f32.mxu0 0.0
    %184 = vmatmul.mubr.f32.gmra.mrb[0].mxu0 %v63
    %v185 = vpop.f32.mrb[0].mxu0
    %v186 = vadd.f32 0.0, %v185
    %v187 = vpop.f32.mrb[0].mxu0
    %188 = vmatprep.mubr.f32.mxu0 0.0
    %189 = vmatmul.mubr.f32.gmra.mrb[0].mxu0 %v64
    %v190 = vpop.f32.mrb[0].mxu0
    %v191 = vadd.f32 0.0, %v190
    %v192 = vpop.f32.mrb[0].mxu0
    %193 = vmatprep.mubr.f32.mxu0 0.0
    %194 = vmatmul.mubr.f32.gmra.mrb[0].mxu0 %v65
    %v195 = vpop.f32.mrb[0].mxu0
    %v196 = vadd.f32 0.0, %v195
    %v197 = vpop.f32.mrb[0].mxu0
    %198 = vmatprep.mubr.f32.mxu0 0.0
    %199 = vmatmul.mubr.f32.gmra.mrb[0].mxu0 %v66
    %v200 = vpop.f32.mrb[0].mxu0
    %v201 = vadd.f32 0.0, %v200
    %v202 = vpop.f32.mrb[0].mxu0
    %203 = vmatprep.mubr.f32.mxu0 0.0
    %204 = vmatmul.mubr.f32.gmra.mrb[0].mxu0 %v67
    %v205 = vpop.f32.mrb[0].mxu0
    %v206 = vadd.f32 0.0, %v205
    %v207 = vpop.f32.mrb[0].mxu0
    %208 = vmatprep.mubr.f32.mxu0 0.0
    %209 = vmatmul.mubr.f32.gmra.mrb[0].mxu0 %v68
    %v210 = vpop.f32.mrb[0].mxu0
    %v211 = vadd.f32 0.0, %v210
    %v212 = vpop.f32.mrb[0].mxu0
    %213 = vmatprep.mubr.f32.mxu0 0.0
    %214 = vmatmul.mubr.f32.gmra.mrb[0].mxu0 %v69
    %v215 = vpop.f32.mrb[0].mxu0
    %v216 = vadd.f32 0.0, %v215
    %v217 = vpop.f32.mrb[0].mxu0
    %218 = vmatprep.mubr.f32.mxu0 0.0
    %219 = vmatmul.mubr.f32.gmra.mrb[0].mxu0 %v70
    %v220 = vpop.f32.mrb[0].mxu0
    %v221 = vadd.f32 0.0, %v220
    %v222 = vpop.f32.mrb[0].mxu0
    %223 = vmatprep.mubr.f32.mxu0 0.0
    %224 = vmatmul.mubr.f32.gmra.mrb[0].mxu0 %v71
    %v225 = vpop.f32.mrb[0].mxu0
    %v226 = vadd.f32 0.0, %v225
    %v227 = vpop.f32.mrb[0].mxu0
    %228 = vmatprep.mubr.f32.mxu0 0.0
    %229 = vmatmul.mubr.f32.gmra.mrb[0].mxu0 %v72
    %v230 = vpop.f32.mrb[0].mxu0
    %v231 = vadd.f32 0.0, %v230
    %v232 = vpop.f32.mrb[0].mxu0
    %233 = vdwg.mxu0
    %234 = vst [vmem:[#allocation2] sm:$0xff] %v156
    %235 = vst [vmem:[#allocation2 + $0x20] sm:$0xff] %v161
    %236 = vst [vmem:[#allocation2 + $0x40] sm:$0xff] %v166
    %237 = vst [vmem:[#allocation2 + $0x60] sm:$0xff] %v171
    %238 = vst [vmem:[#allocation2 + $0x80] sm:$0xff] %v176
    %239 = vst [vmem:[#allocation2 + $0xa0] sm:$0xff] %v181
    %240 = vst [vmem:[#allocation2 + $0xc0] sm:$0xff] %v186
    %241 = vst [vmem:[#allocation2 + $0xe0] sm:$0xff] %v191
    %242 = vst [vmem:[#allocation2 + $0x100] sm:$0xff] %v196
    %243 = vst [vmem:[#allocation2 + $0x120] sm:$0xff] %v201
    %244 = vst [vmem:[#allocation2 + $0x140] sm:$0xff] %v206
    %245 = vst [vmem:[#allocation2 + $0x160] sm:$0xff] %v211
    %246 = vst [vmem:[#allocation2 + $0x180] sm:$0xff] %v216
    %247 = vst [vmem:[#allocation2 + $0x1a0] sm:$0xff] %v221
    %248 = vst [vmem:[#allocation2 + $0x1c0] sm:$0xff] %v226
    %249 = vst [vmem:[#allocation2 + $0x1e0] sm:$0xff] %v231
    %s250 = scalar_lea.vmem [#allocation6], 128
    %v251 = vld [vmem:[%s250] sm:$0xff]
    %v252 = vld [vmem:[%s250 + $0x8] sm:$0xff]
    %v253 = vld [vmem:[%s250 + $0x10] sm:$0xff]
    %v254 = vld [vmem:[%s250 + $0x18] sm:$0xff]
    %v255 = vld [vmem:[%s250 + $0x20] sm:$0xff]
    %v256 = vld [vmem:[%s250 + $0x28] sm:$0xff]
    %v257 = vld [vmem:[%s250 + $0x30] sm:$0xff]
    %v258 = vld [vmem:[%s250 + $0x38] sm:$0xff]
    %v259 = vld [vmem:[%s250 + $0x40] sm:$0xff]
    %v260 = vld [vmem:[%s250 + $0x48] sm:$0xff]
    %v261 = vld [vmem:[%s250 + $0x50] sm:$0xff]
    %v262 = vld [vmem:[%s250 + $0x58] sm:$0xff]
    %v263 = vld [vmem:[%s250 + $0x60] sm:$0xff]
    %v264 = vld [vmem:[%s250 + $0x68] sm:$0xff]
    %v265 = vld [vmem:[%s250 + $0x70] sm:$0xff]
    %v266 = vld [vmem:[%s250 + $0x78] sm:$0xff]
    %267 = vmatprep.subr.mxu0 0.0
    %268 = vmatpush1.msra.mxu0 %v251
    %269 = vmatprep.subr.mxu0 0.0
    %270 = vmatpush1.msra.mxu0 %v252
    %271 = vmatprep.subr.mxu0 0.0
    %272 = vmatpush1.msra.mxu0 %v253
    %273 = vmatprep.subr.mxu0 0.0
    %274 = vmatpush1.msra.mxu0 %v254
    %275 = vmatprep.subr.mxu0 0.0
    %276 = vmatpush1.msra.mxu0 %v255
    %277 = vmatprep.subr.mxu0 0.0
    %278 = vmatpush1.msra.mxu0 %v256
    %279 = vmatprep.subr.mxu0 0.0
    %280 = vmatpush1.msra.mxu0 %v257
    %281 = vmatprep.subr.mxu0 0.0
    %282 = vmatpush1.msra.mxu0 %v258
    %283 = vmatprep.subr.mxu0 0.0
    %284 = vmatpush1.msra.mxu0 %v259
    %285 = vmatprep.subr.mxu0 0.0
    %286 = vmatpush1.msra.mxu0 %v260
    %287 = vmatprep.subr.mxu0 0.0
    %288 = vmatpush1.msra.mxu0 %v261
    %289 = vmatprep.subr.mxu0 0.0
    %290 = vmatpush1.msra.mxu0 %v262
    %291 = vmatprep.subr.mxu0 0.0
    %292 = vmatpush1.msra.mxu0 %v263
    %293 = vmatprep.subr.mxu0 0.0
    %294 = vmatpush1.msra.mxu0 %v264
    %295 = vmatprep.subr.mxu0 0.0
    %296 = vmatpush1.msra.mxu0 %v265
    %297 = vmatprep.subr.mxu0 0.0
    %298 = vmatpush1.msra.mxu0 %v266
    %299 = vmatprep.subr.mxu0 0.0
    %300 = vmatpush1.msra.mxu0 0.0
    %301 = vmatprep.subr.mxu0 0.0
    %302 = vmatpush1.msra.mxu0 0.0
    %303 = vmatprep.subr.mxu0 0.0
    %304 = vmatpush1.msra.mxu0 0.0
    %305 = vmatprep.subr.mxu0 0.0
    %306 = vmatpush1.msra.mxu0 0.0
    %307 = vmatprep.subr.mxu0 0.0
    %308 = vmatpush1.msra.mxu0 0.0
    %309 = vmatprep.subr.mxu0 0.0
    %310 = vmatpush1.msra.mxu0 0.0
    %311 = vmatprep.subr.mxu0 0.0
    %312 = vmatpush1.msra.mxu0 0.0
    %313 = vmatprep.subr.mxu0 0.0
    %314 = vmatpush1.msra.mxu0 0.0
    %315 = vmatprep.subr.mxu0 0.0
    %316 = vmatpush1.msra.mxu0 0.0
    %317 = vmatprep.subr.mxu0 0.0
    %318 = vmatpush1.msra.mxu0 0.0
    %319 = vmatprep.subr.mxu0 0.0
    %320 = vmatpush1.msra.mxu0 0.0
    %321 = vmatprep.subr.mxu0 0.0
    %322 = vmatpush1.msra.mxu0 0.0
    %323 = vmatprep.subr.mxu0 0.0
    %324 = vmatpush1.msra.mxu0 0.0
    %325 = vmatprep.subr.mxu0 0.0
    %326 = vmatpush1.msra.mxu0 0.0
    %327 = vmatprep.subr.mxu0 0.0
    %328 = vmatpush1.msra.mxu0 0.0
    %329 = vmatprep.subr.mxu0 0.0
    %330 = vmatpush1.msra.mxu0 0.0
    %331 = vmatprep.mubr.f32.mxu0 0.0
    %332 = vmatmul.mubr.f32.gmra.mrb[0].mxu0 %v57
    %v333 = vpop.f32.mrb[0].mxu0
    %v334 = vadd.f32 0.0, %v333
    %v335 = vpop.f32.mrb[0].mxu0
    %336 = vmatprep.mubr.f32.mxu0 0.0
    %337 = vmatmul.mubr.f32.gmra.mrb[0].mxu0 %v58
    %v338 = vpop.f32.mrb[0].mxu0
    %v339 = vadd.f32 0.0, %v338
    %v340 = vpop.f32.mrb[0].mxu0
    %341 = vmatprep.mubr.f32.mxu0 0.0
    %342 = vmatmul.mubr.f32.gmra.mrb[0].mxu0 %v59
    %v343 = vpop.f32.mrb[0].mxu0
    %v344 = vadd.f32 0.0, %v343
    %v345 = vpop.f32.mrb[0].mxu0
    %346 = vmatprep.mubr.f32.mxu0 0.0
    %347 = vmatmul.mubr.f32.gmra.mrb[0].mxu0 %v60
    %v348 = vpop.f32.mrb[0].mxu0
    %v349 = vadd.f32 0.0, %v348
    %v350 = vpop.f32.mrb[0].mxu0
    %351 = vmatprep.mubr.f32.mxu0 0.0
    %352 = vmatmul.mubr.f32.gmra.mrb[0].mxu0 %v61
    %v353 = vpop.f32.mrb[0].mxu0
    %v354 = vadd.f32 0.0, %v353
    %v355 = vpop.f32.mrb[0].mxu0
    %356 = vmatprep.mubr.f32.mxu0 0.0
    %357 = vmatmul.mubr.f32.gmra.mrb[0].mxu0 %v62
    %v358 = vpop.f32.mrb[0].mxu0
    %v359 = vadd.f32 0.0, %v358
    %v360 = vpop.f32.mrb[0].mxu0
    %361 = vmatprep.mubr.f32.mxu0 0.0
    %362 = vmatmul.mubr.f32.gmra.mrb[0].mxu0 %v63
    %v363 = vpop.f32.mrb[0].mxu0
    %v364 = vadd.f32 0.0, %v363
    %v365 = vpop.f32.mrb[0].mxu0
    %366 = vmatprep.mubr.f32.mxu0 0.0
    %367 = vmatmul.mubr.f32.gmra.mrb[0].mxu0 %v64
    %v368 = vpop.f32.mrb[0].mxu0
    %v369 = vadd.f32 0.0, %v368
    %v370 = vpop.f32.mrb[0].mxu0
    %371 = vmatprep.mubr.f32.mxu0 0.0
    %372 = vmatmul.mubr.f32.gmra.mrb[0].mxu0 %v65
    %v373 = vpop.f32.mrb[0].mxu0
    %v374 = vadd.f32 0.0, %v373
    %v375 = vpop.f32.mrb[0].mxu0
    %376 = vmatprep.mubr.f32.mxu0 0.0
    %377 = vmatmul.mubr.f32.gmra.mrb[0].mxu0 %v66
    %v378 = vpop.f32.mrb[0].mxu0
    %v379 = vadd.f32 0.0, %v378
    %v380 = vpop.f32.mrb[0].mxu0
    %381 = vmatprep.mubr.f32.mxu0 0.0
    %382 = vmatmul.mubr.f32.gmra.mrb[0].mxu0 %v67
    %v383 = vpop.f32.mrb[0].mxu0
    %v384 = vadd.f32 0.0, %v383
    %v385 = vpop.f32.mrb[0].mxu0
    %386 = vmatprep.mubr.f32.mxu0 0.0
    %387 = vmatmul.mubr.f32.gmra.mrb[0].mxu0 %v68
    %v388 = vpop.f32.mrb[0].mxu0
    %v389 = vadd.f32 0.0, %v388
    %v390 = vpop.f32.mrb[0].mxu0
    %391 = vmatprep.mubr.f32.mxu0 0.0
    %392 = vmatmul.mubr.f32.gmra.mrb[0].mxu0 %v69
    %v393 = vpop.f32.mrb[0].mxu0
    %v394 = vadd.f32 0.0, %v393
    %v395 = vpop.f32.mrb[0].mxu0
    %396 = vmatprep.mubr.f32.mxu0 0.0
    %397 = vmatmul.mubr.f32.gmra.mrb[0].mxu0 %v70
    %v398 = vpop.f32.mrb[0].mxu0
    %v399 = vadd.f32 0.0, %v398
    %v400 = vpop.f32.mrb[0].mxu0
    %401 = vmatprep.mubr.f32.mxu0 0.0
    %402 = vmatmul.mubr.f32.gmra.mrb[0].mxu0 %v71
    %v403 = vpop.f32.mrb[0].mxu0
    %v404 = vadd.f32 0.0, %v403
    %v405 = vpop.f32.mrb[0].mxu0
    %406 = vmatprep.mubr.f32.mxu0 0.0
    %407 = vmatmul.mubr.f32.gmra.mrb[0].mxu0 %v72
    %v408 = vpop.f32.mrb[0].mxu0
    %v409 = vadd.f32 0.0, %v408
    %v410 = vpop.f32.mrb[0].mxu0
    %411 = vdwg.mxu0
    %412 = vst [vmem:[#allocation2 + $0x8] sm:$0xff] %v334
    %413 = vst [vmem:[#allocation2 + $0x28] sm:$0xff] %v339
    %414 = vst [vmem:[#allocation2 + $0x48] sm:$0xff] %v344
    %415 = vst [vmem:[#allocation2 + $0x68] sm:$0xff] %v349
    %416 = vst [vmem:[#allocation2 + $0x88] sm:$0xff] %v354
    %417 = vst [vmem:[#allocation2 + $0xa8] sm:$0xff] %v359
    %418 = vst [vmem:[#allocation2 + $0xc8] sm:$0xff] %v364
    %419 = vst [vmem:[#allocation2 + $0xe8] sm:$0xff] %v369
    %420 = vst [vmem:[#allocation2 + $0x108] sm:$0xff] %v374
    %421 = vst [vmem:[#allocation2 + $0x128] sm:$0xff] %v379
    %422 = vst [vmem:[#allocation2 + $0x148] sm:$0xff] %v384
    %423 = vst [vmem:[#allocation2 + $0x168] sm:$0xff] %v389
    %424 = vst [vmem:[#allocation2 + $0x188] sm:$0xff] %v394
    %425 = vst [vmem:[#allocation2 + $0x1a8] sm:$0xff] %v399
    %426 = vst [vmem:[#allocation2 + $0x1c8] sm:$0xff] %v404
    %427 = vst [vmem:[#allocation2 + $0x1e8] sm:$0xff] %v409
    %s428 = scalar_lea.vmem [#allocation6], 256
    %v429 = vld [vmem:[%s428] sm:$0xff]
    %v430 = vld [vmem:[%s428 + $0x8] sm:$0xff]
    %v431 = vld [vmem:[%s428 + $0x10] sm:$0xff]
    %v432 = vld [vmem:[%s428 + $0x18] sm:$0xff]
    %v433 = vld [vmem:[%s428 + $0x20] sm:$0xff]
    %v434 = vld [vmem:[%s428 + $0x28] sm:$0xff]
    %v435 = vld [vmem:[%s428 + $0x30] sm:$0xff]
    %v436 = vld [vmem:[%s428 + $0x38] sm:$0xff]
    %v437 = vld [vmem:[%s428 + $0x40] sm:$0xff]
    %v438 = vld [vmem:[%s428 + $0x48] sm:$0xff]
    %v439 = vld [vmem:[%s428 + $0x50] sm:$0xff]
    %v440 = vld [vmem:[%s428 + $0x58] sm:$0xff]
    %v441 = vld [vmem:[%s428 + $0x60] sm:$0xff]
    %v442 = vld [vmem:[%s428 + $0x68] sm:$0xff]
    %v443 = vld [vmem:[%s428 + $0x70] sm:$0xff]
    %v444 = vld [vmem:[%s428 + $0x78] sm:$0xff]
    %445 = vmatprep.subr.mxu0 0.0
    %446 = vmatpush1.msra.mxu0 %v429
    %447 = vmatprep.subr.mxu0 0.0
    %448 = vmatpush1.msra.mxu0 %v430
    %449 = vmatprep.subr.mxu0 0.0
    %450 = vmatpush1.msra.mxu0 %v431
    %451 = vmatprep.subr.mxu0 0.0
    %452 = vmatpush1.msra.mxu0 %v432
    %453 = vmatprep.subr.mxu0 0.0
    %454 = vmatpush1.msra.mxu0 %v433
    %455 = vmatprep.subr.mxu0 0.0
    %456 = vmatpush1.msra.mxu0 %v434
    %457 = vmatprep.subr.mxu0 0.0
    %458 = vmatpush1.msra.mxu0 %v435
    %459 = vmatprep.subr.mxu0 0.0
    %460 = vmatpush1.msra.mxu0 %v436
    %461 = vmatprep.subr.mxu0 0.0
    %462 = vmatpush1.msra.mxu0 %v437
    %463 = vmatprep.subr.mxu0 0.0
    %464 = vmatpush1.msra.mxu0 %v438
    %465 = vmatprep.subr.mxu0 0.0
    %466 = vmatpush1.msra.mxu0 %v439
    %467 = vmatprep.subr.mxu0 0.0
    %468 = vmatpush1.msra.mxu0 %v440
    %469 = vmatprep.subr.mxu0 0.0
    %470 = vmatpush1.msra.mxu0 %v441
    %471 = vmatprep.subr.mxu0 0.0
    %472 = vmatpush1.msra.mxu0 %v442
    %473 = vmatprep.subr.mxu0 0.0
    %474 = vmatpush1.msra.mxu0 %v443
    %475 = vmatprep.subr.mxu0 0.0
    %476 = vmatpush1.msra.mxu0 %v444
    %477 = vmatprep.subr.mxu0 0.0
    %478 = vmatpush1.msra.mxu0 0.0
    %479 = vmatprep.subr.mxu0 0.0
    %480 = vmatpush1.msra.mxu0 0.0
    %481 = vmatprep.subr.mxu0 0.0
    %482 = vmatpush1.msra.mxu0 0.0
    %483 = vmatprep.subr.mxu0 0.0
    %484 = vmatpush1.msra.mxu0 0.0
    %485 = vmatprep.subr.mxu0 0.0
    %486 = vmatpush1.msra.mxu0 0.0
    %487 = vmatprep.subr.mxu0 0.0
    %488 = vmatpush1.msra.mxu0 0.0
    %489 = vmatprep.subr.mxu0 0.0
    %490 = vmatpush1.msra.mxu0 0.0
    %491 = vmatprep.subr.mxu0 0.0
    %492 = vmatpush1.msra.mxu0 0.0
    %493 = vmatprep.subr.mxu0 0.0
    %494 = vmatpush1.msra.mxu0 0.0
    %495 = vmatprep.subr.mxu0 0.0
    %496 = vmatpush1.msra.mxu0 0.0
    %497 = vmatprep.subr.mxu0 0.0
    %498 = vmatpush1.msra.mxu0 0.0
    %499 = vmatprep.subr.mxu0 0.0
    %500 = vmatpush1.msra.mxu0 0.0
    %501 = vmatprep.subr.mxu0 0.0
    %502 = vmatpush1.msra.mxu0 0.0
    %503 = vmatprep.subr.mxu0 0.0
    %504 = vmatpush1.msra.mxu0 0.0
    %505 = vmatprep.subr.mxu0 0.0
    %506 = vmatpush1.msra.mxu0 0.0
    %507 = vmatprep.subr.mxu0 0.0
    %508 = vmatpush1.msra.mxu0 0.0
    %509 = vmatprep.mubr.f32.mxu0 0.0
    %510 = vmatmul.mubr.f32.gmra.mrb[0].mxu0 %v57
    %v511 = vpop.f32.mrb[0].mxu0
    %v512 = vadd.f32 0.0, %v511
    %v513 = vpop.f32.mrb[0].mxu0
    %514 = vmatprep.mubr.f32.mxu0 0.0
    %515 = vmatmul.mubr.f32.gmra.mrb[0].mxu0 %v58
    %v516 = vpop.f32.mrb[0].mxu0
    %v517 = vadd.f32 0.0, %v516
    %v518 = vpop.f32.mrb[0].mxu0
    %519 = vmatprep.mubr.f32.mxu0 0.0
    %520 = vmatmul.mubr.f32.gmra.mrb[0].mxu0 %v59
    %v521 = vpop.f32.mrb[0].mxu0
    %v522 = vadd.f32 0.0, %v521
    %v523 = vpop.f32.mrb[0].mxu0
    %524 = vmatprep.mubr.f32.mxu0 0.0
    %525 = vmatmul.mubr.f32.gmra.mrb[0].mxu0 %v60
    %v526 = vpop.f32.mrb[0].mxu0
    %v527 = vadd.f32 0.0, %v526
    %v528 = vpop.f32.mrb[0].mxu0
    %529 = vmatprep.mubr.f32.mxu0 0.0
    %530 = vmatmul.mubr.f32.gmra.mrb[0].mxu0 %v61
    %v531 = vpop.f32.mrb[0].mxu0
    %v532 = vadd.f32 0.0, %v531
    %v533 = vpop.f32.mrb[0].mxu0
    %534 = vmatprep.mubr.f32.mxu0 0.0
    %535 = vmatmul.mubr.f32.gmra.mrb[0].mxu0 %v62
    %v536 = vpop.f32.mrb[0].mxu0
    %v537 = vadd.f32 0.0, %v536
    %v538 = vpop.f32.mrb[0].mxu0
    %539 = vmatprep.mubr.f32.mxu0 0.0
    %540 = vmatmul.mubr.f32.gmra.mrb[0].mxu0 %v63
    %v541 = vpop.f32.mrb[0].mxu0
    %v542 = vadd.f32 0.0, %v541
    %v543 = vpop.f32.mrb[0].mxu0
    %544 = vmatprep.mubr.f32.mxu0 0.0
    %545 = vmatmul.mubr.f32.gmra.mrb[0].mxu0 %v64
    %v546 = vpop.f32.mrb[0].mxu0
    %v547 = vadd.f32 0.0, %v546
    %v548 = vpop.f32.mrb[0].mxu0
    %549 = vmatprep.mubr.f32.mxu0 0.0
    %550 = vmatmul.mubr.f32.gmra.mrb[0].mxu0 %v65
    %v551 = vpop.f32.mrb[0].mxu0
    %v552 = vadd.f32 0.0, %v551
    %v553 = vpop.f32.mrb[0].mxu0
    %554 = vmatprep.mubr.f32.mxu0 0.0
    %555 = vmatmul.mubr.f32.gmra.mrb[0].mxu0 %v66
    %v556 = vpop.f32.mrb[0].mxu0
    %v557 = vadd.f32 0.0, %v556
    %v558 = vpop.f32.mrb[0].mxu0
    %559 = vmatprep.mubr.f32.mxu0 0.0
    %560 = vmatmul.mubr.f32.gmra.mrb[0].mxu0 %v67
    %v561 = vpop.f32.mrb[0].mxu0
    %v562 = vadd.f32 0.0, %v561
    %v563 = vpop.f32.mrb[0].mxu0
    %564 = vmatprep.mubr.f32.mxu0 0.0
    %565 = vmatmul.mubr.f32.gmra.mrb[0].mxu0 %v68
    %v566 = vpop.f32.mrb[0].mxu0
    %v567 = vadd.f32 0.0, %v566
    %v568 = vpop.f32.mrb[0].mxu0
    %569 = vmatprep.mubr.f32.mxu0 0.0
    %570 = vmatmul.mubr.f32.gmra.mrb[0].mxu0 %v69
    %v571 = vpop.f32.mrb[0].mxu0
    %v572 = vadd.f32 0.0, %v571
    %v573 = vpop.f32.mrb[0].mxu0
    %574 = vmatprep.mubr.f32.mxu0 0.0
    %575 = vmatmul.mubr.f32.gmra.mrb[0].mxu0 %v70
    %v576 = vpop.f32.mrb[0].mxu0
    %v577 = vadd.f32 0.0, %v576
    %v578 = vpop.f32.mrb[0].mxu0
    %579 = vmatprep.mubr.f32.mxu0 0.0
    %580 = vmatmul.mubr.f32.gmra.mrb[0].mxu0 %v71
    %v581 = vpop.f32.mrb[0].mxu0
    %v582 = vadd.f32 0.0, %v581
    %v583 = vpop.f32.mrb[0].mxu0
    %584 = vmatprep.mubr.f32.mxu0 0.0
    %585 = vmatmul.mubr.f32.gmra.mrb[0].mxu0 %v72
    %v586 = vpop.f32.mrb[0].mxu0
    %v587 = vadd.f32 0.0, %v586
    %v588 = vpop.f32.mrb[0].mxu0
    %589 = vdwg.mxu0
    %590 = vst [vmem:[#allocation2 + $0x10] sm:$0xff] %v512
    %591 = vst [vmem:[#allocation2 + $0x30] sm:$0xff] %v517
    %592 = vst [vmem:[#allocation2 + $0x50] sm:$0xff] %v522
    %593 = vst [vmem:[#allocation2 + $0x70] sm:$0xff] %v527
    %594 = vst [vmem:[#allocation2 + $0x90] sm:$0xff] %v532
    %595 = vst [vmem:[#allocation2 + $0xb0] sm:$0xff] %v537
    %596 = vst [vmem:[#allocation2 + $0xd0] sm:$0xff] %v542
    %597 = vst [vmem:[#allocation2 + $0xf0] sm:$0xff] %v547
    %598 = vst [vmem:[#allocation2 + $0x110] sm:$0xff] %v552
    %599 = vst [vmem:[#allocation2 + $0x130] sm:$0xff] %v557
    %600 = vst [vmem:[#allocation2 + $0x150] sm:$0xff] %v562
    %601 = vst [vmem:[#allocation2 + $0x170] sm:$0xff] %v567
    %602 = vst [vmem:[#allocation2 + $0x190] sm:$0xff] %v572
    %603 = vst [vmem:[#allocation2 + $0x1b0] sm:$0xff] %v577
    %604 = vst [vmem:[#allocation2 + $0x1d0] sm:$0xff] %v582
    %605 = vst [vmem:[#allocation2 + $0x1f0] sm:$0xff] %v587
    %606 = vst [vmem:[#allocation2 + $0x18] sm:$0xff] %v57
    %607 = vst [vmem:[#allocation2 + $0x38] sm:$0xff] %v58
    %608 = vst [vmem:[#allocation2 + $0x58] sm:$0xff] %v59
    %609 = vst [vmem:[#allocation2 + $0x78] sm:$0xff] %v60
    %610 = vst [vmem:[#allocation2 + $0x98] sm:$0xff] %v61
    %611 = vst [vmem:[#allocation2 + $0xb8] sm:$0xff] %v62
    %612 = vst [vmem:[#allocation2 + $0xd8] sm:$0xff] %v63
    %613 = vst [vmem:[#allocation2 + $0xf8] sm:$0xff] %v64
    %614 = vst [vmem:[#allocation2 + $0x118] sm:$0xff] %v65
    %615 = vst [vmem:[#allocation2 + $0x138] sm:$0xff] %v66
    %616 = vst [vmem:[#allocation2 + $0x158] sm:$0xff] %v67
    %617 = vst [vmem:[#allocation2 + $0x178] sm:$0xff] %v68
    %618 = vst [vmem:[#allocation2 + $0x198] sm:$0xff] %v69
    %619 = vst [vmem:[#allocation2 + $0x1b8] sm:$0xff] %v70
    %620 = vst [vmem:[#allocation2 + $0x1d8] sm:$0xff] %v71
    %621 = vst [vmem:[#allocation2 + $0x1f8] sm:$0xff] %v72
    %v622 = vld [vmem:[#allocation8] sm:$0xff]
    %v623 = vld [vmem:[#allocation2] sm:$0xff]
    %v624 = vld [vmem:[#allocation2 + $0x8] sm:$0xff]
    %v625 = vld [vmem:[#allocation2 + $0x10] sm:$0xff]
    %v626 = vld [vmem:[#allocation2 + $0x18] sm:$0xff]
    %v627 = vld [vmem:[#allocation2 + $0x20] sm:$0xff]
    %v628 = vld [vmem:[#allocation2 + $0x28] sm:$0xff]
    %v629 = vld [vmem:[#allocation2 + $0x30] sm:$0xff]
    %v630 = vld [vmem:[#allocation2 + $0x38] sm:$0xff]
    %v631 = vld [vmem:[#allocation2 + $0x40] sm:$0xff]
    %v632 = vld [vmem:[#allocation2 + $0x48] sm:$0xff]
    %v633 = vld [vmem:[#allocation2 + $0x50] sm:$0xff]
    %v634 = vld [vmem:[#allocation2 + $0x58] sm:$0xff]
    %v635 = vld [vmem:[#allocation2 + $0x60] sm:$0xff]
    %v636 = vld [vmem:[#allocation2 + $0x68] sm:$0xff]
    %v637 = vld [vmem:[#allocation2 + $0x70] sm:$0xff]
    %v638 = vld [vmem:[#allocation2 + $0x78] sm:$0xff]
    %v639 = vld [vmem:[#allocation2 + $0x80] sm:$0xff]
    %v640 = vld [vmem:[#allocation2 + $0x88] sm:$0xff]
    %v641 = vld [vmem:[#allocation2 + $0x90] sm:$0xff]
    %v642 = vld [vmem:[#allocation2 + $0x98] sm:$0xff]
    %v643 = vld [vmem:[#allocation2 + $0xa0] sm:$0xff]
    %v644 = vld [vmem:[#allocation2 + $0xa8] sm:$0xff]
    %v645 = vld [vmem:[#allocation2 + $0xb0] sm:$0xff]
    %v646 = vld [vmem:[#allocation2 + $0xb8] sm:$0xff]
    %v647 = vld [vmem:[#allocation2 + $0xc0] sm:$0xff]
    %v648 = vld [vmem:[#allocation2 + $0xc8] sm:$0xff]
    %v649 = vld [vmem:[#allocation2 + $0xd0] sm:$0xff]
    %v650 = vld [vmem:[#allocation2 + $0xd8] sm:$0xff]
    %v651 = vld [vmem:[#allocation2 + $0xe0] sm:$0xff]
    %v652 = vld [vmem:[#allocation2 + $0xe8] sm:$0xff]
    %v653 = vld [vmem:[#allocation2 + $0xf0] sm:$0xff]
    %v654 = vld [vmem:[#allocation2 + $0xf8] sm:$0xff]
    %v655 = vld [vmem:[#allocation2 + $0x100] sm:$0xff]
    %v656 = vld [vmem:[#allocation2 + $0x108] sm:$0xff]
    %v657 = vld [vmem:[#allocation2 + $0x110] sm:$0xff]
    %v658 = vld [vmem:[#allocation2 + $0x118] sm:$0xff]
    %v659 = vld [vmem:[#allocation2 + $0x120] sm:$0xff]
    %v660 = vld [vmem:[#allocation2 + $0x128] sm:$0xff]
    %v661 = vld [vmem:[#allocation2 + $0x130] sm:$0xff]
    %v662 = vld [vmem:[#allocation2 + $0x138] sm:$0xff]
    %v663 = vld [vmem:[#allocation2 + $0x140] sm:$0xff]
    %v664 = vld [vmem:[#allocation2 + $0x148] sm:$0xff]
    %v665 = vld [vmem:[#allocation2 + $0x150] sm:$0xff]
    %v666 = vld [vmem:[#allocation2 + $0x158] sm:$0xff]
    %v667 = vld [vmem:[#allocation2 + $0x160] sm:$0xff]
    %v668 = vld [vmem:[#allocation2 + $0x168] sm:$0xff]
    %v669 = vld [vmem:[#allocation2 + $0x170] sm:$0xff]
    %v670 = vld [vmem:[#allocation2 + $0x178] sm:$0xff]
    %v671 = vld [vmem:[#allocation2 + $0x180] sm:$0xff]
    %v672 = vld [vmem:[#allocation2 + $0x188] sm:$0xff]
    %v673 = vld [vmem:[#allocation2 + $0x190] sm:$0xff]
    %v674 = vld [vmem:[#allocation2 + $0x198] sm:$0xff]
    %v675 = vld [vmem:[#allocation2 + $0x1a0] sm:$0xff]
    %v676 = vld [vmem:[#allocation2 + $0x1a8] sm:$0xff]
    %v677 = vld [vmem:[#allocation2 + $0x1b0] sm:$0xff]
    %v678 = vld [vmem:[#allocation2 + $0x1b8] sm:$0xff]
    %v679 = vld [vmem:[#allocation2 + $0x1c0] sm:$0xff]
    %v680 = vld [vmem:[#allocation2 + $0x1c8] sm:$0xff]
    %v681 = vld [vmem:[#allocation2 + $0x1d0] sm:$0xff]
    %v682 = vld [vmem:[#allocation2 + $0x1d8] sm:$0xff]
    %v683 = vld [vmem:[#allocation2 + $0x1e0] sm:$0xff]
    %v684 = vld [vmem:[#allocation2 + $0x1e8] sm:$0xff]
    %v685 = vld [vmem:[#allocation2 + $0x1f0] sm:$0xff]
    %v686 = vld [vmem:[#allocation2 + $0x1f8] sm:$0xff]
    %v687 = vld [vmem:[%s3] sm:$0xff]
    %vm688 = vcmask 261120
    %v690 = vsel %vm688, %v622, 0
    %692 = vmatprep.subr.mxu0 0.0
    %693 = vmatpush1.msra.mxu0 %v623
    %694 = vmatprep.subr.mxu0 0.0
    %695 = vmatpush1.msra.mxu0 %v624
    %696 = vmatprep.subr.mxu0 0.0
    %697 = vmatpush1.msra.mxu0 %v625
    %698 = vmatprep.subr.mxu0 0.0
    %699 = vmatpush1.msra.mxu0 %v626
    %700 = vmatprep.subr.mxu0 0.0
    %701 = vmatpush1.msra.mxu0 0.0
    %702 = vmatprep.subr.mxu0 0.0
    %703 = vmatpush1.msra.mxu0 0.0
    %704 = vmatprep.subr.mxu0 0.0
    %705 = vmatpush1.msra.mxu0 0.0
    %706 = vmatprep.subr.mxu0 0.0
    %707 = vmatpush1.msra.mxu0 0.0
    %708 = vmatprep.subr.mxu0 0.0
    %709 = vmatpush1.msra.mxu0 0.0
    %710 = vmatprep.subr.mxu0 0.0
    %711 = vmatpush1.msra.mxu0 0.0
    %712 = vmatprep.subr.mxu0 0.0
    %713 = vmatpush1.msra.mxu0 0.0
    %714 = vmatprep.subr.mxu0 0.0
    %715 = vmatpush1.msra.mxu0 0.0
    %716 = vmatprep.subr.mxu0 0.0
    %717 = vmatpush1.msra.mxu0 0.0
    %718 = vmatprep.subr.mxu0 0.0
    %719 = vmatpush1.msra.mxu0 0.0
    %720 = vmatprep.subr.mxu0 0.0
    %721 = vmatpush1.msra.mxu0 0.0
    %722 = vmatprep.subr.mxu0 0.0
    %723 = vmatpush1.msra.mxu0 0.0
    %724 = vmatprep.subr.mxu0 0.0
    %725 = vmatpush1.msra.mxu0 0.0
    %726 = vmatprep.subr.mxu0 0.0
    %727 = vmatpush1.msra.mxu0 0.0
    %728 = vmatprep.subr.mxu0 0.0
    %729 = vmatpush1.msra.mxu0 0.0
    %730 = vmatprep.subr.mxu0 0.0
    %731 = vmatpush1.msra.mxu0 0.0
    %732 = vmatprep.subr.mxu0 0.0
    %733 = vmatpush1.msra.mxu0 0.0
    %734 = vmatprep.subr.mxu0 0.0
    %735 = vmatpush1.msra.mxu0 0.0
    %736 = vmatprep.subr.mxu0 0.0
    %737 = vmatpush1.msra.mxu0 0.0
    %738 = vmatprep.subr.mxu0 0.0
    %739 = vmatpush1.msra.mxu0 0.0
    %740 = vmatprep.subr.mxu0 0.0
    %741 = vmatpush1.msra.mxu0 0.0
    %742 = vmatprep.subr.mxu0 0.0
    %743 = vmatpush1.msra.mxu0 0.0
    %744 = vmatprep.subr.mxu0 0.0
    %745 = vmatpush1.msra.mxu0 0.0
    %746 = vmatprep.subr.mxu0 0.0
    %747 = vmatpush1.msra.mxu0 0.0
    %748 = vmatprep.subr.mxu0 0.0
    %749 = vmatpush1.msra.mxu0 0.0
    %750 = vmatprep.subr.mxu0 0.0
    %751 = vmatpush1.msra.mxu0 0.0
    %752 = vmatprep.subr.mxu0 0.0
    %753 = vmatpush1.msra.mxu0 0.0
    %754 = vmatprep.subr.mxu0 0.0
    %755 = vmatpush1.msra.mxu0 0.0
    %756 = vmatprep.mubr.f32.mxu0 0.0
    %757 = vmatmul.mubr.f32.gmra.mrb[0].mxu0 %v690
    %v758 = vpop.f32.mrb[0].mxu0
    %v759 = vadd.f32 %v687, %v758
    %v760 = vpop.f32.mrb[0].mxu0
    %761 = vdwg.mxu0
    %762 = vmatprep.subr.mxu0 0.0
    %763 = vmatpush1.msra.mxu0 %v627
    %764 = vmatprep.subr.mxu0 0.0
    %765 = vmatpush1.msra.mxu0 %v628
    %766 = vmatprep.subr.mxu0 0.0
    %767 = vmatpush1.msra.mxu0 %v629
    %768 = vmatprep.subr.mxu0 0.0
    %769 = vmatpush1.msra.mxu0 %v630
    %770 = vmatprep.subr.mxu0 0.0
    %771 = vmatpush1.msra.mxu0 0.0
    %772 = vmatprep.subr.mxu0 0.0
    %773 = vmatpush1.msra.mxu0 0.0
    %774 = vmatprep.subr.mxu0 0.0
    %775 = vmatpush1.msra.mxu0 0.0
    %776 = vmatprep.subr.mxu0 0.0
    %777 = vmatpush1.msra.mxu0 0.0
    %778 = vmatprep.subr.mxu0 0.0
    %779 = vmatpush1.msra.mxu0 0.0
    %780 = vmatprep.subr.mxu0 0.0
    %781 = vmatpush1.msra.mxu0 0.0
    %782 = vmatprep.subr.mxu0 0.0
    %783 = vmatpush1.msra.mxu0 0.0
    %784 = vmatprep.subr.mxu0 0.0
    %785 = vmatpush1.msra.mxu0 0.0
    %786 = vmatprep.subr.mxu0 0.0
    %787 = vmatpush1.msra.mxu0 0.0
    %788 = vmatprep.subr.mxu0 0.0
    %789 = vmatpush1.msra.mxu0 0.0
    %790 = vmatprep.subr.mxu0 0.0
    %791 = vmatpush1.msra.mxu0 0.0
    %792 = vmatprep.subr.mxu0 0.0
    %793 = vmatpush1.msra.mxu0 0.0
    %794 = vmatprep.subr.mxu0 0.0
    %795 = vmatpush1.msra.mxu0 0.0
    %796 = vmatprep.subr.mxu0 0.0
    %797 = vmatpush1.msra.mxu0 0.0
    %798 = vmatprep.subr.mxu0 0.0
    %799 = vmatpush1.msra.mxu0 0.0
    %800 = vmatprep.subr.mxu0 0.0
    %801 = vmatpush1.msra.mxu0 0.0
    %802 = vmatprep.subr.mxu0 0.0
    %803 = vmatpush1.msra.mxu0 0.0
    %804 = vmatprep.subr.mxu0 0.0
    %805 = vmatpush1.msra.mxu0 0.0
    %806 = vmatprep.subr.mxu0 0.0
    %807 = vmatpush1.msra.mxu0 0.0
    %808 = vmatprep.subr.mxu0 0.0
    %809 = vmatpush1.msra.mxu0 0.0
    %810 = vmatprep.subr.mxu0 0.0
    %811 = vmatpush1.msra.mxu0 0.0
    %812 = vmatprep.subr.mxu0 0.0
    %813 = vmatpush1.msra.mxu0 0.0
    %814 = vmatprep.subr.mxu0 0.0
    %815 = vmatpush1.msra.mxu0 0.0
    %816 = vmatprep.subr.mxu0 0.0
    %817 = vmatpush1.msra.mxu0 0.0
    %818 = vmatprep.subr.mxu0 0.0
    %819 = vmatpush1.msra.mxu0 0.0
    %820 = vmatprep.subr.mxu0 0.0
    %821 = vmatpush1.msra.mxu0 0.0
    %822 = vmatprep.subr.mxu0 0.0
    %823 = vmatpush1.msra.mxu0 0.0
    %824 = vmatprep.subr.mxu0 0.0
    %825 = vmatpush1.msra.mxu0 0.0
    %826 = vmatprep.mubr.f32.mxu0 0.0
    %827 = vmatmul.mubr.f32.gmra.mrb[0].mxu0 %v690
    %v828 = vpop.f32.mrb[0].mxu0
    %v829 = vadd.f32 %v687, %v828
    %v830 = vpop.f32.mrb[0].mxu0
    %831 = vdwg.mxu0
    %832 = vmatprep.subr.mxu0 0.0
    %833 = vmatpush1.msra.mxu0 %v631
    %834 = vmatprep.subr.mxu0 0.0
    %835 = vmatpush1.msra.mxu0 %v632
    %836 = vmatprep.subr.mxu0 0.0
    %837 = vmatpush1.msra.mxu0 %v633
    %838 = vmatprep.subr.mxu0 0.0
    %839 = vmatpush1.msra.mxu0 %v634
    %840 = vmatprep.subr.mxu0 0.0
    %841 = vmatpush1.msra.mxu0 0.0
    %842 = vmatprep.subr.mxu0 0.0
    %843 = vmatpush1.msra.mxu0 0.0
    %844 = vmatprep.subr.mxu0 0.0
    %845 = vmatpush1.msra.mxu0 0.0
    %846 = vmatprep.subr.mxu0 0.0
    %847 = vmatpush1.msra.mxu0 0.0
    %848 = vmatprep.subr.mxu0 0.0
    %849 = vmatpush1.msra.mxu0 0.0
    %850 = vmatprep.subr.mxu0 0.0
    %851 = vmatpush1.msra.mxu0 0.0
    %852 = vmatprep.subr.mxu0 0.0
    %853 = vmatpush1.msra.mxu0 0.0
    %854 = vmatprep.subr.mxu0 0.0
    %855 = vmatpush1.msra.mxu0 0.0
    %856 = vmatprep.subr.mxu0 0.0
    %857 = vmatpush1.msra.mxu0 0.0
    %858 = vmatprep.subr.mxu0 0.0
    %859 = vmatpush1.msra.mxu0 0.0
    %860 = vmatprep.subr.mxu0 0.0
    %861 = vmatpush1.msra.mxu0 0.0
    %862 = vmatprep.subr.mxu0 0.0
    %863 = vmatpush1.msra.mxu0 0.0
    %864 = vmatprep.subr.mxu0 0.0
    %865 = vmatpush1.msra.mxu0 0.0
    %866 = vmatprep.subr.mxu0 0.0
    %867 = vmatpush1.msra.mxu0 0.0
    %868 = vmatprep.subr.mxu0 0.0
    %869 = vmatpush1.msra.mxu0 0.0
    %870 = vmatprep.subr.mxu0 0.0
    %871 = vmatpush1.msra.mxu0 0.0
    %872 = vmatprep.subr.mxu0 0.0
    %873 = vmatpush1.msra.mxu0 0.0
    %874 = vmatprep.subr.mxu0 0.0
    %875 = vmatpush1.msra.mxu0 0.0
    %876 = vmatprep.subr.mxu0 0.0
    %877 = vmatpush1.msra.mxu0 0.0
    %878 = vmatprep.subr.mxu0 0.0
    %879 = vmatpush1.msra.mxu0 0.0
    %880 = vmatprep.subr.mxu0 0.0
    %881 = vmatpush1.msra.mxu0 0.0
    %882 = vmatprep.subr.mxu0 0.0
    %883 = vmatpush1.msra.mxu0 0.0
    %884 = vmatprep.subr.mxu0 0.0
    %885 = vmatpush1.msra.mxu0 0.0
    %886 = vmatprep.subr.mxu0 0.0
    %887 = vmatpush1.msra.mxu0 0.0
    %888 = vmatprep.subr.mxu0 0.0
    %889 = vmatpush1.msra.mxu0 0.0
    %890 = vmatprep.subr.mxu0 0.0
    %891 = vmatpush1.msra.mxu0 0.0
    %892 = vmatprep.subr.mxu0 0.0
    %893 = vmatpush1.msra.mxu0 0.0
    %894 = vmatprep.subr.mxu0 0.0
    %895 = vmatpush1.msra.mxu0 0.0
    %896 = vmatprep.mubr.f32.mxu0 0.0
    %897 = vmatmul.mubr.f32.gmra.mrb[0].mxu0 %v690
    %v898 = vpop.f32.mrb[0].mxu0
    %v899 = vadd.f32 %v687, %v898
    %v900 = vpop.f32.mrb[0].mxu0
    %901 = vdwg.mxu0
    %902 = vmatprep.subr.mxu0 0.0
    %903 = vmatpush1.msra.mxu0 %v635
    %904 = vmatprep.subr.mxu0 0.0
    %905 = vmatpush1.msra.mxu0 %v636
    %906 = vmatprep.subr.mxu0 0.0
    %907 = vmatpush1.msra.mxu0 %v637
    %908 = vmatprep.subr.mxu0 0.0
    %909 = vmatpush1.msra.mxu0 %v638
    %910 = vmatprep.subr.mxu0 0.0
    %911 = vmatpush1.msra.mxu0 0.0
    %912 = vmatprep.subr.mxu0 0.0
    %913 = vmatpush1.msra.mxu0 0.0
    %914 = vmatprep.subr.mxu0 0.0
    %915 = vmatpush1.msra.mxu0 0.0
    %916 = vmatprep.subr.mxu0 0.0
    %917 = vmatpush1.msra.mxu0 0.0
    %918 = vmatprep.subr.mxu0 0.0
    %919 = vmatpush1.msra.mxu0 0.0
    %920 = vmatprep.subr.mxu0 0.0
    %921 = vmatpush1.msra.mxu0 0.0
    %922 = vmatprep.subr.mxu0 0.0
    %923 = vmatpush1.msra.mxu0 0.0
    %924 = vmatprep.subr.mxu0 0.0
    %925 = vmatpush1.msra.mxu0 0.0
    %926 = vmatprep.subr.mxu0 0.0
    %927 = vmatpush1.msra.mxu0 0.0
    %928 = vmatprep.subr.mxu0 0.0
    %929 = vmatpush1.msra.mxu0 0.0
    %930 = vmatprep.subr.mxu0 0.0
    %931 = vmatpush1.msra.mxu0 0.0
    %932 = vmatprep.subr.mxu0 0.0
    %933 = vmatpush1.msra.mxu0 0.0
    %934 = vmatprep.subr.mxu0 0.0
    %935 = vmatpush1.msra.mxu0 0.0
    %936 = vmatprep.subr.mxu0 0.0
    %937 = vmatpush1.msra.mxu0 0.0
    %938 = vmatprep.subr.mxu0 0.0
    %939 = vmatpush1.msra.mxu0 0.0
    %940 = vmatprep.subr.mxu0 0.0
    %941 = vmatpush1.msra.mxu0 0.0
    %942 = vmatprep.subr.mxu0 0.0
    %943 = vmatpush1.msra.mxu0 0.0
    %944 = vmatprep.subr.mxu0 0.0
    %945 = vmatpush1.msra.mxu0 0.0
    %946 = vmatprep.subr.mxu0 0.0
    %947 = vmatpush1.msra.mxu0 0.0
    %948 = vmatprep.subr.mxu0 0.0
    %949 = vmatpush1.msra.mxu0 0.0
    %950 = vmatprep.subr.mxu0 0.0
    %951 = vmatpush1.msra.mxu0 0.0
    %952 = vmatprep.subr.mxu0 0.0
    %953 = vmatpush1.msra.mxu0 0.0
    %954 = vmatprep.subr.mxu0 0.0
    %955 = vmatpush1.msra.mxu0 0.0
    %956 = vmatprep.subr.mxu0 0.0
    %957 = vmatpush1.msra.mxu0 0.0
    %958 = vmatprep.subr.mxu0 0.0
    %959 = vmatpush1.msra.mxu0 0.0
    %960 = vmatprep.subr.mxu0 0.0
    %961 = vmatpush1.msra.mxu0 0.0
    %962 = vmatprep.subr.mxu0 0.0
    %963 = vmatpush1.msra.mxu0 0.0
    %964 = vmatprep.subr.mxu0 0.0
    %965 = vmatpush1.msra.mxu0 0.0
    %966 = vmatprep.mubr.f32.mxu0 0.0
    %967 = vmatmul.mubr.f32.gmra.mrb[0].mxu0 %v690
    %v968 = vpop.f32.mrb[0].mxu0
    %v969 = vadd.f32 %v687, %v968
    %v970 = vpop.f32.mrb[0].mxu0
    %971 = vdwg.mxu0
    %972 = vmatprep.subr.mxu0 0.0
    %973 = vmatpush1.msra.mxu0 %v639
    %974 = vmatprep.subr.mxu0 0.0
    %975 = vmatpush1.msra.mxu0 %v640
    %976 = vmatprep.subr.mxu0 0.0
    %977 = vmatpush1.msra.mxu0 %v641
    %978 = vmatprep.subr.mxu0 0.0
    %979 = vmatpush1.msra.mxu0 %v642
    %980 = vmatprep.subr.mxu0 0.0
    %981 = vmatpush1.msra.mxu0 0.0
    %982 = vmatprep.subr.mxu0 0.0
    %983 = vmatpush1.msra.mxu0 0.0
    %984 = vmatprep.subr.mxu0 0.0
    %985 = vmatpush1.msra.mxu0 0.0
    %986 = vmatprep.subr.mxu0 0.0
    %987 = vmatpush1.msra.mxu0 0.0
    %988 = vmatprep.subr.mxu0 0.0
    %989 = vmatpush1.msra.mxu0 0.0
    %990 = vmatprep.subr.mxu0 0.0
    %991 = vmatpush1.msra.mxu0 0.0
    %992 = vmatprep.subr.mxu0 0.0
    %993 = vmatpush1.msra.mxu0 0.0
    %994 = vmatprep.subr.mxu0 0.0
    %995 = vmatpush1.msra.mxu0 0.0
    %996 = vmatprep.subr.mxu0 0.0
    %997 = vmatpush1.msra.mxu0 0.0
    %998 = vmatprep.subr.mxu0 0.0
    %999 = vmatpush1.msra.mxu0 0.0
    %1000 = vmatprep.subr.mxu0 0.0
    %1001 = vmatpush1.msra.mxu0 0.0
    %1002 = vmatprep.subr.mxu0 0.0
    %1003 = vmatpush1.msra.mxu0 0.0
    %1004 = vmatprep.subr.mxu0 0.0
    %1005 = vmatpush1.msra.mxu0 0.0
    %1006 = vmatprep.subr.mxu0 0.0
    %1007 = vmatpush1.msra.mxu0 0.0
    %1008 = vmatprep.subr.mxu0 0.0
    %1009 = vmatpush1.msra.mxu0 0.0
    %1010 = vmatprep.subr.mxu0 0.0
    %1011 = vmatpush1.msra.mxu0 0.0
    %1012 = vmatprep.subr.mxu0 0.0
    %1013 = vmatpush1.msra.mxu0 0.0
    %1014 = vmatprep.subr.mxu0 0.0
    %1015 = vmatpush1.msra.mxu0 0.0
    %1016 = vmatprep.subr.mxu0 0.0
    %1017 = vmatpush1.msra.mxu0 0.0
    %1018 = vmatprep.subr.mxu0 0.0
    %1019 = vmatpush1.msra.mxu0 0.0
    %1020 = vmatprep.subr.mxu0 0.0
    %1021 = vmatpush1.msra.mxu0 0.0
    %1022 = vmatprep.subr.mxu0 0.0
    %1023 = vmatpush1.msra.mxu0 0.0
    %1024 = vmatprep.subr.mxu0 0.0
    %1025 = vmatpush1.msra.mxu0 0.0
    %1026 = vmatprep.subr.mxu0 0.0
    %1027 = vmatpush1.msra.mxu0 0.0
    %1028 = vmatprep.subr.mxu0 0.0
    %1029 = vmatpush1.msra.mxu0 0.0
    %1030 = vmatprep.subr.mxu0 0.0
    %1031 = vmatpush1.msra.mxu0 0.0
    %1032 = vmatprep.subr.mxu0 0.0
    %1033 = vmatpush1.msra.mxu0 0.0
    %1034 = vmatprep.subr.mxu0 0.0
    %1035 = vmatpush1.msra.mxu0 0.0
    %1036 = vmatprep.mubr.f32.mxu0 0.0
    %1037 = vmatmul.mubr.f32.gmra.mrb[0].mxu0 %v690
    %v1038 = vpop.f32.mrb[0].mxu0
    %v1039 = vadd.f32 %v687, %v1038
    %v1040 = vpop.f32.mrb[0].mxu0
    %1041 = vdwg.mxu0
    %1042 = vmatprep.subr.mxu0 0.0
    %1043 = vmatpush1.msra.mxu0 %v643
    %1044 = vmatprep.subr.mxu0 0.0
    %1045 = vmatpush1.msra.mxu0 %v644
    %1046 = vmatprep.subr.mxu0 0.0
    %1047 = vmatpush1.msra.mxu0 %v645
    %1048 = vmatprep.subr.mxu0 0.0
    %1049 = vmatpush1.msra.mxu0 %v646
    %1050 = vmatprep.subr.mxu0 0.0
    %1051 = vmatpush1.msra.mxu0 0.0
    %1052 = vmatprep.subr.mxu0 0.0
    %1053 = vmatpush1.msra.mxu0 0.0
    %1054 = vmatprep.subr.mxu0 0.0
    %1055 = vmatpush1.msra.mxu0 0.0
    %1056 = vmatprep.subr.mxu0 0.0
    %1057 = vmatpush1.msra.mxu0 0.0
    %1058 = vmatprep.subr.mxu0 0.0
    %1059 = vmatpush1.msra.mxu0 0.0
    %1060 = vmatprep.subr.mxu0 0.0
    %1061 = vmatpush1.msra.mxu0 0.0
    %1062 = vmatprep.subr.mxu0 0.0
    %1063 = vmatpush1.msra.mxu0 0.0
    %1064 = vmatprep.subr.mxu0 0.0
    %1065 = vmatpush1.msra.mxu0 0.0
    %1066 = vmatprep.subr.mxu0 0.0
    %1067 = vmatpush1.msra.mxu0 0.0
    %1068 = vmatprep.subr.mxu0 0.0
    %1069 = vmatpush1.msra.mxu0 0.0
    %1070 = vmatprep.subr.mxu0 0.0
    %1071 = vmatpush1.msra.mxu0 0.0
    %1072 = vmatprep.subr.mxu0 0.0
    %1073 = vmatpush1.msra.mxu0 0.0
    %1074 = vmatprep.subr.mxu0 0.0
    %1075 = vmatpush1.msra.mxu0 0.0
    %1076 = vmatprep.subr.mxu0 0.0
    %1077 = vmatpush1.msra.mxu0 0.0
    %1078 = vmatprep.subr.mxu0 0.0
    %1079 = vmatpush1.msra.mxu0 0.0
    %1080 = vmatprep.subr.mxu0 0.0
    %1081 = vmatpush1.msra.mxu0 0.0
    %1082 = vmatprep.subr.mxu0 0.0
    %1083 = vmatpush1.msra.mxu0 0.0
    %1084 = vmatprep.subr.mxu0 0.0
    %1085 = vmatpush1.msra.mxu0 0.0
    %1086 = vmatprep.subr.mxu0 0.0
    %1087 = vmatpush1.msra.mxu0 0.0
    %1088 = vmatprep.subr.mxu0 0.0
    %1089 = vmatpush1.msra.mxu0 0.0
    %1090 = vmatprep.subr.mxu0 0.0
    %1091 = vmatpush1.msra.mxu0 0.0
    %1092 = vmatprep.subr.mxu0 0.0
    %1093 = vmatpush1.msra.mxu0 0.0
    %1094 = vmatprep.subr.mxu0 0.0
    %1095 = vmatpush1.msra.mxu0 0.0
    %1096 = vmatprep.subr.mxu0 0.0
    %1097 = vmatpush1.msra.mxu0 0.0
    %1098 = vmatprep.subr.mxu0 0.0
    %1099 = vmatpush1.msra.mxu0 0.0
    %1100 = vmatprep.subr.mxu0 0.0
    %1101 = vmatpush1.msra.mxu0 0.0
    %1102 = vmatprep.subr.mxu0 0.0
    %1103 = vmatpush1.msra.mxu0 0.0
    %1104 = vmatprep.subr.mxu0 0.0
    %1105 = vmatpush1.msra.mxu0 0.0
    %1106 = vmatprep.mubr.f32.mxu0 0.0
    %1107 = vmatmul.mubr.f32.gmra.mrb[0].mxu0 %v690
    %v1108 = vpop.f32.mrb[0].mxu0
    %v1109 = vadd.f32 %v687, %v1108
    %v1110 = vpop.f32.mrb[0].mxu0
    %1111 = vdwg.mxu0
    %1112 = vmatprep.subr.mxu0 0.0
    %1113 = vmatpush1.msra.mxu0 %v647
    %1114 = vmatprep.subr.mxu0 0.0
    %1115 = vmatpush1.msra.mxu0 %v648
    %1116 = vmatprep.subr.mxu0 0.0
    %1117 = vmatpush1.msra.mxu0 %v649
    %1118 = vmatprep.subr.mxu0 0.0
    %1119 = vmatpush1.msra.mxu0 %v650
    %1120 = vmatprep.subr.mxu0 0.0
    %1121 = vmatpush1.msra.mxu0 0.0
    %1122 = vmatprep.subr.mxu0 0.0
    %1123 = vmatpush1.msra.mxu0 0.0
    %1124 = vmatprep.subr.mxu0 0.0
    %1125 = vmatpush1.msra.mxu0 0.0
    %1126 = vmatprep.subr.mxu0 0.0
    %1127 = vmatpush1.msra.mxu0 0.0
    %1128 = vmatprep.subr.mxu0 0.0
    %1129 = vmatpush1.msra.mxu0 0.0
    %1130 = vmatprep.subr.mxu0 0.0
    %1131 = vmatpush1.msra.mxu0 0.0
    %1132 = vmatprep.subr.mxu0 0.0
    %1133 = vmatpush1.msra.mxu0 0.0
    %1134 = vmatprep.subr.mxu0 0.0
    %1135 = vmatpush1.msra.mxu0 0.0
    %1136 = vmatprep.subr.mxu0 0.0
    %1137 = vmatpush1.msra.mxu0 0.0
    %1138 = vmatprep.subr.mxu0 0.0
    %1139 = vmatpush1.msra.mxu0 0.0
    %1140 = vmatprep.subr.mxu0 0.0
    %1141 = vmatpush1.msra.mxu0 0.0
    %1142 = vmatprep.subr.mxu0 0.0
    %1143 = vmatpush1.msra.mxu0 0.0
    %1144 = vmatprep.subr.mxu0 0.0
    %1145 = vmatpush1.msra.mxu0 0.0
    %1146 = vmatprep.subr.mxu0 0.0
    %1147 = vmatpush1.msra.mxu0 0.0
    %1148 = vmatprep.subr.mxu0 0.0
    %1149 = vmatpush1.msra.mxu0 0.0
    %1150 = vmatprep.subr.mxu0 0.0
    %1151 = vmatpush1.msra.mxu0 0.0
    %1152 = vmatprep.subr.mxu0 0.0
    %1153 = vmatpush1.msra.mxu0 0.0
    %1154 = vmatprep.subr.mxu0 0.0
    %1155 = vmatpush1.msra.mxu0 0.0
    %1156 = vmatprep.subr.mxu0 0.0
    %1157 = vmatpush1.msra.mxu0 0.0
    %1158 = vmatprep.subr.mxu0 0.0
    %1159 = vmatpush1.msra.mxu0 0.0
    %1160 = vmatprep.subr.mxu0 0.0
    %1161 = vmatpush1.msra.mxu0 0.0
    %1162 = vmatprep.subr.mxu0 0.0
    %1163 = vmatpush1.msra.mxu0 0.0
    %1164 = vmatprep.subr.mxu0 0.0
    %1165 = vmatpush1.msra.mxu0 0.0
    %1166 = vmatprep.subr.mxu0 0.0
    %1167 = vmatpush1.msra.mxu0 0.0
    %1168 = vmatprep.subr.mxu0 0.0
    %1169 = vmatpush1.msra.mxu0 0.0
    %1170 = vmatprep.subr.mxu0 0.0
    %1171 = vmatpush1.msra.mxu0 0.0
    %1172 = vmatprep.subr.mxu0 0.0
    %1173 = vmatpush1.msra.mxu0 0.0
    %1174 = vmatprep.subr.mxu0 0.0
    %1175 = vmatpush1.msra.mxu0 0.0
    %1176 = vmatprep.mubr.f32.mxu0 0.0
    %1177 = vmatmul.mubr.f32.gmra.mrb[0].mxu0 %v690
    %v1178 = vpop.f32.mrb[0].mxu0
    %v1179 = vadd.f32 %v687, %v1178
    %v1180 = vpop.f32.mrb[0].mxu0
    %1181 = vdwg.mxu0
    %1182 = vmatprep.subr.mxu0 0.0
    %1183 = vmatpush1.msra.mxu0 %v651
    %1184 = vmatprep.subr.mxu0 0.0
    %1185 = vmatpush1.msra.mxu0 %v652
    %1186 = vmatprep.subr.mxu0 0.0
    %1187 = vmatpush1.msra.mxu0 %v653
    %1188 = vmatprep.subr.mxu0 0.0
    %1189 = vmatpush1.msra.mxu0 %v654
    %1190 = vmatprep.subr.mxu0 0.0
    %1191 = vmatpush1.msra.mxu0 0.0
    %1192 = vmatprep.subr.mxu0 0.0
    %1193 = vmatpush1.msra.mxu0 0.0
    %1194 = vmatprep.subr.mxu0 0.0
    %1195 = vmatpush1.msra.mxu0 0.0
    %1196 = vmatprep.subr.mxu0 0.0
    %1197 = vmatpush1.msra.mxu0 0.0
    %1198 = vmatprep.subr.mxu0 0.0
    %1199 = vmatpush1.msra.mxu0 0.0
    %1200 = vmatprep.subr.mxu0 0.0
    %1201 = vmatpush1.msra.mxu0 0.0
    %1202 = vmatprep.subr.mxu0 0.0
    %1203 = vmatpush1.msra.mxu0 0.0
    %1204 = vmatprep.subr.mxu0 0.0
    %1205 = vmatpush1.msra.mxu0 0.0
    %1206 = vmatprep.subr.mxu0 0.0
    %1207 = vmatpush1.msra.mxu0 0.0
    %1208 = vmatprep.subr.mxu0 0.0
    %1209 = vmatpush1.msra.mxu0 0.0
    %1210 = vmatprep.subr.mxu0 0.0
    %1211 = vmatpush1.msra.mxu0 0.0
    %1212 = vmatprep.subr.mxu0 0.0
    %1213 = vmatpush1.msra.mxu0 0.0
    %1214 = vmatprep.subr.mxu0 0.0
    %1215 = vmatpush1.msra.mxu0 0.0
    %1216 = vmatprep.subr.mxu0 0.0
    %1217 = vmatpush1.msra.mxu0 0.0
    %1218 = vmatprep.subr.mxu0 0.0
    %1219 = vmatpush1.msra.mxu0 0.0
    %1220 = vmatprep.subr.mxu0 0.0
    %1221 = vmatpush1.msra.mxu0 0.0
    %1222 = vmatprep.subr.mxu0 0.0
    %1223 = vmatpush1.msra.mxu0 0.0
    %1224 = vmatprep.subr.mxu0 0.0
    %1225 = vmatpush1.msra.mxu0 0.0
    %1226 = vmatprep.subr.mxu0 0.0
    %1227 = vmatpush1.msra.mxu0 0.0
    %1228 = vmatprep.subr.mxu0 0.0
    %1229 = vmatpush1.msra.mxu0 0.0
    %1230 = vmatprep.subr.mxu0 0.0
    %1231 = vmatpush1.msra.mxu0 0.0
    %1232 = vmatprep.subr.mxu0 0.0
    %1233 = vmatpush1.msra.mxu0 0.0
    %1234 = vmatprep.subr.mxu0 0.0
    %1235 = vmatpush1.msra.mxu0 0.0
    %1236 = vmatprep.subr.mxu0 0.0
    %1237 = vmatpush1.msra.mxu0 0.0
    %1238 = vmatprep.subr.mxu0 0.0
    %1239 = vmatpush1.msra.mxu0 0.0
    %1240 = vmatprep.subr.mxu0 0.0
    %1241 = vmatpush1.msra.mxu0 0.0
    %1242 = vmatprep.subr.mxu0 0.0
    %1243 = vmatpush1.msra.mxu0 0.0
    %1244 = vmatprep.subr.mxu0 0.0
    %1245 = vmatpush1.msra.mxu0 0.0
    %1246 = vmatprep.mubr.f32.mxu0 0.0
    %1247 = vmatmul.mubr.f32.gmra.mrb[0].mxu0 %v690
    %v1248 = vpop.f32.mrb[0].mxu0
    %v1249 = vadd.f32 %v687, %v1248
    %v1250 = vpop.f32.mrb[0].mxu0
    %1251 = vdwg.mxu0
    %1252 = vmatprep.subr.mxu0 0.0
    %1253 = vmatpush1.msra.mxu0 %v655
    %1254 = vmatprep.subr.mxu0 0.0
    %1255 = vmatpush1.msra.mxu0 %v656
    %1256 = vmatprep.subr.mxu0 0.0
    %1257 = vmatpush1.msra.mxu0 %v657
    %1258 = vmatprep.subr.mxu0 0.0
    %1259 = vmatpush1.msra.mxu0 %v658
    %1260 = vmatprep.subr.mxu0 0.0
    %1261 = vmatpush1.msra.mxu0 0.0
    %1262 = vmatprep.subr.mxu0 0.0
    %1263 = vmatpush1.msra.mxu0 0.0
    %1264 = vmatprep.subr.mxu0 0.0
    %1265 = vmatpush1.msra.mxu0 0.0
    %1266 = vmatprep.subr.mxu0 0.0
    %1267 = vmatpush1.msra.mxu0 0.0
    %1268 = vmatprep.subr.mxu0 0.0
    %1269 = vmatpush1.msra.mxu0 0.0
    %1270 = vmatprep.subr.mxu0 0.0
    %1271 = vmatpush1.msra.mxu0 0.0
    %1272 = vmatprep.subr.mxu0 0.0
    %1273 = vmatpush1.msra.mxu0 0.0
    %1274 = vmatprep.subr.mxu0 0.0
    %1275 = vmatpush1.msra.mxu0 0.0
    %1276 = vmatprep.subr.mxu0 0.0
    %1277 = vmatpush1.msra.mxu0 0.0
    %1278 = vmatprep.subr.mxu0 0.0
    %1279 = vmatpush1.msra.mxu0 0.0
    %1280 = vmatprep.subr.mxu0 0.0
    %1281 = vmatpush1.msra.mxu0 0.0
    %1282 = vmatprep.subr.mxu0 0.0
    %1283 = vmatpush1.msra.mxu0 0.0
    %1284 = vmatprep.subr.mxu0 0.0
    %1285 = vmatpush1.msra.mxu0 0.0
    %1286 = vmatprep.subr.mxu0 0.0
    %1287 = vmatpush1.msra.mxu0 0.0
    %1288 = vmatprep.subr.mxu0 0.0
    %1289 = vmatpush1.msra.mxu0 0.0
    %1290 = vmatprep.subr.mxu0 0.0
    %1291 = vmatpush1.msra.mxu0 0.0
    %1292 = vmatprep.subr.mxu0 0.0
    %1293 = vmatpush1.msra.mxu0 0.0
    %1294 = vmatprep.subr.mxu0 0.0
    %1295 = vmatpush1.msra.mxu0 0.0
    %1296 = vmatprep.subr.mxu0 0.0
    %1297 = vmatpush1.msra.mxu0 0.0
    %1298 = vmatprep.subr.mxu0 0.0
    %1299 = vmatpush1.msra.mxu0 0.0
    %1300 = vmatprep.subr.mxu0 0.0
    %1301 = vmatpush1.msra.mxu0 0.0
    %1302 = vmatprep.subr.mxu0 0.0
    %1303 = vmatpush1.msra.mxu0 0.0
    %1304 = vmatprep.subr.mxu0 0.0
    %1305 = vmatpush1.msra.mxu0 0.0
    %1306 = vmatprep.subr.mxu0 0.0
    %1307 = vmatpush1.msra.mxu0 0.0
    %1308 = vmatprep.subr.mxu0 0.0
    %1309 = vmatpush1.msra.mxu0 0.0
    %1310 = vmatprep.subr.mxu0 0.0
    %1311 = vmatpush1.msra.mxu0 0.0
    %1312 = vmatprep.subr.mxu0 0.0
    %1313 = vmatpush1.msra.mxu0 0.0
    %1314 = vmatprep.subr.mxu0 0.0
    %1315 = vmatpush1.msra.mxu0 0.0
    %1316 = vmatprep.mubr.f32.mxu0 0.0
    %1317 = vmatmul.mubr.f32.gmra.mrb[0].mxu0 %v690
    %v1318 = vpop.f32.mrb[0].mxu0
    %v1319 = vadd.f32 %v687, %v1318
    %v1320 = vpop.f32.mrb[0].mxu0
    %1321 = vdwg.mxu0
    %1322 = vmatprep.subr.mxu0 0.0
    %1323 = vmatpush1.msra.mxu0 %v659
    %1324 = vmatprep.subr.mxu0 0.0
    %1325 = vmatpush1.msra.mxu0 %v660
    %1326 = vmatprep.subr.mxu0 0.0
    %1327 = vmatpush1.msra.mxu0 %v661
    %1328 = vmatprep.subr.mxu0 0.0
    %1329 = vmatpush1.msra.mxu0 %v662
    %1330 = vmatprep.subr.mxu0 0.0
    %1331 = vmatpush1.msra.mxu0 0.0
    %1332 = vmatprep.subr.mxu0 0.0
    %1333 = vmatpush1.msra.mxu0 0.0
    %1334 = vmatprep.subr.mxu0 0.0
    %1335 = vmatpush1.msra.mxu0 0.0
    %1336 = vmatprep.subr.mxu0 0.0
    %1337 = vmatpush1.msra.mxu0 0.0
    %1338 = vmatprep.subr.mxu0 0.0
    %1339 = vmatpush1.msra.mxu0 0.0
    %1340 = vmatprep.subr.mxu0 0.0
    %1341 = vmatpush1.msra.mxu0 0.0
    %1342 = vmatprep.subr.mxu0 0.0
    %1343 = vmatpush1.msra.mxu0 0.0
    %1344 = vmatprep.subr.mxu0 0.0
    %1345 = vmatpush1.msra.mxu0 0.0
    %1346 = vmatprep.subr.mxu0 0.0
    %1347 = vmatpush1.msra.mxu0 0.0
    %1348 = vmatprep.subr.mxu0 0.0
    %1349 = vmatpush1.msra.mxu0 0.0
    %1350 = vmatprep.subr.mxu0 0.0
    %1351 = vmatpush1.msra.mxu0 0.0
    %1352 = vmatprep.subr.mxu0 0.0
    %1353 = vmatpush1.msra.mxu0 0.0
    %1354 = vmatprep.subr.mxu0 0.0
    %1355 = vmatpush1.msra.mxu0 0.0
    %1356 = vmatprep.subr.mxu0 0.0
    %1357 = vmatpush1.msra.mxu0 0.0
    %1358 = vmatprep.subr.mxu0 0.0
    %1359 = vmatpush1.msra.mxu0 0.0
    %1360 = vmatprep.subr.mxu0 0.0
    %1361 = vmatpush1.msra.mxu0 0.0
    %1362 = vmatprep.subr.mxu0 0.0
    %1363 = vmatpush1.msra.mxu0 0.0
    %1364 = vmatprep.subr.mxu0 0.0
    %1365 = vmatpush1.msra.mxu0 0.0
    %1366 = vmatprep.subr.mxu0 0.0
    %1367 = vmatpush1.msra.mxu0 0.0
    %1368 = vmatprep.subr.mxu0 0.0
    %1369 = vmatpush1.msra.mxu0 0.0
    %1370 = vmatprep.subr.mxu0 0.0
    %1371 = vmatpush1.msra.mxu0 0.0
    %1372 = vmatprep.subr.mxu0 0.0
    %1373 = vmatpush1.msra.mxu0 0.0
    %1374 = vmatprep.subr.mxu0 0.0
    %1375 = vmatpush1.msra.mxu0 0.0
    %1376 = vmatprep.subr.mxu0 0.0
    %1377 = vmatpush1.msra.mxu0 0.0
    %1378 = vmatprep.subr.mxu0 0.0
    %1379 = vmatpush1.msra.mxu0 0.0
    %1380 = vmatprep.subr.mxu0 0.0
    %1381 = vmatpush1.msra.mxu0 0.0
    %1382 = vmatprep.subr.mxu0 0.0
    %1383 = vmatpush1.msra.mxu0 0.0
    %1384 = vmatprep.subr.mxu0 0.0
    %1385 = vmatpush1.msra.mxu0 0.0
    %1386 = vmatprep.mubr.f32.mxu0 0.0
    %1387 = vmatmul.mubr.f32.gmra.mrb[0].mxu0 %v690
    %v1388 = vpop.f32.mrb[0].mxu0
    %v1389 = vadd.f32 %v687, %v1388
    %v1390 = vpop.f32.mrb[0].mxu0
    %1391 = vdwg.mxu0
    %1392 = vmatprep.subr.mxu0 0.0
    %1393 = vmatpush1.msra.mxu0 %v663
    %1394 = vmatprep.subr.mxu0 0.0
    %1395 = vmatpush1.msra.mxu0 %v664
    %1396 = vmatprep.subr.mxu0 0.0
    %1397 = vmatpush1.msra.mxu0 %v665
    %1398 = vmatprep.subr.mxu0 0.0
    %1399 = vmatpush1.msra.mxu0 %v666
    %1400 = vmatprep.subr.mxu0 0.0
    %1401 = vmatpush1.msra.mxu0 0.0
    %1402 = vmatprep.subr.mxu0 0.0
    %1403 = vmatpush1.msra.mxu0 0.0
    %1404 = vmatprep.subr.mxu0 0.0
    %1405 = vmatpush1.msra.mxu0 0.0
    %1406 = vmatprep.subr.mxu0 0.0
    %1407 = vmatpush1.msra.mxu0 0.0
    %1408 = vmatprep.subr.mxu0 0.0
    %1409 = vmatpush1.msra.mxu0 0.0
    %1410 = vmatprep.subr.mxu0 0.0
    %1411 = vmatpush1.msra.mxu0 0.0
    %1412 = vmatprep.subr.mxu0 0.0
    %1413 = vmatpush1.msra.mxu0 0.0
    %1414 = vmatprep.subr.mxu0 0.0
    %1415 = vmatpush1.msra.mxu0 0.0
    %1416 = vmatprep.subr.mxu0 0.0
    %1417 = vmatpush1.msra.mxu0 0.0
    %1418 = vmatprep.subr.mxu0 0.0
    %1419 = vmatpush1.msra.mxu0 0.0
    %1420 = vmatprep.subr.mxu0 0.0
    %1421 = vmatpush1.msra.mxu0 0.0
    %1422 = vmatprep.subr.mxu0 0.0
    %1423 = vmatpush1.msra.mxu0 0.0
    %1424 = vmatprep.subr.mxu0 0.0
    %1425 = vmatpush1.msra.mxu0 0.0
    %1426 = vmatprep.subr.mxu0 0.0
    %1427 = vmatpush1.msra.mxu0 0.0
    %1428 = vmatprep.subr.mxu0 0.0
    %1429 = vmatpush1.msra.mxu0 0.0
    %1430 = vmatprep.subr.mxu0 0.0
    %1431 = vmatpush1.msra.mxu0 0.0
    %1432 = vmatprep.subr.mxu0 0.0
    %1433 = vmatpush1.msra.mxu0 0.0
    %1434 = vmatprep.subr.mxu0 0.0
    %1435 = vmatpush1.msra.mxu0 0.0
    %1436 = vmatprep.subr.mxu0 0.0
    %1437 = vmatpush1.msra.mxu0 0.0
    %1438 = vmatprep.subr.mxu0 0.0
    %1439 = vmatpush1.msra.mxu0 0.0
    %1440 = vmatprep.subr.mxu0 0.0
    %1441 = vmatpush1.msra.mxu0 0.0
    %1442 = vmatprep.subr.mxu0 0.0
    %1443 = vmatpush1.msra.mxu0 0.0
    %1444 = vmatprep.subr.mxu0 0.0
    %1445 = vmatpush1.msra.mxu0 0.0
    %1446 = vmatprep.subr.mxu0 0.0
    %1447 = vmatpush1.msra.mxu0 0.0
    %1448 = vmatprep.subr.mxu0 0.0
    %1449 = vmatpush1.msra.mxu0 0.0
    %1450 = vmatprep.subr.mxu0 0.0
    %1451 = vmatpush1.msra.mxu0 0.0
    %1452 = vmatprep.subr.mxu0 0.0
    %1453 = vmatpush1.msra.mxu0 0.0
    %1454 = vmatprep.subr.mxu0 0.0
    %1455 = vmatpush1.msra.mxu0 0.0
    %1456 = vmatprep.mubr.f32.mxu0 0.0
    %1457 = vmatmul.mubr.f32.gmra.mrb[0].mxu0 %v690
    %v1458 = vpop.f32.mrb[0].mxu0
    %v1459 = vadd.f32 %v687, %v1458
    %v1460 = vpop.f32.mrb[0].mxu0
    %1461 = vdwg.mxu0
    %1462 = vmatprep.subr.mxu0 0.0
    %1463 = vmatpush1.msra.mxu0 %v667
    %1464 = vmatprep.subr.mxu0 0.0
    %1465 = vmatpush1.msra.mxu0 %v668
    %1466 = vmatprep.subr.mxu0 0.0
    %1467 = vmatpush1.msra.mxu0 %v669
    %1468 = vmatprep.subr.mxu0 0.0
    %1469 = vmatpush1.msra.mxu0 %v670
    %1470 = vmatprep.subr.mxu0 0.0
    %1471 = vmatpush1.msra.mxu0 0.0
    %1472 = vmatprep.subr.mxu0 0.0
    %1473 = vmatpush1.msra.mxu0 0.0
    %1474 = vmatprep.subr.mxu0 0.0
    %1475 = vmatpush1.msra.mxu0 0.0
    %1476 = vmatprep.subr.mxu0 0.0
    %1477 = vmatpush1.msra.mxu0 0.0
    %1478 = vmatprep.subr.mxu0 0.0
    %1479 = vmatpush1.msra.mxu0 0.0
    %1480 = vmatprep.subr.mxu0 0.0
    %1481 = vmatpush1.msra.mxu0 0.0
    %1482 = vmatprep.subr.mxu0 0.0
    %1483 = vmatpush1.msra.mxu0 0.0
    %1484 = vmatprep.subr.mxu0 0.0
    %1485 = vmatpush1.msra.mxu0 0.0
    %1486 = vmatprep.subr.mxu0 0.0
    %1487 = vmatpush1.msra.mxu0 0.0
    %1488 = vmatprep.subr.mxu0 0.0
    %1489 = vmatpush1.msra.mxu0 0.0
    %1490 = vmatprep.subr.mxu0 0.0
    %1491 = vmatpush1.msra.mxu0 0.0
    %1492 = vmatprep.subr.mxu0 0.0
    %1493 = vmatpush1.msra.mxu0 0.0
    %1494 = vmatprep.subr.mxu0 0.0
    %1495 = vmatpush1.msra.mxu0 0.0
    %1496 = vmatprep.subr.mxu0 0.0
    %1497 = vmatpush1.msra.mxu0 0.0
    %1498 = vmatprep.subr.mxu0 0.0
    %1499 = vmatpush1.msra.mxu0 0.0
    %1500 = vmatprep.subr.mxu0 0.0
    %1501 = vmatpush1.msra.mxu0 0.0
    %1502 = vmatprep.subr.mxu0 0.0
    %1503 = vmatpush1.msra.mxu0 0.0
    %1504 = vmatprep.subr.mxu0 0.0
    %1505 = vmatpush1.msra.mxu0 0.0
    %1506 = vmatprep.subr.mxu0 0.0
    %1507 = vmatpush1.msra.mxu0 0.0
    %1508 = vmatprep.subr.mxu0 0.0
    %1509 = vmatpush1.msra.mxu0 0.0
    %1510 = vmatprep.subr.mxu0 0.0
    %1511 = vmatpush1.msra.mxu0 0.0
    %1512 = vmatprep.subr.mxu0 0.0
    %1513 = vmatpush1.msra.mxu0 0.0
    %1514 = vmatprep.subr.mxu0 0.0
    %1515 = vmatpush1.msra.mxu0 0.0
    %1516 = vmatprep.subr.mxu0 0.0
    %1517 = vmatpush1.msra.mxu0 0.0
    %1518 = vmatprep.subr.mxu0 0.0
    %1519 = vmatpush1.msra.mxu0 0.0
    %1520 = vmatprep.subr.mxu0 0.0
    %1521 = vmatpush1.msra.mxu0 0.0
    %1522 = vmatprep.subr.mxu0 0.0
    %1523 = vmatpush1.msra.mxu0 0.0
    %1524 = vmatprep.subr.mxu0 0.0
    %1525 = vmatpush1.msra.mxu0 0.0
    %1526 = vmatprep.mubr.f32.mxu0 0.0
    %1527 = vmatmul.mubr.f32.gmra.mrb[0].mxu0 %v690
    %v1528 = vpop.f32.mrb[0].mxu0
    %v1529 = vadd.f32 %v687, %v1528
    %v1530 = vpop.f32.mrb[0].mxu0
    %1531 = vdwg.mxu0
    %1532 = vmatprep.subr.mxu0 0.0
    %1533 = vmatpush1.msra.mxu0 %v671
    %1534 = vmatprep.subr.mxu0 0.0
    %1535 = vmatpush1.msra.mxu0 %v672
    %1536 = vmatprep.subr.mxu0 0.0
    %1537 = vmatpush1.msra.mxu0 %v673
    %1538 = vmatprep.subr.mxu0 0.0
    %1539 = vmatpush1.msra.mxu0 %v674
    %1540 = vmatprep.subr.mxu0 0.0
    %1541 = vmatpush1.msra.mxu0 0.0
    %1542 = vmatprep.subr.mxu0 0.0
    %1543 = vmatpush1.msra.mxu0 0.0
    %1544 = vmatprep.subr.mxu0 0.0
    %1545 = vmatpush1.msra.mxu0 0.0
    %1546 = vmatprep.subr.mxu0 0.0
    %1547 = vmatpush1.msra.mxu0 0.0
    %1548 = vmatprep.subr.mxu0 0.0
    %1549 = vmatpush1.msra.mxu0 0.0
    %1550 = vmatprep.subr.mxu0 0.0
    %1551 = vmatpush1.msra.mxu0 0.0
    %1552 = vmatprep.subr.mxu0 0.0
    %1553 = vmatpush1.msra.mxu0 0.0
    %1554 = vmatprep.subr.mxu0 0.0
    %1555 = vmatpush1.msra.mxu0 0.0
    %1556 = vmatprep.subr.mxu0 0.0
    %1557 = vmatpush1.msra.mxu0 0.0
    %1558 = vmatprep.subr.mxu0 0.0
    %1559 = vmatpush1.msra.mxu0 0.0
    %1560 = vmatprep.subr.mxu0 0.0
    %1561 = vmatpush1.msra.mxu0 0.0
    %1562 = vmatprep.subr.mxu0 0.0
    %1563 = vmatpush1.msra.mxu0 0.0
    %1564 = vmatprep.subr.mxu0 0.0
    %1565 = vmatpush1.msra.mxu0 0.0
    %1566 = vmatprep.subr.mxu0 0.0
    %1567 = vmatpush1.msra.mxu0 0.0
    %1568 = vmatprep.subr.mxu0 0.0
    %1569 = vmatpush1.msra.mxu0 0.0
    %1570 = vmatprep.subr.mxu0 0.0
    %1571 = vmatpush1.msra.mxu0 0.0
    %1572 = vmatprep.subr.mxu0 0.0
    %1573 = vmatpush1.msra.mxu0 0.0
    %1574 = vmatprep.subr.mxu0 0.0
    %1575 = vmatpush1.msra.mxu0 0.0
    %1576 = vmatprep.subr.mxu0 0.0
    %1577 = vmatpush1.msra.mxu0 0.0
    %1578 = vmatprep.subr.mxu0 0.0
    %1579 = vmatpush1.msra.mxu0 0.0
    %1580 = vmatprep.subr.mxu0 0.0
    %1581 = vmatpush1.msra.mxu0 0.0
    %1582 = vmatprep.subr.mxu0 0.0
    %1583 = vmatpush1.msra.mxu0 0.0
    %1584 = vmatprep.subr.mxu0 0.0
    %1585 = vmatpush1.msra.mxu0 0.0
    %1586 = vmatprep.subr.mxu0 0.0
    %1587 = vmatpush1.msra.mxu0 0.0
    %1588 = vmatprep.subr.mxu0 0.0
    %1589 = vmatpush1.msra.mxu0 0.0
    %1590 = vmatprep.subr.mxu0 0.0
    %1591 = vmatpush1.msra.mxu0 0.0
    %1592 = vmatprep.subr.mxu0 0.0
    %1593 = vmatpush1.msra.mxu0 0.0
    %1594 = vmatprep.subr.mxu0 0.0
    %1595 = vmatpush1.msra.mxu0 0.0
    %1596 = vmatprep.mubr.f32.mxu0 0.0
    %1597 = vmatmul.mubr.f32.gmra.mrb[0].mxu0 %v690
    %v1598 = vpop.f32.mrb[0].mxu0
    %v1599 = vadd.f32 %v687, %v1598
    %v1600 = vpop.f32.mrb[0].mxu0
    %1601 = vdwg.mxu0
    %1602 = vmatprep.subr.mxu0 0.0
    %1603 = vmatpush1.msra.mxu0 %v675
    %1604 = vmatprep.subr.mxu0 0.0
    %1605 = vmatpush1.msra.mxu0 %v676
    %1606 = vmatprep.subr.mxu0 0.0
    %1607 = vmatpush1.msra.mxu0 %v677
    %1608 = vmatprep.subr.mxu0 0.0
    %1609 = vmatpush1.msra.mxu0 %v678
    %1610 = vmatprep.subr.mxu0 0.0
    %1611 = vmatpush1.msra.mxu0 0.0
    %1612 = vmatprep.subr.mxu0 0.0
    %1613 = vmatpush1.msra.mxu0 0.0
    %1614 = vmatprep.subr.mxu0 0.0
    %1615 = vmatpush1.msra.mxu0 0.0
    %1616 = vmatprep.subr.mxu0 0.0
    %1617 = vmatpush1.msra.mxu0 0.0
    %1618 = vmatprep.subr.mxu0 0.0
    %1619 = vmatpush1.msra.mxu0 0.0
    %1620 = vmatprep.subr.mxu0 0.0
    %1621 = vmatpush1.msra.mxu0 0.0
    %1622 = vmatprep.subr.mxu0 0.0
    %1623 = vmatpush1.msra.mxu0 0.0
    %1624 = vmatprep.subr.mxu0 0.0
    %1625 = vmatpush1.msra.mxu0 0.0
    %1626 = vmatprep.subr.mxu0 0.0
    %1627 = vmatpush1.msra.mxu0 0.0
    %1628 = vmatprep.subr.mxu0 0.0
    %1629 = vmatpush1.msra.mxu0 0.0
    %1630 = vmatprep.subr.mxu0 0.0
    %1631 = vmatpush1.msra.mxu0 0.0
    %1632 = vmatprep.subr.mxu0 0.0
    %1633 = vmatpush1.msra.mxu0 0.0
    %1634 = vmatprep.subr.mxu0 0.0
    %1635 = vmatpush1.msra.mxu0 0.0
    %1636 = vmatprep.subr.mxu0 0.0
    %1637 = vmatpush1.msra.mxu0 0.0
    %1638 = vmatprep.subr.mxu0 0.0
    %1639 = vmatpush1.msra.mxu0 0.0
    %1640 = vmatprep.subr.mxu0 0.0
    %1641 = vmatpush1.msra.mxu0 0.0
    %1642 = vmatprep.subr.mxu0 0.0
    %1643 = vmatpush1.msra.mxu0 0.0
    %1644 = vmatprep.subr.mxu0 0.0
    %1645 = vmatpush1.msra.mxu0 0.0
    %1646 = vmatprep.subr.mxu0 0.0
    %1647 = vmatpush1.msra.mxu0 0.0
    %1648 = vmatprep.subr.mxu0 0.0
    %1649 = vmatpush1.msra.mxu0 0.0
    %1650 = vmatprep.subr.mxu0 0.0
    %1651 = vmatpush1.msra.mxu0 0.0
    %1652 = vmatprep.subr.mxu0 0.0
    %1653 = vmatpush1.msra.mxu0 0.0
    %1654 = vmatprep.subr.mxu0 0.0
    %1655 = vmatpush1.msra.mxu0 0.0
    %1656 = vmatprep.subr.mxu0 0.0
    %1657 = vmatpush1.msra.mxu0 0.0
    %1658 = vmatprep.subr.mxu0 0.0
    %1659 = vmatpush1.msra.mxu0 0.0
    %1660 = vmatprep.subr.mxu0 0.0
    %1661 = vmatpush1.msra.mxu0 0.0
    %1662 = vmatprep.subr.mxu0 0.0
    %1663 = vmatpush1.msra.mxu0 0.0
    %1664 = vmatprep.subr.mxu0 0.0
    %1665 = vmatpush1.msra.mxu0 0.0
    %1666 = vmatprep.mubr.f32.mxu0 0.0
    %1667 = vmatmul.mubr.f32.gmra.mrb[0].mxu0 %v690
    %v1668 = vpop.f32.mrb[0].mxu0
    %v1669 = vadd.f32 %v687, %v1668
    %v1670 = vpop.f32.mrb[0].mxu0
    %1671 = vdwg.mxu0
    %1672 = vmatprep.subr.mxu0 0.0
    %1673 = vmatpush1.msra.mxu0 %v679
    %1674 = vmatprep.subr.mxu0 0.0
    %1675 = vmatpush1.msra.mxu0 %v680
    %1676 = vmatprep.subr.mxu0 0.0
    %1677 = vmatpush1.msra.mxu0 %v681
    %1678 = vmatprep.subr.mxu0 0.0
    %1679 = vmatpush1.msra.mxu0 %v682
    %1680 = vmatprep.subr.mxu0 0.0
    %1681 = vmatpush1.msra.mxu0 0.0
    %1682 = vmatprep.subr.mxu0 0.0
    %1683 = vmatpush1.msra.mxu0 0.0
    %1684 = vmatprep.subr.mxu0 0.0
    %1685 = vmatpush1.msra.mxu0 0.0
    %1686 = vmatprep.subr.mxu0 0.0
    %1687 = vmatpush1.msra.mxu0 0.0
    %1688 = vmatprep.subr.mxu0 0.0
    %1689 = vmatpush1.msra.mxu0 0.0
    %1690 = vmatprep.subr.mxu0 0.0
    %1691 = vmatpush1.msra.mxu0 0.0
    %1692 = vmatprep.subr.mxu0 0.0
    %1693 = vmatpush1.msra.mxu0 0.0
    %1694 = vmatprep.subr.mxu0 0.0
    %1695 = vmatpush1.msra.mxu0 0.0
    %1696 = vmatprep.subr.mxu0 0.0
    %1697 = vmatpush1.msra.mxu0 0.0
    %1698 = vmatprep.subr.mxu0 0.0
    %1699 = vmatpush1.msra.mxu0 0.0
    %1700 = vmatprep.subr.mxu0 0.0
    %1701 = vmatpush1.msra.mxu0 0.0
    %1702 = vmatprep.subr.mxu0 0.0
    %1703 = vmatpush1.msra.mxu0 0.0
    %1704 = vmatprep.subr.mxu0 0.0
    %1705 = vmatpush1.msra.mxu0 0.0
    %1706 = vmatprep.subr.mxu0 0.0
    %1707 = vmatpush1.msra.mxu0 0.0
    %1708 = vmatprep.subr.mxu0 0.0
    %1709 = vmatpush1.msra.mxu0 0.0
    %1710 = vmatprep.subr.mxu0 0.0
    %1711 = vmatpush1.msra.mxu0 0.0
    %1712 = vmatprep.subr.mxu0 0.0
    %1713 = vmatpush1.msra.mxu0 0.0
    %1714 = vmatprep.subr.mxu0 0.0
    %1715 = vmatpush1.msra.mxu0 0.0
    %1716 = vmatprep.subr.mxu0 0.0
    %1717 = vmatpush1.msra.mxu0 0.0
    %1718 = vmatprep.subr.mxu0 0.0
    %1719 = vmatpush1.msra.mxu0 0.0
    %1720 = vmatprep.subr.mxu0 0.0
    %1721 = vmatpush1.msra.mxu0 0.0
    %1722 = vmatprep.subr.mxu0 0.0
    %1723 = vmatpush1.msra.mxu0 0.0
    %1724 = vmatprep.subr.mxu0 0.0
    %1725 = vmatpush1.msra.mxu0 0.0
    %1726 = vmatprep.subr.mxu0 0.0
    %1727 = vmatpush1.msra.mxu0 0.0
    %1728 = vmatprep.subr.mxu0 0.0
    %1729 = vmatpush1.msra.mxu0 0.0
    %1730 = vmatprep.subr.mxu0 0.0
    %1731 = vmatpush1.msra.mxu0 0.0
    %1732 = vmatprep.subr.mxu0 0.0
    %1733 = vmatpush1.msra.mxu0 0.0
    %1734 = vmatprep.subr.mxu0 0.0
    %1735 = vmatpush1.msra.mxu0 0.0
    %1736 = vmatprep.mubr.f32.mxu0 0.0
    %1737 = vmatmul.mubr.f32.gmra.mrb[0].mxu0 %v690
    %v1738 = vpop.f32.mrb[0].mxu0
    %v1739 = vadd.f32 %v687, %v1738
    %v1740 = vpop.f32.mrb[0].mxu0
    %1741 = vdwg.mxu0
    %1742 = vmatprep.subr.mxu0 0.0
    %1743 = vmatpush1.msra.mxu0 %v683
    %1744 = vmatprep.subr.mxu0 0.0
    %1745 = vmatpush1.msra.mxu0 %v684
    %1746 = vmatprep.subr.mxu0 0.0
    %1747 = vmatpush1.msra.mxu0 %v685
    %1748 = vmatprep.subr.mxu0 0.0
    %1749 = vmatpush1.msra.mxu0 %v686
    %1750 = vmatprep.subr.mxu0 0.0
    %1751 = vmatpush1.msra.mxu0 0.0
    %1752 = vmatprep.subr.mxu0 0.0
    %1753 = vmatpush1.msra.mxu0 0.0
    %1754 = vmatprep.subr.mxu0 0.0
    %1755 = vmatpush1.msra.mxu0 0.0
    %1756 = vmatprep.subr.mxu0 0.0
    %1757 = vmatpush1.msra.mxu0 0.0
    %1758 = vmatprep.subr.mxu0 0.0
    %1759 = vmatpush1.msra.mxu0 0.0
    %1760 = vmatprep.subr.mxu0 0.0
    %1761 = vmatpush1.msra.mxu0 0.0
    %1762 = vmatprep.subr.mxu0 0.0
    %1763 = vmatpush1.msra.mxu0 0.0
    %1764 = vmatprep.subr.mxu0 0.0
    %1765 = vmatpush1.msra.mxu0 0.0
    %1766 = vmatprep.subr.mxu0 0.0
    %1767 = vmatpush1.msra.mxu0 0.0
    %1768 = vmatprep.subr.mxu0 0.0
    %1769 = vmatpush1.msra.mxu0 0.0
    %1770 = vmatprep.subr.mxu0 0.0
    %1771 = vmatpush1.msra.mxu0 0.0
    %1772 = vmatprep.subr.mxu0 0.0
    %1773 = vmatpush1.msra.mxu0 0.0
    %1774 = vmatprep.subr.mxu0 0.0
    %1775 = vmatpush1.msra.mxu0 0.0
    %1776 = vmatprep.subr.mxu0 0.0
    %1777 = vmatpush1.msra.mxu0 0.0
    %1778 = vmatprep.subr.mxu0 0.0
    %1779 = vmatpush1.msra.mxu0 0.0
    %1780 = vmatprep.subr.mxu0 0.0
    %1781 = vmatpush1.msra.mxu0 0.0
    %1782 = vmatprep.subr.mxu0 0.0
    %1783 = vmatpush1.msra.mxu0 0.0
    %1784 = vmatprep.subr.mxu0 0.0
    %1785 = vmatpush1.msra.mxu0 0.0
    %1786 = vmatprep.subr.mxu0 0.0
    %1787 = vmatpush1.msra.mxu0 0.0
    %1788 = vmatprep.subr.mxu0 0.0
    %1789 = vmatpush1.msra.mxu0 0.0
    %1790 = vmatprep.subr.mxu0 0.0
    %1791 = vmatpush1.msra.mxu0 0.0
    %1792 = vmatprep.subr.mxu0 0.0
    %1793 = vmatpush1.msra.mxu0 0.0
    %1794 = vmatprep.subr.mxu0 0.0
    %1795 = vmatpush1.msra.mxu0 0.0
    %1796 = vmatprep.subr.mxu0 0.0
    %1797 = vmatpush1.msra.mxu0 0.0
    %1798 = vmatprep.subr.mxu0 0.0
    %1799 = vmatpush1.msra.mxu0 0.0
    %1800 = vmatprep.subr.mxu0 0.0
    %1801 = vmatpush1.msra.mxu0 0.0
    %1802 = vmatprep.subr.mxu0 0.0
    %1803 = vmatpush1.msra.mxu0 0.0
    %1804 = vmatprep.subr.mxu0 0.0
    %1805 = vmatpush1.msra.mxu0 0.0
    %1806 = vmatprep.mubr.f32.mxu0 0.0
    %1807 = vmatmul.mubr.f32.gmra.mrb[0].mxu0 %v690
    %v1808 = vpop.f32.mrb[0].mxu0
    %v1809 = vadd.f32 %v687, %v1808
    %v1810 = vpop.f32.mrb[0].mxu0
    %1811 = vdwg.mxu0
    %v1812 = vmax.f32 %v759, 0.0
    %v1813 = vmax.f32 %v829, 0.0
    %v1814 = vmax.f32 %v899, 0.0
    %v1815 = vmax.f32 %v969, 0.0
    %v1816 = vmax.f32 %v1039, 0.0
    %v1817 = vmax.f32 %v1109, 0.0
    %v1818 = vmax.f32 %v1179, 0.0
    %v1819 = vmax.f32 %v1249, 0.0
    %v1820 = vmax.f32 %v1319, 0.0
    %v1821 = vmax.f32 %v1389, 0.0
    %v1822 = vmax.f32 %v1459, 0.0
    %v1823 = vmax.f32 %v1529, 0.0
    %v1824 = vmax.f32 %v1599, 0.0
    %v1825 = vmax.f32 %v1669, 0.0
    %v1826 = vmax.f32 %v1739, 0.0
    %v1827 = vmax.f32 %v1809, 0.0
    %1828 = vst [vmem:[#allocation9] sm:$0xff] %v1812
    %1829 = vst [vmem:[#allocation9 + $0x8] sm:$0xff] %v1813
    %1830 = vst [vmem:[#allocation9 + $0x10] sm:$0xff] %v1814
    %1831 = vst [vmem:[#allocation9 + $0x18] sm:$0xff] %v1815
    %1832 = vst [vmem:[#allocation9 + $0x20] sm:$0xff] %v1816
    %1833 = vst [vmem:[#allocation9 + $0x28] sm:$0xff] %v1817
    %1834 = vst [vmem:[#allocation9 + $0x30] sm:$0xff] %v1818
    %1835 = vst [vmem:[#allocation9 + $0x38] sm:$0xff] %v1819
    %1836 = vst [vmem:[#allocation9 + $0x40] sm:$0xff] %v1820
    %1837 = vst [vmem:[#allocation9 + $0x48] sm:$0xff] %v1821
    %1838 = vst [vmem:[#allocation9 + $0x50] sm:$0xff] %v1822
    %1839 = vst [vmem:[#allocation9 + $0x58] sm:$0xff] %v1823
    %1840 = vst [vmem:[#allocation9 + $0x60] sm:$0xff] %v1824
    %1841 = vst [vmem:[#allocation9 + $0x68] sm:$0xff] %v1825
    %1842 = vst [vmem:[#allocation9 + $0x70] sm:$0xff] %v1826
    %1843 = vst [vmem:[#allocation9 + $0x78] sm:$0xff] %v1827
    // Predicated region
    $region30: #{tpu_custom_call.1} parent=1 // pred_check
      _
    $region31: #{tpu_custom_call.1} parent=1 // pred_check_branch
      %1845 = sbr.rel (0) target = $region33
    $region32: #{tpu_custom_call.1} parent=1 // pred_region
      %s1847 = ssub.s32 2048, 2048
      %1848 = vsyncadd [#allocation5], %s1847
      %s1849 = sshll.u32 [#allocation9], 4
      %s1850 = int_to_ptr.vmem [resolvable:$true] %s1849
      %1855 = dma.vmem_to_hbm [thread:$0]  %s1850, 2048, %s4, [#allocation5], 128, 128, 8
    $region33: #{tpu_custom_call.1} parent=1 // pred_fallthru
      _
    // Predicated region
    $region34: #{tpu_custom_call.1} parent=1 // pred_check
      _
    $region35: #{tpu_custom_call.1} parent=1 // pred_check_branch
      %1857 = sbr.rel (0) target = $region37
    $region36: #{tpu_custom_call.1} parent=1 // pred_region
      %1858 = dma.done [#allocation5], 2048
    $region37: #{tpu_custom_call.1} parent=1 // pred_fallthru
      _
    %1859 = vsyncpa [#allocation4], 1
    %1860 = vsyncpa [#allocation7], 1
    %1861 = vsyncpa [#allocation5], 1

// kernel: tpu_custom_call.1
$region0: #{tpu_custom_call.1}
  #allocation0 [shape = 'u32[]', space=smem, size = 0x4, offset = 0x4, fixed_abs, tag = 'smem constant byte address 0x4 - core index']
  #allocation1 [shape = 'u32[144,128]{1,0:T(1,128)}', space=vmem, size = 0x12000, scoped, tag = 'internal scratch']
  #allocation2 [shape = 'f32[16,32,128]{2,1,0:T(8,128)}', space=vmem, size = 0x40000, scoped, tag = 'scratch operand']
  %s0 = inlined_call_operand.hbm [shape: f32[16,8,128], index: 0, kind: input, shape index: {}]
  %s1 = inlined_call_operand.hbm [shape: f32[3,128,128], index: 1, kind: input, shape index: {}]
  %s2 = inlined_call_operand.hbm [shape: f32[8,32], index: 2, kind: input, shape index: {}]
  %s3 = inlined_call_operand.vmem [shape: f32[1,8,128], index: 3, kind: input, shape index: {}]
  %s4 = inlined_call_operand.hbm [shape: f32[16,8,128], index: 4, kind: output, shape index: {}]
  %s5 = sld [smem:[#allocation0]]
  $region38: #{tpu_custom_call.1} parent=0
    _
  %s7 = ssub.s32 1, %s5
  %s8 = scalar_select 0, %s7, %s5
  $region1: #{tpu_custom_call.1} parent=0
    #allocation3 [shape = 'u8[65536]{0}', space=vmem, size = 0x10000, scoped, tag = 'input window, operand 0, single buffered']
    #allocation4 [shape = 's32[1]{0}', space=sflag, size = 0x4, scoped, tag = 'scoped memory for tpu_custom_call.1']
    #allocation5 [shape = 's32[1]{0}', space=sflag, size = 0x4, scoped, tag = 'scoped memory for tpu_custom_call.1']
    #allocation6 [shape = 'u8[196608]{0}', space=vmem, size = 0x30000, scoped, tag = 'input window, operand 1, single buffered']
    #allocation7 [shape = 's32[1]{0}', space=sflag, size = 0x4, scoped, tag = 'scoped memory for tpu_custom_call.1']
    #allocation8 [shape = 'u8[4096]{0}', space=vmem, size = 0x1000, scoped, tag = 'input window, operand 2, single buffered']
    #allocation9 [shape = 'u8[65536]{0}', space=vmem, size = 0x10000, scoped, tag = 'output window, operand 0, single buffered']
    %9 = vsyncpa [#allocation4], 0
    %10 = vsyncpa [#allocation7], 0
    %11 = vsyncpa [#allocation5], 0
    // Predicated region
    $region2: #{tpu_custom_call.1} parent=1 // pred_check
      _
    $region3: #{tpu_custom_call.1} parent=1 // pred_check_branch
      %13 = sbr.rel (0) target = $region5
    $region4: #{tpu_custom_call.1} parent=1 // pred_region
      %s15 = ssub.s32 2048, 2048
      %16 = vsyncadd [#allocation4], %s15
      %s17 = sshll.u32 [#allocation3], 4
      %s18 = int_to_ptr.vmem [resolvable:$true] %s17
      %23 = dma.hbm_to_vmem [thread:$0]  %s0, 2048, %s18, [#allocation4], 128, 128, 8
    $region5: #{tpu_custom_call.1} parent=1 // pred_fallthru
      _
    // Predicated region
    $region6: #{tpu_custom_call.1} parent=1 // pred_check
      _
    $region7: #{tpu_custom_call.1} parent=1 // pred_check_branch
      %25 = sbr.rel (0) target = $region9
    $region8: #{tpu_custom_call.1} parent=1 // pred_region
      %s27 = ssub.s32 6144, 6144
      %28 = vsyncadd [#allocation7], %s27
      %s29 = sshll.u32 [#allocation6], 4
      %s30 = int_to_ptr.vmem [resolvable:$true] %s29
      %35 = dma.hbm_to_vmem [thread:$0]  %s1, 6144, %s30, [#allocation7], 128, 128, 8
    $region9: #{tpu_custom_call.1} parent=1 // pred_fallthru
      _
    // Predicated region
    $region10: #{tpu_custom_call.1} parent=1 // pred_check
      _
    $region11: #{tpu_custom_call.1} parent=1 // pred_check_branch
      %37 = sbr.rel (0) target = $region13
    $region12: #{tpu_custom_call.1} parent=1 // pred_region
      %s39 = ssub.s32 128, 128
      %40 = vsyncadd [#allocation7], %s39
      %s42 = sshll.u32 [#allocation8], 4
      %s43 = int_to_ptr.vmem [resolvable:$true] %s42
      %45 = dma.hbm_to_vmem [thread:$0]  %s2, 128, %s43, [#allocation7]
    $region13: #{tpu_custom_call.1} parent=1 // pred_fallthru
      _
    // Predicated region
    $region14: #{tpu_custom_call.1} parent=1 // pred_check
      _
    $region15: #{tpu_custom_call.1} parent=1 // pred_check_branch
      %47 = sbr.rel (0) target = $region17
    $region16: #{tpu_custom_call.1} parent=1 // pred_region
      _
    $region17: #{tpu_custom_call.1} parent=1 // pred_fallthru
      _
    // Predicated region
    $region18: #{tpu_custom_call.1} parent=1 // pred_check
      _
    $region19: #{tpu_custom_call.1} parent=1 // pred_check_branch
      %49 = sbr.rel (0) target = $region21
    $region20: #{tpu_custom_call.1} parent=1 // pred_region
      %50 = dma.done [#allocation4], 2048
    $region21: #{tpu_custom_call.1} parent=1 // pred_fallthru
      _
    // Predicated region
    $region22: #{tpu_custom_call.1} parent=1 // pred_check
      _
    $region23: #{tpu_custom_call.1} parent=1 // pred_check_branch
      %52 = sbr.rel (0) target = $region25
    $region24: #{tpu_custom_call.1} parent=1 // pred_region
      %53 = dma.done [#allocation7], 6144
    $region25: #{tpu_custom_call.1} parent=1 // pred_fallthru
      _
    // Predicated region
    $region26: #{tpu_custom_call.1} parent=1 // pred_check
      _
    $region27: #{tpu_custom_call.1} parent=1 // pred_check_branch
      %55 = sbr.rel (0) target = $region29
    $region28: #{tpu_custom_call.1} parent=1 // pred_region
      %56 = dma.done [#allocation7], 128
    $region29: #{tpu_custom_call.1} parent=1 // pred_fallthru
      _
    %v57 = vld [vmem:[#allocation3] sm:$0xff]
    %v58 = vld [vmem:[#allocation3 + $0x8] sm:$0xff]
    %v59 = vld [vmem:[#allocation3 + $0x10] sm:$0xff]
    %v60 = vld [vmem:[#allocation3 + $0x18] sm:$0xff]
    %v61 = vld [vmem:[#allocation3 + $0x20] sm:$0xff]
    %v62 = vld [vmem:[#allocation3 + $0x28] sm:$0xff]
    %v63 = vld [vmem:[#allocation3 + $0x30] sm:$0xff]
    %v64 = vld [vmem:[#allocation3 + $0x38] sm:$0xff]
    %v65 = vld [vmem:[#allocation3 + $0x40] sm:$0xff]
    %v66 = vld [vmem:[#allocation3 + $0x48] sm:$0xff]
    %v67 = vld [vmem:[#allocation3 + $0x50] sm:$0xff]
    %v68 = vld [vmem:[#allocation3 + $0x58] sm:$0xff]
    %v69 = vld [vmem:[#allocation3 + $0x60] sm:$0xff]
    %v70 = vld [vmem:[#allocation3 + $0x68] sm:$0xff]
    %v71 = vld [vmem:[#allocation3 + $0x70] sm:$0xff]
    %v72 = vld [vmem:[#allocation3 + $0x78] sm:$0xff]
    %v73 = vld [vmem:[#allocation6] sm:$0xff]
    %v74 = vld [vmem:[#allocation6 + $0x8] sm:$0xff]
    %v75 = vld [vmem:[#allocation6 + $0x10] sm:$0xff]
    %v76 = vld [vmem:[#allocation6 + $0x18] sm:$0xff]
    %v77 = vld [vmem:[#allocation6 + $0x20] sm:$0xff]
    %v78 = vld [vmem:[#allocation6 + $0x28] sm:$0xff]
    %v79 = vld [vmem:[#allocation6 + $0x30] sm:$0xff]
    %v80 = vld [vmem:[#allocation6 + $0x38] sm:$0xff]
    %v81 = vld [vmem:[#allocation6 + $0x40] sm:$0xff]
    %v82 = vld [vmem:[#allocation6 + $0x48] sm:$0xff]
    %v83 = vld [vmem:[#allocation6 + $0x50] sm:$0xff]
    %v84 = vld [vmem:[#allocation6 + $0x58] sm:$0xff]
    %v85 = vld [vmem:[#allocation6 + $0x60] sm:$0xff]
    %v86 = vld [vmem:[#allocation6 + $0x68] sm:$0xff]
    %v87 = vld [vmem:[#allocation6 + $0x70] sm:$0xff]
    %v88 = vld [vmem:[#allocation6 + $0x78] sm:$0xff]
    %89 = vmatprep.subr.mxu0 0.0
    %90 = vmatpush1.msra.mxu0 %v73
    %91 = vmatprep.subr.mxu0 0.0
    %92 = vmatpush1.msra.mxu0 %v74
    %93 = vmatprep.subr.mxu0 0.0
    %94 = vmatpush1.msra.mxu0 %v75
    %95 = vmatprep.subr.mxu0 0.0
    %96 = vmatpush1.msra.mxu0 %v76
    %97 = vmatprep.subr.mxu0 0.0
    %98 = vmatpush1.msra.mxu0 %v77
    %99 = vmatprep.subr.mxu0 0.0
    %100 = vmatpush1.msra.mxu0 %v78
    %101 = vmatprep.subr.mxu0 0.0
    %102 = vmatpush1.msra.mxu0 %v79
    %103 = vmatprep.subr.mxu0 0.0
    %104 = vmatpush1.msra.mxu0 %v80
    %105 = vmatprep.subr.mxu0 0.0
    %106 = vmatpush1.msra.mxu0 %v81
    %107 = vmatprep.subr.mxu0 0.0
    %108 = vmatpush1.msra.mxu0 %v82
    %109 = vmatprep.subr.mxu0 0.0
    %110 = vmatpush1.msra.mxu0 %v83
    %111 = vmatprep.subr.mxu0 0.0
    %112 = vmatpush1.msra.mxu0 %v84
    %113 = vmatprep.subr.mxu0 0.0
    %114 = vmatpush1.msra.mxu0 %v85
    %115 = vmatprep.subr.mxu0 0.0
    %116 = vmatpush1.msra.mxu0 %v86
    %117 = vmatprep.subr.mxu0 0.0
    %118 = vmatpush1.msra.mxu0 %v87
    %119 = vmatprep.subr.mxu0 0.0
    %120 = vmatpush1.msra.mxu0 %v88
    %121 = vmatprep.subr.mxu0 0.0
    %122 = vmatpush1.msra.mxu0 0.0
    %123 = vmatprep.subr.mxu0 0.0
    %124 = vmatpush1.msra.mxu0 0.0
    %125 = vmatprep.subr.mxu0 0.0
    %126 = vmatpush1.msra.mxu0 0.0
    %127 = vmatprep.subr.mxu0 0.0
    %128 = vmatpush1.msra.mxu0 0.0
    %129 = vmatprep.subr.mxu0 0.0
    %130 = vmatpush1.msra.mxu0 0.0
    %131 = vmatprep.subr.mxu0 0.0
    %132 = vmatpush1.msra.mxu0 0.0
    %133 = vmatprep.subr.mxu0 0.0
    %134 = vmatpush1.msra.mxu0 0.0
    %135 = vmatprep.subr.mxu0 0.0
    %136 = vmatpush1.msra.mxu0 0.0
    %137 = vmatprep.subr.mxu0 0.0
    %138 = vmatpush1.msra.mxu0 0.0
    %139 = vmatprep.subr.mxu0 0.0
    %140 = vmatpush1.msra.mxu0 0.0
    %141 = vmatprep.subr.mxu0 0.0
    %142 = vmatpush1.msra.mxu0 0.0
    %143 = vmatprep.subr.mxu0 0.0
    %144 = vmatpush1.msra.mxu0 0.0
    %145 = vmatprep.subr.mxu0 0.0
    %146 = vmatpush1.msra.mxu0 0.0
    %147 = vmatprep.subr.mxu0 0.0
    %148 = vmatpush1.msra.mxu0 0.0
    %149 = vmatprep.subr.mxu0 0.0
    %150 = vmatpush1.msra.mxu0 0.0
    %151 = vmatprep.subr.mxu0 0.0
    %152 = vmatpush1.msra.mxu0 0.0
    %153 = vmatprep.mubr.f32.mxu0 0.0
    %154 = vmatmul.mubr.f32.gmra.mrb[0].mxu0 %v57
    %v155 = vpop.f32.mrb[0].mxu0
    %v156 = vadd.f32 0.0, %v155
    %v157 = vpop.f32.mrb[0].mxu0
    %158 = vmatprep.mubr.f32.mxu0 0.0
    %159 = vmatmul.mubr.f32.gmra.mrb[0].mxu0 %v58
    %v160 = vpop.f32.mrb[0].mxu0
    %v161 = vadd.f32 0.0, %v160
    %v162 = vpop.f32.mrb[0].mxu0
    %163 = vmatprep.mubr.f32.mxu0 0.0
    %164 = vmatmul.mubr.f32.gmra.mrb[0].mxu0 %v59
    %v165 = vpop.f32.mrb[0].mxu0
    %v166 = vadd.f32 0.0, %v165
    %v167 = vpop.f32.mrb[0].mxu0
    %168 = vmatprep.mubr.f32.mxu0 0.0
    %169 = vmatmul.mubr.f32.gmra.mrb[0].mxu0 %v60
    %v170 = vpop.f32.mrb[0].mxu0
    %v171 = vadd.f32 0.0, %v170
    %v172 = vpop.f32.mrb[0].mxu0
    %173 = vmatprep.mubr.f32.mxu0 0.0
    %174 = vmatmul.mubr.f32.gmra.mrb[0].mxu0 %v61
    %v175 = vpop.f32.mrb[0].mxu0
    %v176 = vadd.f32 0.0, %v175
    %v177 = vpop.f32.mrb[0].mxu0
    %178 = vmatprep.mubr.f32.mxu0 0.0
    %179 = vmatmul.mubr.f32.gmra.mrb[0].mxu0 %v62
    %v180 = vpop.f32.mrb[0].mxu0
    %v181 = vadd.f32 0.0, %v180
    %v182 = vpop.f32.mrb[0].mxu0
    %183 = vmatprep.mubr.f32.mxu0 0.0
    %184 = vmatmul.mubr.f32.gmra.mrb[0].mxu0 %v63
    %v185 = vpop.f32.mrb[0].mxu0
    %v186 = vadd.f32 0.0, %v185
    %v187 = vpop.f32.mrb[0].mxu0
    %188 = vmatprep.mubr.f32.mxu0 0.0
    %189 = vmatmul.mubr.f32.gmra.mrb[0].mxu0 %v64
    %v190 = vpop.f32.mrb[0].mxu0
    %v191 = vadd.f32 0.0, %v190
    %v192 = vpop.f32.mrb[0].mxu0
    %193 = vmatprep.mubr.f32.mxu0 0.0
    %194 = vmatmul.mubr.f32.gmra.mrb[0].mxu0 %v65
    %v195 = vpop.f32.mrb[0].mxu0
    %v196 = vadd.f32 0.0, %v195
    %v197 = vpop.f32.mrb[0].mxu0
    %198 = vmatprep.mubr.f32.mxu0 0.0
    %199 = vmatmul.mubr.f32.gmra.mrb[0].mxu0 %v66
    %v200 = vpop.f32.mrb[0].mxu0
    %v201 = vadd.f32 0.0, %v200
    %v202 = vpop.f32.mrb[0].mxu0
    %203 = vmatprep.mubr.f32.mxu0 0.0
    %204 = vmatmul.mubr.f32.gmra.mrb[0].mxu0 %v67
    %v205 = vpop.f32.mrb[0].mxu0
    %v206 = vadd.f32 0.0, %v205
    %v207 = vpop.f32.mrb[0].mxu0
    %208 = vmatprep.mubr.f32.mxu0 0.0
    %209 = vmatmul.mubr.f32.gmra.mrb[0].mxu0 %v68
    %v210 = vpop.f32.mrb[0].mxu0
    %v211 = vadd.f32 0.0, %v210
    %v212 = vpop.f32.mrb[0].mxu0
    %213 = vmatprep.mubr.f32.mxu0 0.0
    %214 = vmatmul.mubr.f32.gmra.mrb[0].mxu0 %v69
    %v215 = vpop.f32.mrb[0].mxu0
    %v216 = vadd.f32 0.0, %v215
    %v217 = vpop.f32.mrb[0].mxu0
    %218 = vmatprep.mubr.f32.mxu0 0.0
    %219 = vmatmul.mubr.f32.gmra.mrb[0].mxu0 %v70
    %v220 = vpop.f32.mrb[0].mxu0
    %v221 = vadd.f32 0.0, %v220
    %v222 = vpop.f32.mrb[0].mxu0
    %223 = vmatprep.mubr.f32.mxu0 0.0
    %224 = vmatmul.mubr.f32.gmra.mrb[0].mxu0 %v71
    %v225 = vpop.f32.mrb[0].mxu0
    %v226 = vadd.f32 0.0, %v225
    %v227 = vpop.f32.mrb[0].mxu0
    %228 = vmatprep.mubr.f32.mxu0 0.0
    %229 = vmatmul.mubr.f32.gmra.mrb[0].mxu0 %v72
    %v230 = vpop.f32.mrb[0].mxu0
    %v231 = vadd.f32 0.0, %v230
    %v232 = vpop.f32.mrb[0].mxu0
    %233 = vdwg.mxu0
    %234 = vst [vmem:[#allocation2] sm:$0xff] %v156
    %235 = vst [vmem:[#allocation2 + $0x20] sm:$0xff] %v161
    %236 = vst [vmem:[#allocation2 + $0x40] sm:$0xff] %v166
    %237 = vst [vmem:[#allocation2 + $0x60] sm:$0xff] %v171
    %238 = vst [vmem:[#allocation2 + $0x80] sm:$0xff] %v176
    %239 = vst [vmem:[#allocation2 + $0xa0] sm:$0xff] %v181
    %240 = vst [vmem:[#allocation2 + $0xc0] sm:$0xff] %v186
    %241 = vst [vmem:[#allocation2 + $0xe0] sm:$0xff] %v191
    %242 = vst [vmem:[#allocation2 + $0x100] sm:$0xff] %v196
    %243 = vst [vmem:[#allocation2 + $0x120] sm:$0xff] %v201
    %244 = vst [vmem:[#allocation2 + $0x140] sm:$0xff] %v206
    %245 = vst [vmem:[#allocation2 + $0x160] sm:$0xff] %v211
    %246 = vst [vmem:[#allocation2 + $0x180] sm:$0xff] %v216
    %247 = vst [vmem:[#allocation2 + $0x1a0] sm:$0xff] %v221
    %248 = vst [vmem:[#allocation2 + $0x1c0] sm:$0xff] %v226
    %249 = vst [vmem:[#allocation2 + $0x1e0] sm:$0xff] %v231
    %s250 = scalar_lea.vmem [#allocation6], 128
    %v251 = vld [vmem:[%s250] sm:$0xff]
    %v252 = vld [vmem:[%s250 + $0x8] sm:$0xff]
    %v253 = vld [vmem:[%s250 + $0x10] sm:$0xff]
    %v254 = vld [vmem:[%s250 + $0x18] sm:$0xff]
    %v255 = vld [vmem:[%s250 + $0x20] sm:$0xff]
    %v256 = vld [vmem:[%s250 + $0x28] sm:$0xff]
    %v257 = vld [vmem:[%s250 + $0x30] sm:$0xff]
    %v258 = vld [vmem:[%s250 + $0x38] sm:$0xff]
    %v259 = vld [vmem:[%s250 + $0x40] sm:$0xff]
    %v260 = vld [vmem:[%s250 + $0x48] sm:$0xff]
    %v261 = vld [vmem:[%s250 + $0x50] sm:$0xff]
    %v262 = vld [vmem:[%s250 + $0x58] sm:$0xff]
    %v263 = vld [vmem:[%s250 + $0x60] sm:$0xff]
    %v264 = vld [vmem:[%s250 + $0x68] sm:$0xff]
    %v265 = vld [vmem:[%s250 + $0x70] sm:$0xff]
    %v266 = vld [vmem:[%s250 + $0x78] sm:$0xff]
    %267 = vmatprep.subr.mxu0 0.0
    %268 = vmatpush1.msra.mxu0 %v251
    %269 = vmatprep.subr.mxu0 0.0
    %270 = vmatpush1.msra.mxu0 %v252
    %271 = vmatprep.subr.mxu0 0.0
    %272 = vmatpush1.msra.mxu0 %v253
    %273 = vmatprep.subr.mxu0 0.0
    %274 = vmatpush1.msra.mxu0 %v254
    %275 = vmatprep.subr.mxu0 0.0
    %276 = vmatpush1.msra.mxu0 %v255
    %277 = vmatprep.subr.mxu0 0.0
    %278 = vmatpush1.msra.mxu0 %v256
    %279 = vmatprep.subr.mxu0 0.0
    %280 = vmatpush1.msra.mxu0 %v257
    %281 = vmatprep.subr.mxu0 0.0
    %282 = vmatpush1.msra.mxu0 %v258
    %283 = vmatprep.subr.mxu0 0.0
    %284 = vmatpush1.msra.mxu0 %v259
    %285 = vmatprep.subr.mxu0 0.0
    %286 = vmatpush1.msra.mxu0 %v260
    %287 = vmatprep.subr.mxu0 0.0
    %288 = vmatpush1.msra.mxu0 %v261
    %289 = vmatprep.subr.mxu0 0.0
    %290 = vmatpush1.msra.mxu0 %v262
    %291 = vmatprep.subr.mxu0 0.0
    %292 = vmatpush1.msra.mxu0 %v263
    %293 = vmatprep.subr.mxu0 0.0
    %294 = vmatpush1.msra.mxu0 %v264
    %295 = vmatprep.subr.mxu0 0.0
    %296 = vmatpush1.msra.mxu0 %v265
    %297 = vmatprep.subr.mxu0 0.0
    %298 = vmatpush1.msra.mxu0 %v266
    %299 = vmatprep.subr.mxu0 0.0
    %300 = vmatpush1.msra.mxu0 0.0
    %301 = vmatprep.subr.mxu0 0.0
    %302 = vmatpush1.msra.mxu0 0.0
    %303 = vmatprep.subr.mxu0 0.0
    %304 = vmatpush1.msra.mxu0 0.0
    %305 = vmatprep.subr.mxu0 0.0
    %306 = vmatpush1.msra.mxu0 0.0
    %307 = vmatprep.subr.mxu0 0.0
    %308 = vmatpush1.msra.mxu0 0.0
    %309 = vmatprep.subr.mxu0 0.0
    %310 = vmatpush1.msra.mxu0 0.0
    %311 = vmatprep.subr.mxu0 0.0
    %312 = vmatpush1.msra.mxu0 0.0
    %313 = vmatprep.subr.mxu0 0.0
    %314 = vmatpush1.msra.mxu0 0.0
    %315 = vmatprep.subr.mxu0 0.0
    %316 = vmatpush1.msra.mxu0 0.0
    %317 = vmatprep.subr.mxu0 0.0
    %318 = vmatpush1.msra.mxu0 0.0
    %319 = vmatprep.subr.mxu0 0.0
    %320 = vmatpush1.msra.mxu0 0.0
    %321 = vmatprep.subr.mxu0 0.0
    %322 = vmatpush1.msra.mxu0 0.0
    %323 = vmatprep.subr.mxu0 0.0
    %324 = vmatpush1.msra.mxu0 0.0
    %325 = vmatprep.subr.mxu0 0.0
    %326 = vmatpush1.msra.mxu0 0.0
    %327 = vmatprep.subr.mxu0 0.0
    %328 = vmatpush1.msra.mxu0 0.0
    %329 = vmatprep.subr.mxu0 0.0
    %330 = vmatpush1.msra.mxu0 0.0
    %331 = vmatprep.mubr.f32.mxu0 0.0
    %332 = vmatmul.mubr.f32.gmra.mrb[0].mxu0 %v57
    %v333 = vpop.f32.mrb[0].mxu0
    %v334 = vadd.f32 0.0, %v333
    %v335 = vpop.f32.mrb[0].mxu0
    %336 = vmatprep.mubr.f32.mxu0 0.0
    %337 = vmatmul.mubr.f32.gmra.mrb[0].mxu0 %v58
    %v338 = vpop.f32.mrb[0].mxu0
    %v339 = vadd.f32 0.0, %v338
    %v340 = vpop.f32.mrb[0].mxu0
    %341 = vmatprep.mubr.f32.mxu0 0.0
    %342 = vmatmul.mubr.f32.gmra.mrb[0].mxu0 %v59
    %v343 = vpop.f32.mrb[0].mxu0
    %v344 = vadd.f32 0.0, %v343
    %v345 = vpop.f32.mrb[0].mxu0
    %346 = vmatprep.mubr.f32.mxu0 0.0
    %347 = vmatmul.mubr.f32.gmra.mrb[0].mxu0 %v60
    %v348 = vpop.f32.mrb[0].mxu0
    %v349 = vadd.f32 0.0, %v348
    %v350 = vpop.f32.mrb[0].mxu0
    %351 = vmatprep.mubr.f32.mxu0 0.0
    %352 = vmatmul.mubr.f32.gmra.mrb[0].mxu0 %v61
    %v353 = vpop.f32.mrb[0].mxu0
    %v354 = vadd.f32 0.0, %v353
    %v355 = vpop.f32.mrb[0].mxu0
    %356 = vmatprep.mubr.f32.mxu0 0.0
    %357 = vmatmul.mubr.f32.gmra.mrb[0].mxu0 %v62
    %v358 = vpop.f32.mrb[0].mxu0
    %v359 = vadd.f32 0.0, %v358
    %v360 = vpop.f32.mrb[0].mxu0
    %361 = vmatprep.mubr.f32.mxu0 0.0
    %362 = vmatmul.mubr.f32.gmra.mrb[0].mxu0 %v63
    %v363 = vpop.f32.mrb[0].mxu0
    %v364 = vadd.f32 0.0, %v363
    %v365 = vpop.f32.mrb[0].mxu0
    %366 = vmatprep.mubr.f32.mxu0 0.0
    %367 = vmatmul.mubr.f32.gmra.mrb[0].mxu0 %v64
    %v368 = vpop.f32.mrb[0].mxu0
    %v369 = vadd.f32 0.0, %v368
    %v370 = vpop.f32.mrb[0].mxu0
    %371 = vmatprep.mubr.f32.mxu0 0.0
    %372 = vmatmul.mubr.f32.gmra.mrb[0].mxu0 %v65
    %v373 = vpop.f32.mrb[0].mxu0
    %v374 = vadd.f32 0.0, %v373
    %v375 = vpop.f32.mrb[0].mxu0
    %376 = vmatprep.mubr.f32.mxu0 0.0
    %377 = vmatmul.mubr.f32.gmra.mrb[0].mxu0 %v66
    %v378 = vpop.f32.mrb[0].mxu0
    %v379 = vadd.f32 0.0, %v378
    %v380 = vpop.f32.mrb[0].mxu0
    %381 = vmatprep.mubr.f32.mxu0 0.0
    %382 = vmatmul.mubr.f32.gmra.mrb[0].mxu0 %v67
    %v383 = vpop.f32.mrb[0].mxu0
    %v384 = vadd.f32 0.0, %v383
    %v385 = vpop.f32.mrb[0].mxu0
    %386 = vmatprep.mubr.f32.mxu0 0.0
    %387 = vmatmul.mubr.f32.gmra.mrb[0].mxu0 %v68
    %v388 = vpop.f32.mrb[0].mxu0
    %v389 = vadd.f32 0.0, %v388
    %v390 = vpop.f32.mrb[0].mxu0
    %391 = vmatprep.mubr.f32.mxu0 0.0
    %392 = vmatmul.mubr.f32.gmra.mrb[0].mxu0 %v69
    %v393 = vpop.f32.mrb[0].mxu0
    %v394 = vadd.f32 0.0, %v393
    %v395 = vpop.f32.mrb[0].mxu0
    %396 = vmatprep.mubr.f32.mxu0 0.0
    %397 = vmatmul.mubr.f32.gmra.mrb[0].mxu0 %v70
    %v398 = vpop.f32.mrb[0].mxu0
    %v399 = vadd.f32 0.0, %v398
    %v400 = vpop.f32.mrb[0].mxu0
    %401 = vmatprep.mubr.f32.mxu0 0.0
    %402 = vmatmul.mubr.f32.gmra.mrb[0].mxu0 %v71
    %v403 = vpop.f32.mrb[0].mxu0
    %v404 = vadd.f32 0.0, %v403
    %v405 = vpop.f32.mrb[0].mxu0
    %406 = vmatprep.mubr.f32.mxu0 0.0
    %407 = vmatmul.mubr.f32.gmra.mrb[0].mxu0 %v72
    %v408 = vpop.f32.mrb[0].mxu0
    %v409 = vadd.f32 0.0, %v408
    %v410 = vpop.f32.mrb[0].mxu0
    %411 = vdwg.mxu0
    %412 = vst [vmem:[#allocation2 + $0x8] sm:$0xff] %v334
    %413 = vst [vmem:[#allocation2 + $0x28] sm:$0xff] %v339
    %414 = vst [vmem:[#allocation2 + $0x48] sm:$0xff] %v344
    %415 = vst [vmem:[#allocation2 + $0x68] sm:$0xff] %v349
    %416 = vst [vmem:[#allocation2 + $0x88] sm:$0xff] %v354
    %417 = vst [vmem:[#allocation2 + $0xa8] sm:$0xff] %v359
    %418 = vst [vmem:[#allocation2 + $0xc8] sm:$0xff] %v364
    %419 = vst [vmem:[#allocation2 + $0xe8] sm:$0xff] %v369
    %420 = vst [vmem:[#allocation2 + $0x108] sm:$0xff] %v374
    %421 = vst [vmem:[#allocation2 + $0x128] sm:$0xff] %v379
    %422 = vst [vmem:[#allocation2 + $0x148] sm:$0xff] %v384
    %423 = vst [vmem:[#allocation2 + $0x168] sm:$0xff] %v389
    %424 = vst [vmem:[#allocation2 + $0x188] sm:$0xff] %v394
    %425 = vst [vmem:[#allocation2 + $0x1a8] sm:$0xff] %v399
    %426 = vst [vmem:[#allocation2 + $0x1c8] sm:$0xff] %v404
    %427 = vst [vmem:[#allocation2 + $0x1e8] sm:$0xff] %v409
    %s428 = scalar_lea.vmem [#allocation6], 256
    %v429 = vld [vmem:[%s428] sm:$0xff]
    %v430 = vld [vmem:[%s428 + $0x8] sm:$0xff]
    %v431 = vld [vmem:[%s428 + $0x10] sm:$0xff]
    %v432 = vld [vmem:[%s428 + $0x18] sm:$0xff]
    %v433 = vld [vmem:[%s428 + $0x20] sm:$0xff]
    %v434 = vld [vmem:[%s428 + $0x28] sm:$0xff]
    %v435 = vld [vmem:[%s428 + $0x30] sm:$0xff]
    %v436 = vld [vmem:[%s428 + $0x38] sm:$0xff]
    %v437 = vld [vmem:[%s428 + $0x40] sm:$0xff]
    %v438 = vld [vmem:[%s428 + $0x48] sm:$0xff]
    %v439 = vld [vmem:[%s428 + $0x50] sm:$0xff]
    %v440 = vld [vmem:[%s428 + $0x58] sm:$0xff]
    %v441 = vld [vmem:[%s428 + $0x60] sm:$0xff]
    %v442 = vld [vmem:[%s428 + $0x68] sm:$0xff]
    %v443 = vld [vmem:[%s428 + $0x70] sm:$0xff]
    %v444 = vld [vmem:[%s428 + $0x78] sm:$0xff]
    %445 = vmatprep.subr.mxu0 0.0
    %446 = vmatpush1.msra.mxu0 %v429
    %447 = vmatprep.subr.mxu0 0.0
    %448 = vmatpush1.msra.mxu0 %v430
    %449 = vmatprep.subr.mxu0 0.0
    %450 = vmatpush1.msra.mxu0 %v431
    %451 = vmatprep.subr.mxu0 0.0
    %452 = vmatpush1.msra.mxu0 %v432
    %453 = vmatprep.subr.mxu0 0.0
    %454 = vmatpush1.msra.mxu0 %v433
    %455 = vmatprep.subr.mxu0 0.0
    %456 = vmatpush1.msra.mxu0 %v434
    %457 = vmatprep.subr.mxu0 0.0
    %458 = vmatpush1.msra.mxu0 %v435
    %459 = vmatprep.subr.mxu0 0.0
    %460 = vmatpush1.msra.mxu0 %v436
    %461 = vmatprep.subr.mxu0 0.0
    %462 = vmatpush1.msra.mxu0 %v437
    %463 = vmatprep.subr.mxu0 0.0
    %464 = vmatpush1.msra.mxu0 %v438
    %465 = vmatprep.subr.mxu0 0.0
    %466 = vmatpush1.msra.mxu0 %v439
    %467 = vmatprep.subr.mxu0 0.0
    %468 = vmatpush1.msra.mxu0 %v440
    %469 = vmatprep.subr.mxu0 0.0
    %470 = vmatpush1.msra.mxu0 %v441
    %471 = vmatprep.subr.mxu0 0.0
    %472 = vmatpush1.msra.mxu0 %v442
    %473 = vmatprep.subr.mxu0 0.0
    %474 = vmatpush1.msra.mxu0 %v443
    %475 = vmatprep.subr.mxu0 0.0
    %476 = vmatpush1.msra.mxu0 %v444
    %477 = vmatprep.subr.mxu0 0.0
    %478 = vmatpush1.msra.mxu0 0.0
    %479 = vmatprep.subr.mxu0 0.0
    %480 = vmatpush1.msra.mxu0 0.0
    %481 = vmatprep.subr.mxu0 0.0
    %482 = vmatpush1.msra.mxu0 0.0
    %483 = vmatprep.subr.mxu0 0.0
    %484 = vmatpush1.msra.mxu0 0.0
    %485 = vmatprep.subr.mxu0 0.0
    %486 = vmatpush1.msra.mxu0 0.0
    %487 = vmatprep.subr.mxu0 0.0
    %488 = vmatpush1.msra.mxu0 0.0
    %489 = vmatprep.subr.mxu0 0.0
    %490 = vmatpush1.msra.mxu0 0.0
    %491 = vmatprep.subr.mxu0 0.0
    %492 = vmatpush1.msra.mxu0 0.0
    %493 = vmatprep.subr.mxu0 0.0
    %494 = vmatpush1.msra.mxu0 0.0
    %495 = vmatprep.subr.mxu0 0.0
    %496 = vmatpush1.msra.mxu0 0.0
    %497 = vmatprep.subr.mxu0 0.0
    %498 = vmatpush1.msra.mxu0 0.0
    %499 = vmatprep.subr.mxu0 0.0
    %500 = vmatpush1.msra.mxu0 0.0
    %501 = vmatprep.subr.mxu0 0.0
    %502 = vmatpush1.msra.mxu0 0.0
    %503 = vmatprep.subr.mxu0 0.0
    %504 = vmatpush1.msra.mxu0 0.0
    %505 = vmatprep.subr.mxu0 0.0
    %506 = vmatpush1.msra.mxu0 0.0
    %507 = vmatprep.subr.mxu0 0.0
    %508 = vmatpush1.msra.mxu0 0.0
    %509 = vmatprep.mubr.f32.mxu0 0.0
    %510 = vmatmul.mubr.f32.gmra.mrb[0].mxu0 %v57
    %v511 = vpop.f32.mrb[0].mxu0
    %v512 = vadd.f32 0.0, %v511
    %v513 = vpop.f32.mrb[0].mxu0
    %514 = vmatprep.mubr.f32.mxu0 0.0
    %515 = vmatmul.mubr.f32.gmra.mrb[0].mxu0 %v58
    %v516 = vpop.f32.mrb[0].mxu0
    %v517 = vadd.f32 0.0, %v516
    %v518 = vpop.f32.mrb[0].mxu0
    %519 = vmatprep.mubr.f32.mxu0 0.0
    %520 = vmatmul.mubr.f32.gmra.mrb[0].mxu0 %v59
    %v521 = vpop.f32.mrb[0].mxu0
    %v522 = vadd.f32 0.0, %v521
    %v523 = vpop.f32.mrb[0].mxu0
    %524 = vmatprep.mubr.f32.mxu0 0.0
    %525 = vmatmul.mubr.f32.gmra.mrb[0].mxu0 %v60
    %v526 = vpop.f32.mrb[0].mxu0
    %v527 = vadd.f32 0.0, %v526
    %v528 = vpop.f32.mrb[0].mxu0
    %529 = vmatprep.mubr.f32.mxu0 0.0
    %530 = vmatmul.mubr.f32.gmra.mrb[0].mxu0 %v61
    %v531 = vpop.f32.mrb[0].mxu0
    %v532 = vadd.f32 0.0, %v531
    %v533 = vpop.f32.mrb[0].mxu0
    %534 = vmatprep.mubr.f32.mxu0 0.0
    %535 = vmatmul.mubr.f32.gmra.mrb[0].mxu0 %v62
    %v536 = vpop.f32.mrb[0].mxu0
    %v537 = vadd.f32 0.0, %v536
    %v538 = vpop.f32.mrb[0].mxu0
    %539 = vmatprep.mubr.f32.mxu0 0.0
    %540 = vmatmul.mubr.f32.gmra.mrb[0].mxu0 %v63
    %v541 = vpop.f32.mrb[0].mxu0
    %v542 = vadd.f32 0.0, %v541
    %v543 = vpop.f32.mrb[0].mxu0
    %544 = vmatprep.mubr.f32.mxu0 0.0
    %545 = vmatmul.mubr.f32.gmra.mrb[0].mxu0 %v64
    %v546 = vpop.f32.mrb[0].mxu0
    %v547 = vadd.f32 0.0, %v546
    %v548 = vpop.f32.mrb[0].mxu0
    %549 = vmatprep.mubr.f32.mxu0 0.0
    %550 = vmatmul.mubr.f32.gmra.mrb[0].mxu0 %v65
    %v551 = vpop.f32.mrb[0].mxu0
    %v552 = vadd.f32 0.0, %v551
    %v553 = vpop.f32.mrb[0].mxu0
    %554 = vmatprep.mubr.f32.mxu0 0.0
    %555 = vmatmul.mubr.f32.gmra.mrb[0].mxu0 %v66
    %v556 = vpop.f32.mrb[0].mxu0
    %v557 = vadd.f32 0.0, %v556
    %v558 = vpop.f32.mrb[0].mxu0
    %559 = vmatprep.mubr.f32.mxu0 0.0
    %560 = vmatmul.mubr.f32.gmra.mrb[0].mxu0 %v67
    %v561 = vpop.f32.mrb[0].mxu0
    %v562 = vadd.f32 0.0, %v561
    %v563 = vpop.f32.mrb[0].mxu0
    %564 = vmatprep.mubr.f32.mxu0 0.0
    %565 = vmatmul.mubr.f32.gmra.mrb[0].mxu0 %v68
    %v566 = vpop.f32.mrb[0].mxu0
    %v567 = vadd.f32 0.0, %v566
    %v568 = vpop.f32.mrb[0].mxu0
    %569 = vmatprep.mubr.f32.mxu0 0.0
    %570 = vmatmul.mubr.f32.gmra.mrb[0].mxu0 %v69
    %v571 = vpop.f32.mrb[0].mxu0
    %v572 = vadd.f32 0.0, %v571
    %v573 = vpop.f32.mrb[0].mxu0
    %574 = vmatprep.mubr.f32.mxu0 0.0
    %575 = vmatmul.mubr.f32.gmra.mrb[0].mxu0 %v70
    %v576 = vpop.f32.mrb[0].mxu0
    %v577 = vadd.f32 0.0, %v576
    %v578 = vpop.f32.mrb[0].mxu0
    %579 = vmatprep.mubr.f32.mxu0 0.0
    %580 = vmatmul.mubr.f32.gmra.mrb[0].mxu0 %v71
    %v581 = vpop.f32.mrb[0].mxu0
    %v582 = vadd.f32 0.0, %v581
    %v583 = vpop.f32.mrb[0].mxu0
    %584 = vmatprep.mubr.f32.mxu0 0.0
    %585 = vmatmul.mubr.f32.gmra.mrb[0].mxu0 %v72
    %v586 = vpop.f32.mrb[0].mxu0
    %v587 = vadd.f32 0.0, %v586
    %v588 = vpop.f32.mrb[0].mxu0
    %589 = vdwg.mxu0
    %590 = vst [vmem:[#allocation2 + $0x10] sm:$0xff] %v512
    %591 = vst [vmem:[#allocation2 + $0x30] sm:$0xff] %v517
    %592 = vst [vmem:[#allocation2 + $0x50] sm:$0xff] %v522
    %593 = vst [vmem:[#allocation2 + $0x70] sm:$0xff] %v527
    %594 = vst [vmem:[#allocation2 + $0x90] sm:$0xff] %v532
    %595 = vst [vmem:[#allocation2 + $0xb0] sm:$0xff] %v537
    %596 = vst [vmem:[#allocation2 + $0xd0] sm:$0xff] %v542
    %597 = vst [vmem:[#allocation2 + $0xf0] sm:$0xff] %v547
    %598 = vst [vmem:[#allocation2 + $0x110] sm:$0xff] %v552
    %599 = vst [vmem:[#allocation2 + $0x130] sm:$0xff] %v557
    %600 = vst [vmem:[#allocation2 + $0x150] sm:$0xff] %v562
    %601 = vst [vmem:[#allocation2 + $0x170] sm:$0xff] %v567
    %602 = vst [vmem:[#allocation2 + $0x190] sm:$0xff] %v572
    %603 = vst [vmem:[#allocation2 + $0x1b0] sm:$0xff] %v577
    %604 = vst [vmem:[#allocation2 + $0x1d0] sm:$0xff] %v582
    %605 = vst [vmem:[#allocation2 + $0x1f0] sm:$0xff] %v587
    %606 = vst [vmem:[#allocation2 + $0x18] sm:$0xff] %v57
    %607 = vst [vmem:[#allocation2 + $0x38] sm:$0xff] %v58
    %608 = vst [vmem:[#allocation2 + $0x58] sm:$0xff] %v59
    %609 = vst [vmem:[#allocation2 + $0x78] sm:$0xff] %v60
    %610 = vst [vmem:[#allocation2 + $0x98] sm:$0xff] %v61
    %611 = vst [vmem:[#allocation2 + $0xb8] sm:$0xff] %v62
    %612 = vst [vmem:[#allocation2 + $0xd8] sm:$0xff] %v63
    %613 = vst [vmem:[#allocation2 + $0xf8] sm:$0xff] %v64
    %614 = vst [vmem:[#allocation2 + $0x118] sm:$0xff] %v65
    %615 = vst [vmem:[#allocation2 + $0x138] sm:$0xff] %v66
    %616 = vst [vmem:[#allocation2 + $0x158] sm:$0xff] %v67
    %617 = vst [vmem:[#allocation2 + $0x178] sm:$0xff] %v68
    %618 = vst [vmem:[#allocation2 + $0x198] sm:$0xff] %v69
    %619 = vst [vmem:[#allocation2 + $0x1b8] sm:$0xff] %v70
    %620 = vst [vmem:[#allocation2 + $0x1d8] sm:$0xff] %v71
    %621 = vst [vmem:[#allocation2 + $0x1f8] sm:$0xff] %v72
    %v622 = vld [vmem:[#allocation8] sm:$0xff]
    %v623 = vld [vmem:[#allocation2] sm:$0xff]
    %v624 = vld [vmem:[#allocation2 + $0x8] sm:$0xff]
    %v625 = vld [vmem:[#allocation2 + $0x10] sm:$0xff]
    %v626 = vld [vmem:[#allocation2 + $0x18] sm:$0xff]
    %v627 = vld [vmem:[#allocation2 + $0x20] sm:$0xff]
    %v628 = vld [vmem:[#allocation2 + $0x28] sm:$0xff]
    %v629 = vld [vmem:[#allocation2 + $0x30] sm:$0xff]
    %v630 = vld [vmem:[#allocation2 + $0x38] sm:$0xff]
    %v631 = vld [vmem:[#allocation2 + $0x40] sm:$0xff]
    %v632 = vld [vmem:[#allocation2 + $0x48] sm:$0xff]
    %v633 = vld [vmem:[#allocation2 + $0x50] sm:$0xff]
    %v634 = vld [vmem:[#allocation2 + $0x58] sm:$0xff]
    %v635 = vld [vmem:[#allocation2 + $0x60] sm:$0xff]
    %v636 = vld [vmem:[#allocation2 + $0x68] sm:$0xff]
    %v637 = vld [vmem:[#allocation2 + $0x70] sm:$0xff]
    %v638 = vld [vmem:[#allocation2 + $0x78] sm:$0xff]
    %v639 = vld [vmem:[#allocation2 + $0x80] sm:$0xff]
    %v640 = vld [vmem:[#allocation2 + $0x88] sm:$0xff]
    %v641 = vld [vmem:[#allocation2 + $0x90] sm:$0xff]
    %v642 = vld [vmem:[#allocation2 + $0x98] sm:$0xff]
    %v643 = vld [vmem:[#allocation2 + $0xa0] sm:$0xff]
    %v644 = vld [vmem:[#allocation2 + $0xa8] sm:$0xff]
    %v645 = vld [vmem:[#allocation2 + $0xb0] sm:$0xff]
    %v646 = vld [vmem:[#allocation2 + $0xb8] sm:$0xff]
    %v647 = vld [vmem:[#allocation2 + $0xc0] sm:$0xff]
    %v648 = vld [vmem:[#allocation2 + $0xc8] sm:$0xff]
    %v649 = vld [vmem:[#allocation2 + $0xd0] sm:$0xff]
    %v650 = vld [vmem:[#allocation2 + $0xd8] sm:$0xff]
    %v651 = vld [vmem:[#allocation2 + $0xe0] sm:$0xff]
    %v652 = vld [vmem:[#allocation2 + $0xe8] sm:$0xff]
    %v653 = vld [vmem:[#allocation2 + $0xf0] sm:$0xff]
    %v654 = vld [vmem:[#allocation2 + $0xf8] sm:$0xff]
    %v655 = vld [vmem:[#allocation2 + $0x100] sm:$0xff]
    %v656 = vld [vmem:[#allocation2 + $0x108] sm:$0xff]
    %v657 = vld [vmem:[#allocation2 + $0x110] sm:$0xff]
    %v658 = vld [vmem:[#allocation2 + $0x118] sm:$0xff]
    %v659 = vld [vmem:[#allocation2 + $0x120] sm:$0xff]
    %v660 = vld [vmem:[#allocation2 + $0x128] sm:$0xff]
    %v661 = vld [vmem:[#allocation2 + $0x130] sm:$0xff]
    %v662 = vld [vmem:[#allocation2 + $0x138] sm:$0xff]
    %v663 = vld [vmem:[#allocation2 + $0x140] sm:$0xff]
    %v664 = vld [vmem:[#allocation2 + $0x148] sm:$0xff]
    %v665 = vld [vmem:[#allocation2 + $0x150] sm:$0xff]
    %v666 = vld [vmem:[#allocation2 + $0x158] sm:$0xff]
    %v667 = vld [vmem:[#allocation2 + $0x160] sm:$0xff]
    %v668 = vld [vmem:[#allocation2 + $0x168] sm:$0xff]
    %v669 = vld [vmem:[#allocation2 + $0x170] sm:$0xff]
    %v670 = vld [vmem:[#allocation2 + $0x178] sm:$0xff]
    %v671 = vld [vmem:[#allocation2 + $0x180] sm:$0xff]
    %v672 = vld [vmem:[#allocation2 + $0x188] sm:$0xff]
    %v673 = vld [vmem:[#allocation2 + $0x190] sm:$0xff]
    %v674 = vld [vmem:[#allocation2 + $0x198] sm:$0xff]
    %v675 = vld [vmem:[#allocation2 + $0x1a0] sm:$0xff]
    %v676 = vld [vmem:[#allocation2 + $0x1a8] sm:$0xff]
    %v677 = vld [vmem:[#allocation2 + $0x1b0] sm:$0xff]
    %v678 = vld [vmem:[#allocation2 + $0x1b8] sm:$0xff]
    %v679 = vld [vmem:[#allocation2 + $0x1c0] sm:$0xff]
    %v680 = vld [vmem:[#allocation2 + $0x1c8] sm:$0xff]
    %v681 = vld [vmem:[#allocation2 + $0x1d0] sm:$0xff]
    %v682 = vld [vmem:[#allocation2 + $0x1d8] sm:$0xff]
    %v683 = vld [vmem:[#allocation2 + $0x1e0] sm:$0xff]
    %v684 = vld [vmem:[#allocation2 + $0x1e8] sm:$0xff]
    %v685 = vld [vmem:[#allocation2 + $0x1f0] sm:$0xff]
    %v686 = vld [vmem:[#allocation2 + $0x1f8] sm:$0xff]
    %v687 = vld [vmem:[%s3] sm:$0xff]
    %vm688 = vcmask 261120
    %v690 = vsel %vm688, %v622, 0
    %692 = vmatprep.subr.mxu0 0.0
    %693 = vmatpush1.msra.mxu0 %v623
    %694 = vmatprep.subr.mxu0 0.0
    %695 = vmatpush1.msra.mxu0 %v624
    %696 = vmatprep.subr.mxu0 0.0
    %697 = vmatpush1.msra.mxu0 %v625
    %698 = vmatprep.subr.mxu0 0.0
    %699 = vmatpush1.msra.mxu0 %v626
    %700 = vmatprep.subr.mxu0 0.0
    %701 = vmatpush1.msra.mxu0 0.0
    %702 = vmatprep.subr.mxu0 0.0
    %703 = vmatpush1.msra.mxu0 0.0
    %704 = vmatprep.subr.mxu0 0.0
    %705 = vmatpush1.msra.mxu0 0.0
    %706 = vmatprep.subr.mxu0 0.0
    %707 = vmatpush1.msra.mxu0 0.0
    %708 = vmatprep.subr.mxu0 0.0
    %709 = vmatpush1.msra.mxu0 0.0
    %710 = vmatprep.subr.mxu0 0.0
    %711 = vmatpush1.msra.mxu0 0.0
    %712 = vmatprep.subr.mxu0 0.0
    %713 = vmatpush1.msra.mxu0 0.0
    %714 = vmatprep.subr.mxu0 0.0
    %715 = vmatpush1.msra.mxu0 0.0
    %716 = vmatprep.subr.mxu0 0.0
    %717 = vmatpush1.msra.mxu0 0.0
    %718 = vmatprep.subr.mxu0 0.0
    %719 = vmatpush1.msra.mxu0 0.0
    %720 = vmatprep.subr.mxu0 0.0
    %721 = vmatpush1.msra.mxu0 0.0
    %722 = vmatprep.subr.mxu0 0.0
    %723 = vmatpush1.msra.mxu0 0.0
    %724 = vmatprep.subr.mxu0 0.0
    %725 = vmatpush1.msra.mxu0 0.0
    %726 = vmatprep.subr.mxu0 0.0
    %727 = vmatpush1.msra.mxu0 0.0
    %728 = vmatprep.subr.mxu0 0.0
    %729 = vmatpush1.msra.mxu0 0.0
    %730 = vmatprep.subr.mxu0 0.0
    %731 = vmatpush1.msra.mxu0 0.0
    %732 = vmatprep.subr.mxu0 0.0
    %733 = vmatpush1.msra.mxu0 0.0
    %734 = vmatprep.subr.mxu0 0.0
    %735 = vmatpush1.msra.mxu0 0.0
    %736 = vmatprep.subr.mxu0 0.0
    %737 = vmatpush1.msra.mxu0 0.0
    %738 = vmatprep.subr.mxu0 0.0
    %739 = vmatpush1.msra.mxu0 0.0
    %740 = vmatprep.subr.mxu0 0.0
    %741 = vmatpush1.msra.mxu0 0.0
    %742 = vmatprep.subr.mxu0 0.0
    %743 = vmatpush1.msra.mxu0 0.0
    %744 = vmatprep.subr.mxu0 0.0
    %745 = vmatpush1.msra.mxu0 0.0
    %746 = vmatprep.subr.mxu0 0.0
    %747 = vmatpush1.msra.mxu0 0.0
    %748 = vmatprep.subr.mxu0 0.0
    %749 = vmatpush1.msra.mxu0 0.0
    %750 = vmatprep.subr.mxu0 0.0
    %751 = vmatpush1.msra.mxu0 0.0
    %752 = vmatprep.subr.mxu0 0.0
    %753 = vmatpush1.msra.mxu0 0.0
    %754 = vmatprep.subr.mxu0 0.0
    %755 = vmatpush1.msra.mxu0 0.0
    %756 = vmatprep.mubr.f32.mxu0 0.0
    %757 = vmatmul.mubr.f32.gmra.mrb[0].mxu0 %v690
    %v758 = vpop.f32.mrb[0].mxu0
    %v759 = vadd.f32 %v687, %v758
    %v760 = vpop.f32.mrb[0].mxu0
    %761 = vdwg.mxu0
    %762 = vmatprep.subr.mxu0 0.0
    %763 = vmatpush1.msra.mxu0 %v627
    %764 = vmatprep.subr.mxu0 0.0
    %765 = vmatpush1.msra.mxu0 %v628
    %766 = vmatprep.subr.mxu0 0.0
    %767 = vmatpush1.msra.mxu0 %v629
    %768 = vmatprep.subr.mxu0 0.0
    %769 = vmatpush1.msra.mxu0 %v630
    %770 = vmatprep.subr.mxu0 0.0
    %771 = vmatpush1.msra.mxu0 0.0
    %772 = vmatprep.subr.mxu0 0.0
    %773 = vmatpush1.msra.mxu0 0.0
    %774 = vmatprep.subr.mxu0 0.0
    %775 = vmatpush1.msra.mxu0 0.0
    %776 = vmatprep.subr.mxu0 0.0
    %777 = vmatpush1.msra.mxu0 0.0
    %778 = vmatprep.subr.mxu0 0.0
    %779 = vmatpush1.msra.mxu0 0.0
    %780 = vmatprep.subr.mxu0 0.0
    %781 = vmatpush1.msra.mxu0 0.0
    %782 = vmatprep.subr.mxu0 0.0
    %783 = vmatpush1.msra.mxu0 0.0
    %784 = vmatprep.subr.mxu0 0.0
    %785 = vmatpush1.msra.mxu0 0.0
    %786 = vmatprep.subr.mxu0 0.0
    %787 = vmatpush1.msra.mxu0 0.0
    %788 = vmatprep.subr.mxu0 0.0
    %789 = vmatpush1.msra.mxu0 0.0
    %790 = vmatprep.subr.mxu0 0.0
    %791 = vmatpush1.msra.mxu0 0.0
    %792 = vmatprep.subr.mxu0 0.0
    %793 = vmatpush1.msra.mxu0 0.0
    %794 = vmatprep.subr.mxu0 0.0
    %795 = vmatpush1.msra.mxu0 0.0
    %796 = vmatprep.subr.mxu0 0.0
    %797 = vmatpush1.msra.mxu0 0.0
    %798 = vmatprep.subr.mxu0 0.0
    %799 = vmatpush1.msra.mxu0 0.0
    %800 = vmatprep.subr.mxu0 0.0
    %801 = vmatpush1.msra.mxu0 0.0
    %802 = vmatprep.subr.mxu0 0.0
    %803 = vmatpush1.msra.mxu0 0.0
    %804 = vmatprep.subr.mxu0 0.0
    %805 = vmatpush1.msra.mxu0 0.0
    %806 = vmatprep.subr.mxu0 0.0
    %807 = vmatpush1.msra.mxu0 0.0
    %808 = vmatprep.subr.mxu0 0.0
    %809 = vmatpush1.msra.mxu0 0.0
    %810 = vmatprep.subr.mxu0 0.0
    %811 = vmatpush1.msra.mxu0 0.0
    %812 = vmatprep.subr.mxu0 0.0
    %813 = vmatpush1.msra.mxu0 0.0
    %814 = vmatprep.subr.mxu0 0.0
    %815 = vmatpush1.msra.mxu0 0.0
    %816 = vmatprep.subr.mxu0 0.0
    %817 = vmatpush1.msra.mxu0 0.0
    %818 = vmatprep.subr.mxu0 0.0
    %819 = vmatpush1.msra.mxu0 0.0
    %820 = vmatprep.subr.mxu0 0.0
    %821 = vmatpush1.msra.mxu0 0.0
    %822 = vmatprep.subr.mxu0 0.0
    %823 = vmatpush1.msra.mxu0 0.0
    %824 = vmatprep.subr.mxu0 0.0
    %825 = vmatpush1.msra.mxu0 0.0
    %826 = vmatprep.mubr.f32.mxu0 0.0
    %827 = vmatmul.mubr.f32.gmra.mrb[0].mxu0 %v690
    %v828 = vpop.f32.mrb[0].mxu0
    %v829 = vadd.f32 %v687, %v828
    %v830 = vpop.f32.mrb[0].mxu0
    %831 = vdwg.mxu0
    %832 = vmatprep.subr.mxu0 0.0
    %833 = vmatpush1.msra.mxu0 %v631
    %834 = vmatprep.subr.mxu0 0.0
    %835 = vmatpush1.msra.mxu0 %v632
    %836 = vmatprep.subr.mxu0 0.0
    %837 = vmatpush1.msra.mxu0 %v633
    %838 = vmatprep.subr.mxu0 0.0
    %839 = vmatpush1.msra.mxu0 %v634
    %840 = vmatprep.subr.mxu0 0.0
    %841 = vmatpush1.msra.mxu0 0.0
    %842 = vmatprep.subr.mxu0 0.0
    %843 = vmatpush1.msra.mxu0 0.0
    %844 = vmatprep.subr.mxu0 0.0
    %845 = vmatpush1.msra.mxu0 0.0
    %846 = vmatprep.subr.mxu0 0.0
    %847 = vmatpush1.msra.mxu0 0.0
    %848 = vmatprep.subr.mxu0 0.0
    %849 = vmatpush1.msra.mxu0 0.0
    %850 = vmatprep.subr.mxu0 0.0
    %851 = vmatpush1.msra.mxu0 0.0
    %852 = vmatprep.subr.mxu0 0.0
    %853 = vmatpush1.msra.mxu0 0.0
    %854 = vmatprep.subr.mxu0 0.0
    %855 = vmatpush1.msra.mxu0 0.0
    %856 = vmatprep.subr.mxu0 0.0
    %857 = vmatpush1.msra.mxu0 0.0
    %858 = vmatprep.subr.mxu0 0.0
    %859 = vmatpush1.msra.mxu0 0.0
    %860 = vmatprep.subr.mxu0 0.0
    %861 = vmatpush1.msra.mxu0 0.0
    %862 = vmatprep.subr.mxu0 0.0
    %863 = vmatpush1.msra.mxu0 0.0
    %864 = vmatprep.subr.mxu0 0.0
    %865 = vmatpush1.msra.mxu0 0.0
    %866 = vmatprep.subr.mxu0 0.0
    %867 = vmatpush1.msra.mxu0 0.0
    %868 = vmatprep.subr.mxu0 0.0
    %869 = vmatpush1.msra.mxu0 0.0
    %870 = vmatprep.subr.mxu0 0.0
    %871 = vmatpush1.msra.mxu0 0.0
    %872 = vmatprep.subr.mxu0 0.0
    %873 = vmatpush1.msra.mxu0 0.0
    %874 = vmatprep.subr.mxu0 0.0
    %875 = vmatpush1.msra.mxu0 0.0
    %876 = vmatprep.subr.mxu0 0.0
    %877 = vmatpush1.msra.mxu0 0.0
    %878 = vmatprep.subr.mxu0 0.0
    %879 = vmatpush1.msra.mxu0 0.0
    %880 = vmatprep.subr.mxu0 0.0
    %881 = vmatpush1.msra.mxu0 0.0
    %882 = vmatprep.subr.mxu0 0.0
    %883 = vmatpush1.msra.mxu0 0.0
    %884 = vmatprep.subr.mxu0 0.0
    %885 = vmatpush1.msra.mxu0 0.0
    %886 = vmatprep.subr.mxu0 0.0
    %887 = vmatpush1.msra.mxu0 0.0
    %888 = vmatprep.subr.mxu0 0.0
    %889 = vmatpush1.msra.mxu0 0.0
    %890 = vmatprep.subr.mxu0 0.0
    %891 = vmatpush1.msra.mxu0 0.0
    %892 = vmatprep.subr.mxu0 0.0
    %893 = vmatpush1.msra.mxu0 0.0
    %894 = vmatprep.subr.mxu0 0.0
    %895 = vmatpush1.msra.mxu0 0.0
    %896 = vmatprep.mubr.f32.mxu0 0.0
    %897 = vmatmul.mubr.f32.gmra.mrb[0].mxu0 %v690
    %v898 = vpop.f32.mrb[0].mxu0
    %v899 = vadd.f32 %v687, %v898
    %v900 = vpop.f32.mrb[0].mxu0
    %901 = vdwg.mxu0
    %902 = vmatprep.subr.mxu0 0.0
    %903 = vmatpush1.msra.mxu0 %v635
    %904 = vmatprep.subr.mxu0 0.0
    %905 = vmatpush1.msra.mxu0 %v636
    %906 = vmatprep.subr.mxu0 0.0
    %907 = vmatpush1.msra.mxu0 %v637
    %908 = vmatprep.subr.mxu0 0.0
    %909 = vmatpush1.msra.mxu0 %v638
    %910 = vmatprep.subr.mxu0 0.0
    %911 = vmatpush1.msra.mxu0 0.0
    %912 = vmatprep.subr.mxu0 0.0
    %913 = vmatpush1.msra.mxu0 0.0
    %914 = vmatprep.subr.mxu0 0.0
    %915 = vmatpush1.msra.mxu0 0.0
    %916 = vmatprep.subr.mxu0 0.0
    %917 = vmatpush1.msra.mxu0 0.0
    %918 = vmatprep.subr.mxu0 0.0
    %919 = vmatpush1.msra.mxu0 0.0
    %920 = vmatprep.subr.mxu0 0.0
    %921 = vmatpush1.msra.mxu0 0.0
    %922 = vmatprep.subr.mxu0 0.0
    %923 = vmatpush1.msra.mxu0 0.0
    %924 = vmatprep.subr.mxu0 0.0
    %925 = vmatpush1.msra.mxu0 0.0
    %926 = vmatprep.subr.mxu0 0.0
    %927 = vmatpush1.msra.mxu0 0.0
    %928 = vmatprep.subr.mxu0 0.0
    %929 = vmatpush1.msra.mxu0 0.0
    %930 = vmatprep.subr.mxu0 0.0
    %931 = vmatpush1.msra.mxu0 0.0
    %932 = vmatprep.subr.mxu0 0.0
    %933 = vmatpush1.msra.mxu0 0.0
    %934 = vmatprep.subr.mxu0 0.0
    %935 = vmatpush1.msra.mxu0 0.0
    %936 = vmatprep.subr.mxu0 0.0
    %937 = vmatpush1.msra.mxu0 0.0
    %938 = vmatprep.subr.mxu0 0.0
    %939 = vmatpush1.msra.mxu0 0.0
    %940 = vmatprep.subr.mxu0 0.0
    %941 = vmatpush1.msra.mxu0 0.0
    %942 = vmatprep.subr.mxu0 0.0
    %943 = vmatpush1.msra.mxu0 0.0
    %944 = vmatprep.subr.mxu0 0.0
    %945 = vmatpush1.msra.mxu0 0.0
    %946 = vmatprep.subr.mxu0 0.0
    %947 = vmatpush1.msra.mxu0 0.0
    %948 = vmatprep.subr.mxu0 0.0
    %949 = vmatpush1.msra.mxu0 0.0
    %950 = vmatprep.subr.mxu0 0.0
    %951 = vmatpush1.msra.mxu0 0.0
    %952 = vmatprep.subr.mxu0 0.0
    %953 = vmatpush1.msra.mxu0 0.0
    %954 = vmatprep.subr.mxu0 0.0
    %955 = vmatpush1.msra.mxu0 0.0
    %956 = vmatprep.subr.mxu0 0.0
    %957 = vmatpush1.msra.mxu0 0.0
    %958 = vmatprep.subr.mxu0 0.0
    %959 = vmatpush1.msra.mxu0 0.0
    %960 = vmatprep.subr.mxu0 0.0
    %961 = vmatpush1.msra.mxu0 0.0
    %962 = vmatprep.subr.mxu0 0.0
    %963 = vmatpush1.msra.mxu0 0.0
    %964 = vmatprep.subr.mxu0 0.0
    %965 = vmatpush1.msra.mxu0 0.0
    %966 = vmatprep.mubr.f32.mxu0 0.0
    %967 = vmatmul.mubr.f32.gmra.mrb[0].mxu0 %v690
    %v968 = vpop.f32.mrb[0].mxu0
    %v969 = vadd.f32 %v687, %v968
    %v970 = vpop.f32.mrb[0].mxu0
    %971 = vdwg.mxu0
    %972 = vmatprep.subr.mxu0 0.0
    %973 = vmatpush1.msra.mxu0 %v639
    %974 = vmatprep.subr.mxu0 0.0
    %975 = vmatpush1.msra.mxu0 %v640
    %976 = vmatprep.subr.mxu0 0.0
    %977 = vmatpush1.msra.mxu0 %v641
    %978 = vmatprep.subr.mxu0 0.0
    %979 = vmatpush1.msra.mxu0 %v642
    %980 = vmatprep.subr.mxu0 0.0
    %981 = vmatpush1.msra.mxu0 0.0
    %982 = vmatprep.subr.mxu0 0.0
    %983 = vmatpush1.msra.mxu0 0.0
    %984 = vmatprep.subr.mxu0 0.0
    %985 = vmatpush1.msra.mxu0 0.0
    %986 = vmatprep.subr.mxu0 0.0
    %987 = vmatpush1.msra.mxu0 0.0
    %988 = vmatprep.subr.mxu0 0.0
    %989 = vmatpush1.msra.mxu0 0.0
    %990 = vmatprep.subr.mxu0 0.0
    %991 = vmatpush1.msra.mxu0 0.0
    %992 = vmatprep.subr.mxu0 0.0
    %993 = vmatpush1.msra.mxu0 0.0
    %994 = vmatprep.subr.mxu0 0.0
    %995 = vmatpush1.msra.mxu0 0.0
    %996 = vmatprep.subr.mxu0 0.0
    %997 = vmatpush1.msra.mxu0 0.0
    %998 = vmatprep.subr.mxu0 0.0
    %999 = vmatpush1.msra.mxu0 0.0
    %1000 = vmatprep.subr.mxu0 0.0
    %1001 = vmatpush1.msra.mxu0 0.0
    %1002 = vmatprep.subr.mxu0 0.0
    %1003 = vmatpush1.msra.mxu0 0.0
    %1004 = vmatprep.subr.mxu0 0.0
    %1005 = vmatpush1.msra.mxu0 0.0
    %1006 = vmatprep.subr.mxu0 0.0
    %1007 = vmatpush1.msra.mxu0 0.0
    %1008 = vmatprep.subr.mxu0 0.0
    %1009 = vmatpush1.msra.mxu0 0.0
    %1010 = vmatprep.subr.mxu0 0.0
    %1011 = vmatpush1.msra.mxu0 0.0
    %1012 = vmatprep.subr.mxu0 0.0
    %1013 = vmatpush1.msra.mxu0 0.0
    %1014 = vmatprep.subr.mxu0 0.0
    %1015 = vmatpush1.msra.mxu0 0.0
    %1016 = vmatprep.subr.mxu0 0.0
    %1017 = vmatpush1.msra.mxu0 0.0
    %1018 = vmatprep.subr.mxu0 0.0
    %1019 = vmatpush1.msra.mxu0 0.0
    %1020 = vmatprep.subr.mxu0 0.0
    %1021 = vmatpush1.msra.mxu0 0.0
    %1022 = vmatprep.subr.mxu0 0.0
    %1023 = vmatpush1.msra.mxu0 0.0
    %1024 = vmatprep.subr.mxu0 0.0
    %1025 = vmatpush1.msra.mxu0 0.0
    %1026 = vmatprep.subr.mxu0 0.0
    %1027 = vmatpush1.msra.mxu0 0.0
    %1028 = vmatprep.subr.mxu0 0.0
    %1029 = vmatpush1.msra.mxu0 0.0
    %1030 = vmatprep.subr.mxu0 0.0
    %1031 = vmatpush1.msra.mxu0 0.0
    %1032 = vmatprep.subr.mxu0 0.0
    %1033 = vmatpush1.msra.mxu0 0.0
    %1034 = vmatprep.subr.mxu0 0.0
    %1035 = vmatpush1.msra.mxu0 0.0
    %1036 = vmatprep.mubr.f32.mxu0 0.0
    %1037 = vmatmul.mubr.f32.gmra.mrb[0].mxu0 %v690
    %v1038 = vpop.f32.mrb[0].mxu0
    %v1039 = vadd.f32 %v687, %v1038
    %v1040 = vpop.f32.mrb[0].mxu0
    %1041 = vdwg.mxu0
    %1042 = vmatprep.subr.mxu0 0.0
    %1043 = vmatpush1.msra.mxu0 %v643
    %1044 = vmatprep.subr.mxu0 0.0
    %1045 = vmatpush1.msra.mxu0 %v644
    %1046 = vmatprep.subr.mxu0 0.0
    %1047 = vmatpush1.msra.mxu0 %v645
    %1048 = vmatprep.subr.mxu0 0.0
    %1049 = vmatpush1.msra.mxu0 %v646
    %1050 = vmatprep.subr.mxu0 0.0
    %1051 = vmatpush1.msra.mxu0 0.0
    %1052 = vmatprep.subr.mxu0 0.0
    %1053 = vmatpush1.msra.mxu0 0.0
    %1054 = vmatprep.subr.mxu0 0.0
    %1055 = vmatpush1.msra.mxu0 0.0
    %1056 = vmatprep.subr.mxu0 0.0
    %1057 = vmatpush1.msra.mxu0 0.0
    %1058 = vmatprep.subr.mxu0 0.0
    %1059 = vmatpush1.msra.mxu0 0.0
    %1060 = vmatprep.subr.mxu0 0.0
    %1061 = vmatpush1.msra.mxu0 0.0
    %1062 = vmatprep.subr.mxu0 0.0
    %1063 = vmatpush1.msra.mxu0 0.0
    %1064 = vmatprep.subr.mxu0 0.0
    %1065 = vmatpush1.msra.mxu0 0.0
    %1066 = vmatprep.subr.mxu0 0.0
    %1067 = vmatpush1.msra.mxu0 0.0
    %1068 = vmatprep.subr.mxu0 0.0
    %1069 = vmatpush1.msra.mxu0 0.0
    %1070 = vmatprep.subr.mxu0 0.0
    %1071 = vmatpush1.msra.mxu0 0.0
    %1072 = vmatprep.subr.mxu0 0.0
    %1073 = vmatpush1.msra.mxu0 0.0
    %1074 = vmatprep.subr.mxu0 0.0
    %1075 = vmatpush1.msra.mxu0 0.0
    %1076 = vmatprep.subr.mxu0 0.0
    %1077 = vmatpush1.msra.mxu0 0.0
    %1078 = vmatprep.subr.mxu0 0.0
    %1079 = vmatpush1.msra.mxu0 0.0
    %1080 = vmatprep.subr.mxu0 0.0
    %1081 = vmatpush1.msra.mxu0 0.0
    %1082 = vmatprep.subr.mxu0 0.0
    %1083 = vmatpush1.msra.mxu0 0.0
    %1084 = vmatprep.subr.mxu0 0.0
    %1085 = vmatpush1.msra.mxu0 0.0
    %1086 = vmatprep.subr.mxu0 0.0
    %1087 = vmatpush1.msra.mxu0 0.0
    %1088 = vmatprep.subr.mxu0 0.0
    %1089 = vmatpush1.msra.mxu0 0.0
    %1090 = vmatprep.subr.mxu0 0.0
    %1091 = vmatpush1.msra.mxu0 0.0
    %1092 = vmatprep.subr.mxu0 0.0
    %1093 = vmatpush1.msra.mxu0 0.0
    %1094 = vmatprep.subr.mxu0 0.0
    %1095 = vmatpush1.msra.mxu0 0.0
    %1096 = vmatprep.subr.mxu0 0.0
    %1097 = vmatpush1.msra.mxu0 0.0
    %1098 = vmatprep.subr.mxu0 0.0
    %1099 = vmatpush1.msra.mxu0 0.0
    %1100 = vmatprep.subr.mxu0 0.0
    %1101 = vmatpush1.msra.mxu0 0.0
    %1102 = vmatprep.subr.mxu0 0.0
    %1103 = vmatpush1.msra.mxu0 0.0
    %1104 = vmatprep.subr.mxu0 0.0
    %1105 = vmatpush1.msra.mxu0 0.0
    %1106 = vmatprep.mubr.f32.mxu0 0.0
    %1107 = vmatmul.mubr.f32.gmra.mrb[0].mxu0 %v690
    %v1108 = vpop.f32.mrb[0].mxu0
    %v1109 = vadd.f32 %v687, %v1108
    %v1110 = vpop.f32.mrb[0].mxu0
    %1111 = vdwg.mxu0
    %1112 = vmatprep.subr.mxu0 0.0
    %1113 = vmatpush1.msra.mxu0 %v647
    %1114 = vmatprep.subr.mxu0 0.0
    %1115 = vmatpush1.msra.mxu0 %v648
    %1116 = vmatprep.subr.mxu0 0.0
    %1117 = vmatpush1.msra.mxu0 %v649
    %1118 = vmatprep.subr.mxu0 0.0
    %1119 = vmatpush1.msra.mxu0 %v650
    %1120 = vmatprep.subr.mxu0 0.0
    %1121 = vmatpush1.msra.mxu0 0.0
    %1122 = vmatprep.subr.mxu0 0.0
    %1123 = vmatpush1.msra.mxu0 0.0
    %1124 = vmatprep.subr.mxu0 0.0
    %1125 = vmatpush1.msra.mxu0 0.0
    %1126 = vmatprep.subr.mxu0 0.0
    %1127 = vmatpush1.msra.mxu0 0.0
    %1128 = vmatprep.subr.mxu0 0.0
    %1129 = vmatpush1.msra.mxu0 0.0
    %1130 = vmatprep.subr.mxu0 0.0
    %1131 = vmatpush1.msra.mxu0 0.0
    %1132 = vmatprep.subr.mxu0 0.0
    %1133 = vmatpush1.msra.mxu0 0.0
    %1134 = vmatprep.subr.mxu0 0.0
    %1135 = vmatpush1.msra.mxu0 0.0
    %1136 = vmatprep.subr.mxu0 0.0
    %1137 = vmatpush1.msra.mxu0 0.0
    %1138 = vmatprep.subr.mxu0 0.0
    %1139 = vmatpush1.msra.mxu0 0.0
    %1140 = vmatprep.subr.mxu0 0.0
    %1141 = vmatpush1.msra.mxu0 0.0
    %1142 = vmatprep.subr.mxu0 0.0
    %1143 = vmatpush1.msra.mxu0 0.0
    %1144 = vmatprep.subr.mxu0 0.0
    %1145 = vmatpush1.msra.mxu0 0.0
    %1146 = vmatprep.subr.mxu0 0.0
    %1147 = vmatpush1.msra.mxu0 0.0
    %1148 = vmatprep.subr.mxu0 0.0
    %1149 = vmatpush1.msra.mxu0 0.0
    %1150 = vmatprep.subr.mxu0 0.0
    %1151 = vmatpush1.msra.mxu0 0.0
    %1152 = vmatprep.subr.mxu0 0.0
    %1153 = vmatpush1.msra.mxu0 0.0
    %1154 = vmatprep.subr.mxu0 0.0
    %1155 = vmatpush1.msra.mxu0 0.0
    %1156 = vmatprep.subr.mxu0 0.0
    %1157 = vmatpush1.msra.mxu0 0.0
    %1158 = vmatprep.subr.mxu0 0.0
    %1159 = vmatpush1.msra.mxu0 0.0
    %1160 = vmatprep.subr.mxu0 0.0
    %1161 = vmatpush1.msra.mxu0 0.0
    %1162 = vmatprep.subr.mxu0 0.0
    %1163 = vmatpush1.msra.mxu0 0.0
    %1164 = vmatprep.subr.mxu0 0.0
    %1165 = vmatpush1.msra.mxu0 0.0
    %1166 = vmatprep.subr.mxu0 0.0
    %1167 = vmatpush1.msra.mxu0 0.0
    %1168 = vmatprep.subr.mxu0 0.0
    %1169 = vmatpush1.msra.mxu0 0.0
    %1170 = vmatprep.subr.mxu0 0.0
    %1171 = vmatpush1.msra.mxu0 0.0
    %1172 = vmatprep.subr.mxu0 0.0
    %1173 = vmatpush1.msra.mxu0 0.0
    %1174 = vmatprep.subr.mxu0 0.0
    %1175 = vmatpush1.msra.mxu0 0.0
    %1176 = vmatprep.mubr.f32.mxu0 0.0
    %1177 = vmatmul.mubr.f32.gmra.mrb[0].mxu0 %v690
    %v1178 = vpop.f32.mrb[0].mxu0
    %v1179 = vadd.f32 %v687, %v1178
    %v1180 = vpop.f32.mrb[0].mxu0
    %1181 = vdwg.mxu0
    %1182 = vmatprep.subr.mxu0 0.0
    %1183 = vmatpush1.msra.mxu0 %v651
    %1184 = vmatprep.subr.mxu0 0.0
    %1185 = vmatpush1.msra.mxu0 %v652
    %1186 = vmatprep.subr.mxu0 0.0
    %1187 = vmatpush1.msra.mxu0 %v653
    %1188 = vmatprep.subr.mxu0 0.0
    %1189 = vmatpush1.msra.mxu0 %v654
    %1190 = vmatprep.subr.mxu0 0.0
    %1191 = vmatpush1.msra.mxu0 0.0
    %1192 = vmatprep.subr.mxu0 0.0
    %1193 = vmatpush1.msra.mxu0 0.0
    %1194 = vmatprep.subr.mxu0 0.0
    %1195 = vmatpush1.msra.mxu0 0.0
    %1196 = vmatprep.subr.mxu0 0.0
    %1197 = vmatpush1.msra.mxu0 0.0
    %1198 = vmatprep.subr.mxu0 0.0
    %1199 = vmatpush1.msra.mxu0 0.0
    %1200 = vmatprep.subr.mxu0 0.0
    %1201 = vmatpush1.msra.mxu0 0.0
    %1202 = vmatprep.subr.mxu0 0.0
    %1203 = vmatpush1.msra.mxu0 0.0
    %1204 = vmatprep.subr.mxu0 0.0
    %1205 = vmatpush1.msra.mxu0 0.0
    %1206 = vmatprep.subr.mxu0 0.0
    %1207 = vmatpush1.msra.mxu0 0.0
    %1208 = vmatprep.subr.mxu0 0.0
    %1209 = vmatpush1.msra.mxu0 0.0
    %1210 = vmatprep.subr.mxu0 0.0
    %1211 = vmatpush1.msra.mxu0 0.0
    %1212 = vmatprep.subr.mxu0 0.0
    %1213 = vmatpush1.msra.mxu0 0.0
    %1214 = vmatprep.subr.mxu0 0.0
    %1215 = vmatpush1.msra.mxu0 0.0
    %1216 = vmatprep.subr.mxu0 0.0
    %1217 = vmatpush1.msra.mxu0 0.0
    %1218 = vmatprep.subr.mxu0 0.0
    %1219 = vmatpush1.msra.mxu0 0.0
    %1220 = vmatprep.subr.mxu0 0.0
    %1221 = vmatpush1.msra.mxu0 0.0
    %1222 = vmatprep.subr.mxu0 0.0
    %1223 = vmatpush1.msra.mxu0 0.0
    %1224 = vmatprep.subr.mxu0 0.0
    %1225 = vmatpush1.msra.mxu0 0.0
    %1226 = vmatprep.subr.mxu0 0.0
    %1227 = vmatpush1.msra.mxu0 0.0
    %1228 = vmatprep.subr.mxu0 0.0
    %1229 = vmatpush1.msra.mxu0 0.0
    %1230 = vmatprep.subr.mxu0 0.0
    %1231 = vmatpush1.msra.mxu0 0.0
    %1232 = vmatprep.subr.mxu0 0.0
    %1233 = vmatpush1.msra.mxu0 0.0
    %1234 = vmatprep.subr.mxu0 0.0
    %1235 = vmatpush1.msra.mxu0 0.0
    %1236 = vmatprep.subr.mxu0 0.0
    %1237 = vmatpush1.msra.mxu0 0.0
    %1238 = vmatprep.subr.mxu0 0.0
    %1239 = vmatpush1.msra.mxu0 0.0
    %1240 = vmatprep.subr.mxu0 0.0
    %1241 = vmatpush1.msra.mxu0 0.0
    %1242 = vmatprep.subr.mxu0 0.0
    %1243 = vmatpush1.msra.mxu0 0.0
    %1244 = vmatprep.subr.mxu0 0.0
    %1245 = vmatpush1.msra.mxu0 0.0
    %1246 = vmatprep.mubr.f32.mxu0 0.0
    %1247 = vmatmul.mubr.f32.gmra.mrb[0].mxu0 %v690
    %v1248 = vpop.f32.mrb[0].mxu0
    %v1249 = vadd.f32 %v687, %v1248
    %v1250 = vpop.f32.mrb[0].mxu0
    %1251 = vdwg.mxu0
    %1252 = vmatprep.subr.mxu0 0.0
    %1253 = vmatpush1.msra.mxu0 %v655
    %1254 = vmatprep.subr.mxu0 0.0
    %1255 = vmatpush1.msra.mxu0 %v656
    %1256 = vmatprep.subr.mxu0 0.0
    %1257 = vmatpush1.msra.mxu0 %v657
    %1258 = vmatprep.subr.mxu0 0.0
    %1259 = vmatpush1.msra.mxu0 %v658
    %1260 = vmatprep.subr.mxu0 0.0
    %1261 = vmatpush1.msra.mxu0 0.0
    %1262 = vmatprep.subr.mxu0 0.0
    %1263 = vmatpush1.msra.mxu0 0.0
    %1264 = vmatprep.subr.mxu0 0.0
    %1265 = vmatpush1.msra.mxu0 0.0
    %1266 = vmatprep.subr.mxu0 0.0
    %1267 = vmatpush1.msra.mxu0 0.0
    %1268 = vmatprep.subr.mxu0 0.0
    %1269 = vmatpush1.msra.mxu0 0.0
    %1270 = vmatprep.subr.mxu0 0.0
    %1271 = vmatpush1.msra.mxu0 0.0
    %1272 = vmatprep.subr.mxu0 0.0
    %1273 = vmatpush1.msra.mxu0 0.0
    %1274 = vmatprep.subr.mxu0 0.0
    %1275 = vmatpush1.msra.mxu0 0.0
    %1276 = vmatprep.subr.mxu0 0.0
    %1277 = vmatpush1.msra.mxu0 0.0
    %1278 = vmatprep.subr.mxu0 0.0
    %1279 = vmatpush1.msra.mxu0 0.0
    %1280 = vmatprep.subr.mxu0 0.0
    %1281 = vmatpush1.msra.mxu0 0.0
    %1282 = vmatprep.subr.mxu0 0.0
    %1283 = vmatpush1.msra.mxu0 0.0
    %1284 = vmatprep.subr.mxu0 0.0
    %1285 = vmatpush1.msra.mxu0 0.0
    %1286 = vmatprep.subr.mxu0 0.0
    %1287 = vmatpush1.msra.mxu0 0.0
    %1288 = vmatprep.subr.mxu0 0.0
    %1289 = vmatpush1.msra.mxu0 0.0
    %1290 = vmatprep.subr.mxu0 0.0
    %1291 = vmatpush1.msra.mxu0 0.0
    %1292 = vmatprep.subr.mxu0 0.0
    %1293 = vmatpush1.msra.mxu0 0.0
    %1294 = vmatprep.subr.mxu0 0.0
    %1295 = vmatpush1.msra.mxu0 0.0
    %1296 = vmatprep.subr.mxu0 0.0
    %1297 = vmatpush1.msra.mxu0 0.0
    %1298 = vmatprep.subr.mxu0 0.0
    %1299 = vmatpush1.msra.mxu0 0.0
    %1300 = vmatprep.subr.mxu0 0.0
    %1301 = vmatpush1.msra.mxu0 0.0
    %1302 = vmatprep.subr.mxu0 0.0
    %1303 = vmatpush1.msra.mxu0 0.0
    %1304 = vmatprep.subr.mxu0 0.0
    %1305 = vmatpush1.msra.mxu0 0.0
    %1306 = vmatprep.subr.mxu0 0.0
    %1307 = vmatpush1.msra.mxu0 0.0
    %1308 = vmatprep.subr.mxu0 0.0
    %1309 = vmatpush1.msra.mxu0 0.0
    %1310 = vmatprep.subr.mxu0 0.0
    %1311 = vmatpush1.msra.mxu0 0.0
    %1312 = vmatprep.subr.mxu0 0.0
    %1313 = vmatpush1.msra.mxu0 0.0
    %1314 = vmatprep.subr.mxu0 0.0
    %1315 = vmatpush1.msra.mxu0 0.0
    %1316 = vmatprep.mubr.f32.mxu0 0.0
    %1317 = vmatmul.mubr.f32.gmra.mrb[0].mxu0 %v690
    %v1318 = vpop.f32.mrb[0].mxu0
    %v1319 = vadd.f32 %v687, %v1318
    %v1320 = vpop.f32.mrb[0].mxu0
    %1321 = vdwg.mxu0
    %1322 = vmatprep.subr.mxu0 0.0
    %1323 = vmatpush1.msra.mxu0 %v659
    %1324 = vmatprep.subr.mxu0 0.0
    %1325 = vmatpush1.msra.mxu0 %v660
    %1326 = vmatprep.subr.mxu0 0.0
    %1327 = vmatpush1.msra.mxu0 %v661
    %1328 = vmatprep.subr.mxu0 0.0
    %1329 = vmatpush1.msra.mxu0 %v662
    %1330 = vmatprep.subr.mxu0 0.0
    %1331 = vmatpush1.msra.mxu0 0.0
    %1332 = vmatprep.subr.mxu0 0.0
    %1333 = vmatpush1.msra.mxu0 0.0
    %1334 = vmatprep.subr.mxu0 0.0
    %1335 = vmatpush1.msra.mxu0 0.0
    %1336 = vmatprep.subr.mxu0 0.0
    %1337 = vmatpush1.msra.mxu0 0.0
    %1338 = vmatprep.subr.mxu0 0.0
    %1339 = vmatpush1.msra.mxu0 0.0
    %1340 = vmatprep.subr.mxu0 0.0
    %1341 = vmatpush1.msra.mxu0 0.0
    %1342 = vmatprep.subr.mxu0 0.0
    %1343 = vmatpush1.msra.mxu0 0.0
    %1344 = vmatprep.subr.mxu0 0.0
    %1345 = vmatpush1.msra.mxu0 0.0
    %1346 = vmatprep.subr.mxu0 0.0
    %1347 = vmatpush1.msra.mxu0 0.0
    %1348 = vmatprep.subr.mxu0 0.0
    %1349 = vmatpush1.msra.mxu0 0.0
    %1350 = vmatprep.subr.mxu0 0.0
    %1351 = vmatpush1.msra.mxu0 0.0
    %1352 = vmatprep.subr.mxu0 0.0
    %1353 = vmatpush1.msra.mxu0 0.0
    %1354 = vmatprep.subr.mxu0 0.0
    %1355 = vmatpush1.msra.mxu0 0.0
    %1356 = vmatprep.subr.mxu0 0.0
    %1357 = vmatpush1.msra.mxu0 0.0
    %1358 = vmatprep.subr.mxu0 0.0
    %1359 = vmatpush1.msra.mxu0 0.0
    %1360 = vmatprep.subr.mxu0 0.0
    %1361 = vmatpush1.msra.mxu0 0.0
    %1362 = vmatprep.subr.mxu0 0.0
    %1363 = vmatpush1.msra.mxu0 0.0
    %1364 = vmatprep.subr.mxu0 0.0
    %1365 = vmatpush1.msra.mxu0 0.0
    %1366 = vmatprep.subr.mxu0 0.0
    %1367 = vmatpush1.msra.mxu0 0.0
    %1368 = vmatprep.subr.mxu0 0.0
    %1369 = vmatpush1.msra.mxu0 0.0
    %1370 = vmatprep.subr.mxu0 0.0
    %1371 = vmatpush1.msra.mxu0 0.0
    %1372 = vmatprep.subr.mxu0 0.0
    %1373 = vmatpush1.msra.mxu0 0.0
    %1374 = vmatprep.subr.mxu0 0.0
    %1375 = vmatpush1.msra.mxu0 0.0
    %1376 = vmatprep.subr.mxu0 0.0
    %1377 = vmatpush1.msra.mxu0 0.0
    %1378 = vmatprep.subr.mxu0 0.0
    %1379 = vmatpush1.msra.mxu0 0.0
    %1380 = vmatprep.subr.mxu0 0.0
    %1381 = vmatpush1.msra.mxu0 0.0
    %1382 = vmatprep.subr.mxu0 0.0
    %1383 = vmatpush1.msra.mxu0 0.0
    %1384 = vmatprep.subr.mxu0 0.0
    %1385 = vmatpush1.msra.mxu0 0.0
    %1386 = vmatprep.mubr.f32.mxu0 0.0
    %1387 = vmatmul.mubr.f32.gmra.mrb[0].mxu0 %v690
    %v1388 = vpop.f32.mrb[0].mxu0
    %v1389 = vadd.f32 %v687, %v1388
    %v1390 = vpop.f32.mrb[0].mxu0
    %1391 = vdwg.mxu0
    %1392 = vmatprep.subr.mxu0 0.0
    %1393 = vmatpush1.msra.mxu0 %v663
    %1394 = vmatprep.subr.mxu0 0.0
    %1395 = vmatpush1.msra.mxu0 %v664
    %1396 = vmatprep.subr.mxu0 0.0
    %1397 = vmatpush1.msra.mxu0 %v665
    %1398 = vmatprep.subr.mxu0 0.0
    %1399 = vmatpush1.msra.mxu0 %v666
    %1400 = vmatprep.subr.mxu0 0.0
    %1401 = vmatpush1.msra.mxu0 0.0
    %1402 = vmatprep.subr.mxu0 0.0
    %1403 = vmatpush1.msra.mxu0 0.0
    %1404 = vmatprep.subr.mxu0 0.0
    %1405 = vmatpush1.msra.mxu0 0.0
    %1406 = vmatprep.subr.mxu0 0.0
    %1407 = vmatpush1.msra.mxu0 0.0
    %1408 = vmatprep.subr.mxu0 0.0
    %1409 = vmatpush1.msra.mxu0 0.0
    %1410 = vmatprep.subr.mxu0 0.0
    %1411 = vmatpush1.msra.mxu0 0.0
    %1412 = vmatprep.subr.mxu0 0.0
    %1413 = vmatpush1.msra.mxu0 0.0
    %1414 = vmatprep.subr.mxu0 0.0
    %1415 = vmatpush1.msra.mxu0 0.0
    %1416 = vmatprep.subr.mxu0 0.0
    %1417 = vmatpush1.msra.mxu0 0.0
    %1418 = vmatprep.subr.mxu0 0.0
    %1419 = vmatpush1.msra.mxu0 0.0
    %1420 = vmatprep.subr.mxu0 0.0
    %1421 = vmatpush1.msra.mxu0 0.0
    %1422 = vmatprep.subr.mxu0 0.0
    %1423 = vmatpush1.msra.mxu0 0.0
    %1424 = vmatprep.subr.mxu0 0.0
    %1425 = vmatpush1.msra.mxu0 0.0
    %1426 = vmatprep.subr.mxu0 0.0
    %1427 = vmatpush1.msra.mxu0 0.0
    %1428 = vmatprep.subr.mxu0 0.0
    %1429 = vmatpush1.msra.mxu0 0.0
    %1430 = vmatprep.subr.mxu0 0.0
    %1431 = vmatpush1.msra.mxu0 0.0
    %1432 = vmatprep.subr.mxu0 0.0
    %1433 = vmatpush1.msra.mxu0 0.0
    %1434 = vmatprep.subr.mxu0 0.0
    %1435 = vmatpush1.msra.mxu0 0.0
    %1436 = vmatprep.subr.mxu0 0.0
    %1437 = vmatpush1.msra.mxu0 0.0
    %1438 = vmatprep.subr.mxu0 0.0
    %1439 = vmatpush1.msra.mxu0 0.0
    %1440 = vmatprep.subr.mxu0 0.0
    %1441 = vmatpush1.msra.mxu0 0.0
    %1442 = vmatprep.subr.mxu0 0.0
    %1443 = vmatpush1.msra.mxu0 0.0
    %1444 = vmatprep.subr.mxu0 0.0
    %1445 = vmatpush1.msra.mxu0 0.0
    %1446 = vmatprep.subr.mxu0 0.0
    %1447 = vmatpush1.msra.mxu0 0.0
    %1448 = vmatprep.subr.mxu0 0.0
    %1449 = vmatpush1.msra.mxu0 0.0
    %1450 = vmatprep.subr.mxu0 0.0
    %1451 = vmatpush1.msra.mxu0 0.0
    %1452 = vmatprep.subr.mxu0 0.0
    %1453 = vmatpush1.msra.mxu0 0.0
    %1454 = vmatprep.subr.mxu0 0.0
    %1455 = vmatpush1.msra.mxu0 0.0
    %1456 = vmatprep.mubr.f32.mxu0 0.0
    %1457 = vmatmul.mubr.f32.gmra.mrb[0].mxu0 %v690
    %v1458 = vpop.f32.mrb[0].mxu0
    %v1459 = vadd.f32 %v687, %v1458
    %v1460 = vpop.f32.mrb[0].mxu0
    %1461 = vdwg.mxu0
    %1462 = vmatprep.subr.mxu0 0.0
    %1463 = vmatpush1.msra.mxu0 %v667
    %1464 = vmatprep.subr.mxu0 0.0
    %1465 = vmatpush1.msra.mxu0 %v668
    %1466 = vmatprep.subr.mxu0 0.0
    %1467 = vmatpush1.msra.mxu0 %v669
    %1468 = vmatprep.subr.mxu0 0.0
    %1469 = vmatpush1.msra.mxu0 %v670
    %1470 = vmatprep.subr.mxu0 0.0
    %1471 = vmatpush1.msra.mxu0 0.0
    %1472 = vmatprep.subr.mxu0 0.0
    %1473 = vmatpush1.msra.mxu0 0.0
    %1474 = vmatprep.subr.mxu0 0.0
    %1475 = vmatpush1.msra.mxu0 0.0
    %1476 = vmatprep.subr.mxu0 0.0
    %1477 = vmatpush1.msra.mxu0 0.0
    %1478 = vmatprep.subr.mxu0 0.0
    %1479 = vmatpush1.msra.mxu0 0.0
    %1480 = vmatprep.subr.mxu0 0.0
    %1481 = vmatpush1.msra.mxu0 0.0
    %1482 = vmatprep.subr.mxu0 0.0
    %1483 = vmatpush1.msra.mxu0 0.0
    %1484 = vmatprep.subr.mxu0 0.0
    %1485 = vmatpush1.msra.mxu0 0.0
    %1486 = vmatprep.subr.mxu0 0.0
    %1487 = vmatpush1.msra.mxu0 0.0
    %1488 = vmatprep.subr.mxu0 0.0
    %1489 = vmatpush1.msra.mxu0 0.0
    %1490 = vmatprep.subr.mxu0 0.0
    %1491 = vmatpush1.msra.mxu0 0.0
    %1492 = vmatprep.subr.mxu0 0.0
    %1493 = vmatpush1.msra.mxu0 0.0
    %1494 = vmatprep.subr.mxu0 0.0
    %1495 = vmatpush1.msra.mxu0 0.0
    %1496 = vmatprep.subr.mxu0 0.0
    %1497 = vmatpush1.msra.mxu0 0.0
    %1498 = vmatprep.subr.mxu0 0.0
    %1499 = vmatpush1.msra.mxu0 0.0
    %1500 = vmatprep.subr.mxu0 0.0
    %1501 = vmatpush1.msra.mxu0 0.0
    %1502 = vmatprep.subr.mxu0 0.0
    %1503 = vmatpush1.msra.mxu0 0.0
    %1504 = vmatprep.subr.mxu0 0.0
    %1505 = vmatpush1.msra.mxu0 0.0
    %1506 = vmatprep.subr.mxu0 0.0
    %1507 = vmatpush1.msra.mxu0 0.0
    %1508 = vmatprep.subr.mxu0 0.0
    %1509 = vmatpush1.msra.mxu0 0.0
    %1510 = vmatprep.subr.mxu0 0.0
    %1511 = vmatpush1.msra.mxu0 0.0
    %1512 = vmatprep.subr.mxu0 0.0
    %1513 = vmatpush1.msra.mxu0 0.0
    %1514 = vmatprep.subr.mxu0 0.0
    %1515 = vmatpush1.msra.mxu0 0.0
    %1516 = vmatprep.subr.mxu0 0.0
    %1517 = vmatpush1.msra.mxu0 0.0
    %1518 = vmatprep.subr.mxu0 0.0
    %1519 = vmatpush1.msra.mxu0 0.0
    %1520 = vmatprep.subr.mxu0 0.0
    %1521 = vmatpush1.msra.mxu0 0.0
    %1522 = vmatprep.subr.mxu0 0.0
    %1523 = vmatpush1.msra.mxu0 0.0
    %1524 = vmatprep.subr.mxu0 0.0
    %1525 = vmatpush1.msra.mxu0 0.0
    %1526 = vmatprep.mubr.f32.mxu0 0.0
    %1527 = vmatmul.mubr.f32.gmra.mrb[0].mxu0 %v690
    %v1528 = vpop.f32.mrb[0].mxu0
    %v1529 = vadd.f32 %v687, %v1528
    %v1530 = vpop.f32.mrb[0].mxu0
    %1531 = vdwg.mxu0
    %1532 = vmatprep.subr.mxu0 0.0
    %1533 = vmatpush1.msra.mxu0 %v671
    %1534 = vmatprep.subr.mxu0 0.0
    %1535 = vmatpush1.msra.mxu0 %v672
    %1536 = vmatprep.subr.mxu0 0.0
    %1537 = vmatpush1.msra.mxu0 %v673
    %1538 = vmatprep.subr.mxu0 0.0
    %1539 = vmatpush1.msra.mxu0 %v674
    %1540 = vmatprep.subr.mxu0 0.0
    %1541 = vmatpush1.msra.mxu0 0.0
    %1542 = vmatprep.subr.mxu0 0.0
    %1543 = vmatpush1.msra.mxu0 0.0
    %1544 = vmatprep.subr.mxu0 0.0
    %1545 = vmatpush1.msra.mxu0 0.0
    %1546 = vmatprep.subr.mxu0 0.0
    %1547 = vmatpush1.msra.mxu0 0.0
    %1548 = vmatprep.subr.mxu0 0.0
    %1549 = vmatpush1.msra.mxu0 0.0
    %1550 = vmatprep.subr.mxu0 0.0
    %1551 = vmatpush1.msra.mxu0 0.0
    %1552 = vmatprep.subr.mxu0 0.0
    %1553 = vmatpush1.msra.mxu0 0.0
    %1554 = vmatprep.subr.mxu0 0.0
    %1555 = vmatpush1.msra.mxu0 0.0
    %1556 = vmatprep.subr.mxu0 0.0
    %1557 = vmatpush1.msra.mxu0 0.0
    %1558 = vmatprep.subr.mxu0 0.0
    %1559 = vmatpush1.msra.mxu0 0.0
    %1560 = vmatprep.subr.mxu0 0.0
    %1561 = vmatpush1.msra.mxu0 0.0
    %1562 = vmatprep.subr.mxu0 0.0
    %1563 = vmatpush1.msra.mxu0 0.0
    %1564 = vmatprep.subr.mxu0 0.0
    %1565 = vmatpush1.msra.mxu0 0.0
    %1566 = vmatprep.subr.mxu0 0.0
    %1567 = vmatpush1.msra.mxu0 0.0
    %1568 = vmatprep.subr.mxu0 0.0
    %1569 = vmatpush1.msra.mxu0 0.0
    %1570 = vmatprep.subr.mxu0 0.0
    %1571 = vmatpush1.msra.mxu0 0.0
    %1572 = vmatprep.subr.mxu0 0.0
    %1573 = vmatpush1.msra.mxu0 0.0
    %1574 = vmatprep.subr.mxu0 0.0
    %1575 = vmatpush1.msra.mxu0 0.0
    %1576 = vmatprep.subr.mxu0 0.0
    %1577 = vmatpush1.msra.mxu0 0.0
    %1578 = vmatprep.subr.mxu0 0.0
    %1579 = vmatpush1.msra.mxu0 0.0
    %1580 = vmatprep.subr.mxu0 0.0
    %1581 = vmatpush1.msra.mxu0 0.0
    %1582 = vmatprep.subr.mxu0 0.0
    %1583 = vmatpush1.msra.mxu0 0.0
    %1584 = vmatprep.subr.mxu0 0.0
    %1585 = vmatpush1.msra.mxu0 0.0
    %1586 = vmatprep.subr.mxu0 0.0
    %1587 = vmatpush1.msra.mxu0 0.0
    %1588 = vmatprep.subr.mxu0 0.0
    %1589 = vmatpush1.msra.mxu0 0.0
    %1590 = vmatprep.subr.mxu0 0.0
    %1591 = vmatpush1.msra.mxu0 0.0
    %1592 = vmatprep.subr.mxu0 0.0
    %1593 = vmatpush1.msra.mxu0 0.0
    %1594 = vmatprep.subr.mxu0 0.0
    %1595 = vmatpush1.msra.mxu0 0.0
    %1596 = vmatprep.mubr.f32.mxu0 0.0
    %1597 = vmatmul.mubr.f32.gmra.mrb[0].mxu0 %v690
    %v1598 = vpop.f32.mrb[0].mxu0
    %v1599 = vadd.f32 %v687, %v1598
    %v1600 = vpop.f32.mrb[0].mxu0
    %1601 = vdwg.mxu0
    %1602 = vmatprep.subr.mxu0 0.0
    %1603 = vmatpush1.msra.mxu0 %v675
    %1604 = vmatprep.subr.mxu0 0.0
    %1605 = vmatpush1.msra.mxu0 %v676
    %1606 = vmatprep.subr.mxu0 0.0
    %1607 = vmatpush1.msra.mxu0 %v677
    %1608 = vmatprep.subr.mxu0 0.0
    %1609 = vmatpush1.msra.mxu0 %v678
    %1610 = vmatprep.subr.mxu0 0.0
    %1611 = vmatpush1.msra.mxu0 0.0
    %1612 = vmatprep.subr.mxu0 0.0
    %1613 = vmatpush1.msra.mxu0 0.0
    %1614 = vmatprep.subr.mxu0 0.0
    %1615 = vmatpush1.msra.mxu0 0.0
    %1616 = vmatprep.subr.mxu0 0.0
    %1617 = vmatpush1.msra.mxu0 0.0
    %1618 = vmatprep.subr.mxu0 0.0
    %1619 = vmatpush1.msra.mxu0 0.0
    %1620 = vmatprep.subr.mxu0 0.0
    %1621 = vmatpush1.msra.mxu0 0.0
    %1622 = vmatprep.subr.mxu0 0.0
    %1623 = vmatpush1.msra.mxu0 0.0
    %1624 = vmatprep.subr.mxu0 0.0
    %1625 = vmatpush1.msra.mxu0 0.0
    %1626 = vmatprep.subr.mxu0 0.0
    %1627 = vmatpush1.msra.mxu0 0.0
    %1628 = vmatprep.subr.mxu0 0.0
    %1629 = vmatpush1.msra.mxu0 0.0
    %1630 = vmatprep.subr.mxu0 0.0
    %1631 = vmatpush1.msra.mxu0 0.0
    %1632 = vmatprep.subr.mxu0 0.0
    %1633 = vmatpush1.msra.mxu0 0.0
    %1634 = vmatprep.subr.mxu0 0.0
    %1635 = vmatpush1.msra.mxu0 0.0
    %1636 = vmatprep.subr.mxu0 0.0
    %1637 = vmatpush1.msra.mxu0 0.0
    %1638 = vmatprep.subr.mxu0 0.0
    %1639 = vmatpush1.msra.mxu0 0.0
    %1640 = vmatprep.subr.mxu0 0.0
    %1641 = vmatpush1.msra.mxu0 0.0
    %1642 = vmatprep.subr.mxu0 0.0
    %1643 = vmatpush1.msra.mxu0 0.0
    %1644 = vmatprep.subr.mxu0 0.0
    %1645 = vmatpush1.msra.mxu0 0.0
    %1646 = vmatprep.subr.mxu0 0.0
    %1647 = vmatpush1.msra.mxu0 0.0
    %1648 = vmatprep.subr.mxu0 0.0
    %1649 = vmatpush1.msra.mxu0 0.0
    %1650 = vmatprep.subr.mxu0 0.0
    %1651 = vmatpush1.msra.mxu0 0.0
    %1652 = vmatprep.subr.mxu0 0.0
    %1653 = vmatpush1.msra.mxu0 0.0
    %1654 = vmatprep.subr.mxu0 0.0
    %1655 = vmatpush1.msra.mxu0 0.0
    %1656 = vmatprep.subr.mxu0 0.0
    %1657 = vmatpush1.msra.mxu0 0.0
    %1658 = vmatprep.subr.mxu0 0.0
    %1659 = vmatpush1.msra.mxu0 0.0
    %1660 = vmatprep.subr.mxu0 0.0
    %1661 = vmatpush1.msra.mxu0 0.0
    %1662 = vmatprep.subr.mxu0 0.0
    %1663 = vmatpush1.msra.mxu0 0.0
    %1664 = vmatprep.subr.mxu0 0.0
    %1665 = vmatpush1.msra.mxu0 0.0
    %1666 = vmatprep.mubr.f32.mxu0 0.0
    %1667 = vmatmul.mubr.f32.gmra.mrb[0].mxu0 %v690
    %v1668 = vpop.f32.mrb[0].mxu0
    %v1669 = vadd.f32 %v687, %v1668
    %v1670 = vpop.f32.mrb[0].mxu0
    %1671 = vdwg.mxu0
    %1672 = vmatprep.subr.mxu0 0.0
    %1673 = vmatpush1.msra.mxu0 %v679
    %1674 = vmatprep.subr.mxu0 0.0
    %1675 = vmatpush1.msra.mxu0 %v680
    %1676 = vmatprep.subr.mxu0 0.0
    %1677 = vmatpush1.msra.mxu0 %v681
    %1678 = vmatprep.subr.mxu0 0.0
    %1679 = vmatpush1.msra.mxu0 %v682
    %1680 = vmatprep.subr.mxu0 0.0
    %1681 = vmatpush1.msra.mxu0 0.0
    %1682 = vmatprep.subr.mxu0 0.0
    %1683 = vmatpush1.msra.mxu0 0.0
    %1684 = vmatprep.subr.mxu0 0.0
    %1685 = vmatpush1.msra.mxu0 0.0
    %1686 = vmatprep.subr.mxu0 0.0
    %1687 = vmatpush1.msra.mxu0 0.0
    %1688 = vmatprep.subr.mxu0 0.0
    %1689 = vmatpush1.msra.mxu0 0.0
    %1690 = vmatprep.subr.mxu0 0.0
    %1691 = vmatpush1.msra.mxu0 0.0
    %1692 = vmatprep.subr.mxu0 0.0
    %1693 = vmatpush1.msra.mxu0 0.0
    %1694 = vmatprep.subr.mxu0 0.0
    %1695 = vmatpush1.msra.mxu0 0.0
    %1696 = vmatprep.subr.mxu0 0.0
    %1697 = vmatpush1.msra.mxu0 0.0
    %1698 = vmatprep.subr.mxu0 0.0
    %1699 = vmatpush1.msra.mxu0 0.0
    %1700 = vmatprep.subr.mxu0 0.0
    %1701 = vmatpush1.msra.mxu0 0.0
    %1702 = vmatprep.subr.mxu0 0.0
    %1703 = vmatpush1.msra.mxu0 0.0
    %1704 = vmatprep.subr.mxu0 0.0
    %1705 = vmatpush1.msra.mxu0 0.0
    %1706 = vmatprep.subr.mxu0 0.0
    %1707 = vmatpush1.msra.mxu0 0.0
    %1708 = vmatprep.subr.mxu0 0.0
    %1709 = vmatpush1.msra.mxu0 0.0
    %1710 = vmatprep.subr.mxu0 0.0
    %1711 = vmatpush1.msra.mxu0 0.0
    %1712 = vmatprep.subr.mxu0 0.0
    %1713 = vmatpush1.msra.mxu0 0.0
    %1714 = vmatprep.subr.mxu0 0.0
    %1715 = vmatpush1.msra.mxu0 0.0
    %1716 = vmatprep.subr.mxu0 0.0
    %1717 = vmatpush1.msra.mxu0 0.0
    %1718 = vmatprep.subr.mxu0 0.0
    %1719 = vmatpush1.msra.mxu0 0.0
    %1720 = vmatprep.subr.mxu0 0.0
    %1721 = vmatpush1.msra.mxu0 0.0
    %1722 = vmatprep.subr.mxu0 0.0
    %1723 = vmatpush1.msra.mxu0 0.0
    %1724 = vmatprep.subr.mxu0 0.0
    %1725 = vmatpush1.msra.mxu0 0.0
    %1726 = vmatprep.subr.mxu0 0.0
    %1727 = vmatpush1.msra.mxu0 0.0
    %1728 = vmatprep.subr.mxu0 0.0
    %1729 = vmatpush1.msra.mxu0 0.0
    %1730 = vmatprep.subr.mxu0 0.0
    %1731 = vmatpush1.msra.mxu0 0.0
    %1732 = vmatprep.subr.mxu0 0.0
    %1733 = vmatpush1.msra.mxu0 0.0
    %1734 = vmatprep.subr.mxu0 0.0
    %1735 = vmatpush1.msra.mxu0 0.0
    %1736 = vmatprep.mubr.f32.mxu0 0.0
    %1737 = vmatmul.mubr.f32.gmra.mrb[0].mxu0 %v690
    %v1738 = vpop.f32.mrb[0].mxu0
    %v1739 = vadd.f32 %v687, %v1738
    %v1740 = vpop.f32.mrb[0].mxu0
    %1741 = vdwg.mxu0
    %1742 = vmatprep.subr.mxu0 0.0
    %1743 = vmatpush1.msra.mxu0 %v683
    %1744 = vmatprep.subr.mxu0 0.0
    %1745 = vmatpush1.msra.mxu0 %v684
    %1746 = vmatprep.subr.mxu0 0.0
    %1747 = vmatpush1.msra.mxu0 %v685
    %1748 = vmatprep.subr.mxu0 0.0
    %1749 = vmatpush1.msra.mxu0 %v686
    %1750 = vmatprep.subr.mxu0 0.0
    %1751 = vmatpush1.msra.mxu0 0.0
    %1752 = vmatprep.subr.mxu0 0.0
    %1753 = vmatpush1.msra.mxu0 0.0
    %1754 = vmatprep.subr.mxu0 0.0
    %1755 = vmatpush1.msra.mxu0 0.0
    %1756 = vmatprep.subr.mxu0 0.0
    %1757 = vmatpush1.msra.mxu0 0.0
    %1758 = vmatprep.subr.mxu0 0.0
    %1759 = vmatpush1.msra.mxu0 0.0
    %1760 = vmatprep.subr.mxu0 0.0
    %1761 = vmatpush1.msra.mxu0 0.0
    %1762 = vmatprep.subr.mxu0 0.0
    %1763 = vmatpush1.msra.mxu0 0.0
    %1764 = vmatprep.subr.mxu0 0.0
    %1765 = vmatpush1.msra.mxu0 0.0
    %1766 = vmatprep.subr.mxu0 0.0
    %1767 = vmatpush1.msra.mxu0 0.0
    %1768 = vmatprep.subr.mxu0 0.0
    %1769 = vmatpush1.msra.mxu0 0.0
    %1770 = vmatprep.subr.mxu0 0.0
    %1771 = vmatpush1.msra.mxu0 0.0
    %1772 = vmatprep.subr.mxu0 0.0
    %1773 = vmatpush1.msra.mxu0 0.0
    %1774 = vmatprep.subr.mxu0 0.0
    %1775 = vmatpush1.msra.mxu0 0.0
    %1776 = vmatprep.subr.mxu0 0.0
    %1777 = vmatpush1.msra.mxu0 0.0
    %1778 = vmatprep.subr.mxu0 0.0
    %1779 = vmatpush1.msra.mxu0 0.0
    %1780 = vmatprep.subr.mxu0 0.0
    %1781 = vmatpush1.msra.mxu0 0.0
    %1782 = vmatprep.subr.mxu0 0.0
    %1783 = vmatpush1.msra.mxu0 0.0
    %1784 = vmatprep.subr.mxu0 0.0
    %1785 = vmatpush1.msra.mxu0 0.0
    %1786 = vmatprep.subr.mxu0 0.0
    %1787 = vmatpush1.msra.mxu0 0.0
    %1788 = vmatprep.subr.mxu0 0.0
    %1789 = vmatpush1.msra.mxu0 0.0
    %1790 = vmatprep.subr.mxu0 0.0
    %1791 = vmatpush1.msra.mxu0 0.0
    %1792 = vmatprep.subr.mxu0 0.0
    %1793 = vmatpush1.msra.mxu0 0.0
    %1794 = vmatprep.subr.mxu0 0.0
    %1795 = vmatpush1.msra.mxu0 0.0
    %1796 = vmatprep.subr.mxu0 0.0
    %1797 = vmatpush1.msra.mxu0 0.0
    %1798 = vmatprep.subr.mxu0 0.0
    %1799 = vmatpush1.msra.mxu0 0.0
    %1800 = vmatprep.subr.mxu0 0.0
    %1801 = vmatpush1.msra.mxu0 0.0
    %1802 = vmatprep.subr.mxu0 0.0
    %1803 = vmatpush1.msra.mxu0 0.0
    %1804 = vmatprep.subr.mxu0 0.0
    %1805 = vmatpush1.msra.mxu0 0.0
    %1806 = vmatprep.mubr.f32.mxu0 0.0
    %1807 = vmatmul.mubr.f32.gmra.mrb[0].mxu0 %v690
    %v1808 = vpop.f32.mrb[0].mxu0
    %v1809 = vadd.f32 %v687, %v1808
    %v1810 = vpop.f32.mrb[0].mxu0
    %1811 = vdwg.mxu0
    %v1812 = vmax.f32 %v759, 0.0
    %v1813 = vmax.f32 %v829, 0.0
    %v1814 = vmax.f32 %v899, 0.0
    %v1815 = vmax.f32 %v969, 0.0
    %v1816 = vmax.f32 %v1039, 0.0
    %v1817 = vmax.f32 %v1109, 0.0
    %v1818 = vmax.f32 %v1179, 0.0
    %v1819 = vmax.f32 %v1249, 0.0
    %v1820 = vmax.f32 %v1319, 0.0
    %v1821 = vmax.f32 %v1389, 0.0
    %v1822 = vmax.f32 %v1459, 0.0
    %v1823 = vmax.f32 %v1529, 0.0
    %v1824 = vmax.f32 %v1599, 0.0
    %v1825 = vmax.f32 %v1669, 0.0
    %v1826 = vmax.f32 %v1739, 0.0
    %v1827 = vmax.f32 %v1809, 0.0
    %1828 = vst [vmem:[#allocation9] sm:$0xff] %v1812
    %1829 = vst [vmem:[#allocation9 + $0x8] sm:$0xff] %v1813
    %1830 = vst [vmem:[#allocation9 + $0x10] sm:$0xff] %v1814
    %1831 = vst [vmem:[#allocation9 + $0x18] sm:$0xff] %v1815
    %1832 = vst [vmem:[#allocation9 + $0x20] sm:$0xff] %v1816
    %1833 = vst [vmem:[#allocation9 + $0x28] sm:$0xff] %v1817
    %1834 = vst [vmem:[#allocation9 + $0x30] sm:$0xff] %v1818
    %1835 = vst [vmem:[#allocation9 + $0x38] sm:$0xff] %v1819
    %1836 = vst [vmem:[#allocation9 + $0x40] sm:$0xff] %v1820
    %1837 = vst [vmem:[#allocation9 + $0x48] sm:$0xff] %v1821
    %1838 = vst [vmem:[#allocation9 + $0x50] sm:$0xff] %v1822
    %1839 = vst [vmem:[#allocation9 + $0x58] sm:$0xff] %v1823
    %1840 = vst [vmem:[#allocation9 + $0x60] sm:$0xff] %v1824
    %1841 = vst [vmem:[#allocation9 + $0x68] sm:$0xff] %v1825
    %1842 = vst [vmem:[#allocation9 + $0x70] sm:$0xff] %v1826
    %1843 = vst [vmem:[#allocation9 + $0x78] sm:$0xff] %v1827
    // Predicated region
    $region30: #{tpu_custom_call.1} parent=1 // pred_check
      _
    $region31: #{tpu_custom_call.1} parent=1 // pred_check_branch
      %1845 = sbr.rel (0) target = $region33
    $region32: #{tpu_custom_call.1} parent=1 // pred_region
      %s1847 = ssub.s32 2048, 2048
      %1848 = vsyncadd [#allocation5], %s1847
      %s1849 = sshll.u32 [#allocation9], 4
      %s1850 = int_to_ptr.vmem [resolvable:$true] %s1849
      %1855 = dma.vmem_to_hbm [thread:$0]  %s1850, 2048, %s4, [#allocation5], 128, 128, 8
    $region33: #{tpu_custom_call.1} parent=1 // pred_fallthru
      _
    // Predicated region
    $region34: #{tpu_custom_call.1} parent=1 // pred_check
      _
    $region35: #{tpu_custom_call.1} parent=1 // pred_check_branch
      %1857 = sbr.rel (0) target = $region37
    $region36: #{tpu_custom_call.1} parent=1 // pred_region
      %1858 = dma.done [#allocation5], 2048
    $region37: #{tpu_custom_call.1} parent=1 // pred_fallthru
      _
    %1859 = vsyncpa [#allocation4], 1
    %1860 = vsyncpa [#allocation7], 1
    %1861 = vsyncpa [#allocation5], 1

</llo_original>
